<compile_context>
chip_gen: v7x
topology: tpu7x:2x2x1
jax: 0.10.0
libtpu: 0.0.40
codegen_flags: <defaults>
</compile_context>

<pallas_src>
import jax
import jax.numpy as jnp
from jax.experimental import pallas as pl
from jax.experimental.pallas import tpu as pltpu


def make_model_kernel(n, cin, cout, hw):
    def kernel(xs_ref, a2_ref, bcb_ref, w1_ref, b1_ref, w2_ref, b2_ref,
               w3_ref, b3_ref, out_ref, pooled_ref, flat_ref):
        # ---- ConvTranspose2d(3,32,k=3,s=3) + AvgPool2d(3,s=3), whole batch, ONE matmul.
        # a2 is block-diagonal (mean-of-offsets conv weight per sample), rows = (c, b).
        pooled_ref[...] = (
            jnp.dot(a2_ref[...], xs_ref[...], preferred_element_type=jnp.float32)
            + bcb_ref[...])                                   # (cout*n, hw), row = c*n + b

        # ---- torch.flatten(v2, 1): flat[b, c*hw + p] = pooled[c*n + b, p].
        # Each channel c is a sublane-aligned (n, hw) block -> 32 contiguous slice copies.
        for c in range(cout):
            flat_ref[:, c * hw:(c + 1) * hw] = pooled_ref[c * n:(c + 1) * n, :]
        flat = flat_ref[...]                                  # (n, cout*hw) f32

        # ---- fc1 -> relu -> fc2 -> relu -> fc3  (bf16 weights, f32 accumulate).
        y1 = jnp.dot(flat.astype(jnp.bfloat16), w1_ref[...],
                     preferred_element_type=jnp.float32) + b1_ref[...]
        y1 = jnp.maximum(y1, 0.0)
        y2 = jnp.dot(y1.astype(jnp.bfloat16), w2_ref[...],
                     preferred_element_type=jnp.float32) + b2_ref[...]
        y2 = jnp.maximum(y2, 0.0)
        out_ref[...] = jnp.dot(y2, w3_ref[...],
                               preferred_element_type=jnp.float32) + b3_ref[...]
    return kernel


def model_forward(x, params):
    """x: (N, C_in, H, W) NCHW float32."""
    wct, bct, w1, b1, w2, b2, w3, b3 = params
    n, cin, H, W = x.shape
    hw = H * W
    cout = wct.shape[1]
    assert w1.shape[0] == cout * hw, "fc1 input features must equal C_out*H*W"

    # ---- Host-side parameter prep: pure reshapes / reductions / replication of WEIGHTS
    # (no input-dependent compute hoisted out of the kernel).
    # conv_transpose(k=3,s=3,p=0) + avgpool(3,s=3)  ==  1x1 conv with mean-of-offsets weight.
    wmean = jnp.mean(wct, axis=(2, 3)).T.astype(jnp.float32)             # (cout, cin)
    # Block-diagonal replication so ONE matmul covers the whole batch; rows (c, b), cols (i, b).
    a2 = jnp.kron(wmean, jnp.eye(n, dtype=jnp.float32))                  # (cout*n, cin*n)
    bcb = jnp.repeat(bct.astype(jnp.float32), n).reshape(cout * n, 1)    # (cout*n, 1)
    w1_bf = w1.astype(jnp.bfloat16)                                      # (3264, 256) bf16
    w2_bf = w2.astype(jnp.bfloat16)                                      # (256, 128) bf16
    w3_f = w3.astype(jnp.float32)
    b1_r = b1.reshape(1, -1).astype(jnp.float32)
    b2_r = b2.reshape(1, -1).astype(jnp.float32)
    b3_r = b3.reshape(1, -1).astype(jnp.float32)

    # Input layout only (reshape/transpose): (n, cin, H, W) -> (cin*n, hw), row = i*n + b.
    xs = jnp.transpose(x.reshape(n, cin, hw).astype(jnp.float32),
                       (1, 0, 2)).reshape(cin * n, hw)

    n_out = w3.shape[1]
    flops = 2 * ((cout * n) * (cin * n) * hw
                 + n * (cout * hw) * w1.shape[1]
                 + n * w2.shape[0] * w2.shape[1]
                 + n * w3.shape[0] * w3.shape[1])
    bytes_accessed = (xs.size * 4 + a2.size * 4 + bcb.size * 4
                      + w1_bf.size * 2 + w2_bf.size * 2 + w3_f.size * 4
                      + b1_r.size * 4 + b2_r.size * 4 + b3_r.size * 4
                      + n * n_out * 4)

    kernel = make_model_kernel(n, cin, cout, hw)
    out = pl.pallas_call(
        kernel,
        out_shape=jax.ShapeDtypeStruct((n, n_out), jnp.float32),
        scratch_shapes=[pltpu.VMEM((cout * n, hw), jnp.float32),   # pooled, rows (c, b)
                        pltpu.VMEM((n, cout * hw), jnp.float32)],  # flattened activations
        cost_estimate=pl.CostEstimate(flops=int(flops), transcendentals=0,
                                      bytes_accessed=int(bytes_accessed)),
    )(xs, a2, bcb, w1_bf, b1_r, w2_bf, b2_r, w3_f, b3_r)
    return out


def ref_forward(x, params):
    """Independent pure-JAX reference (materializes the full conv_transpose output).

    fc1/fc2 weights are applied in bf16 storage with f32 accumulation, matching the
    kernel's deliberate weight-precision choice."""
    wct, bct, w1, b1, w2, b2, w3, b3 = params
    n, cin, H, W = x.shape
    cout = wct.shape[1]
    hp = jax.lax.Precision.HIGHEST
    # out[n, co, 3i+k, 3j+l] = sum_ci x[n,ci,i,j] * wct[ci,co,k,l] + b[co]
    y = jnp.einsum('ncij,cokl->noikjl', x, wct, precision=hp)
    y = y.reshape(n, cout, 3 * H, 3 * W) + bct[None, :, None, None]
    p = y.reshape(n, cout, H, 3, W, 3).mean(axis=(3, 5))
    flat = p.reshape(n, -1)
    h1 = jnp.maximum(jnp.dot(flat.astype(jnp.bfloat16), w1.astype(jnp.bfloat16),
                             preferred_element_type=jnp.float32) + b1, 0.0)
    h2 = jnp.maximum(jnp.dot(h1.astype(jnp.bfloat16), w2.astype(jnp.bfloat16),
                             preferred_element_type=jnp.float32) + b2, 0.0)
    return jnp.dot(h2, w3, precision=hp, preferred_element_type=jnp.float32) + b3


def init_params(key):
    ks = jax.random.split(key, 8)

    def uni(k, shape, fan_in):
        b = 1.0 / jnp.sqrt(jnp.float32(fan_in))
        return jax.random.uniform(k, shape, jnp.float32, -b, b)

    wct = uni(ks[0], (3, 32, 3, 3), 3 * 9)        # ConvTranspose2d weight (in, out, kH, kW)
    bct = uni(ks[1], (32,), 3 * 9)
    w1 = uni(ks[2], (3264, 256), 3264)            # Linear stored as (in, out)
    b1 = uni(ks[3], (256,), 3264)
    w2 = uni(ks[4], (256, 128), 256)
    b2 = uni(ks[5], (128,), 256)
    w3 = uni(ks[6], (128, 3), 128)
    b3 = uni(ks[7], (3,), 128)
    return (wct, bct, w1, b1, w2, b2, w3, b3)


if __name__ == "__main__":
    key = jax.random.PRNGKey(0)
    pkey, xkey = jax.random.split(key)
    params = init_params(pkey)
    # Batch of 8 inputs; spatial size 6x17 so that 32*6*17 = 3264 matches fc1's in-features.
    x1 = jax.random.normal(xkey, (8, 3, 6, 17), jnp.float32)

    fwd = jax.jit(model_forward)
    out = jax.block_until_ready(fwd(x1, params))

    ref = ref_forward(x1, params)
    if not jnp.allclose(out, ref, rtol=2e-3, atol=2e-3):
        raise AssertionError(f"mismatch:\nkernel={out}\nref={ref}")
    print("KERNEL_OK")
</pallas_src>

<mosaic_0001>
module attributes {stable_mosaic.version = 11 : i64} {
  func.func @kernel(%arg0: memref<24x102xf32, #tpu.memory_space<vmem>>, %arg1: memref<256x24xf32, #tpu.memory_space<vmem>>, %arg2: memref<256x1xf32, #tpu.memory_space<vmem>>, %arg3: memref<3264x256xbf16, #tpu.memory_space<vmem>>, %arg4: memref<1x256xf32, #tpu.memory_space<vmem>>, %arg5: memref<256x128xbf16, #tpu.memory_space<vmem>>, %arg6: memref<1x128xf32, #tpu.memory_space<vmem>>, %arg7: memref<128x3xf32, #tpu.memory_space<vmem>>, %arg8: memref<1x3xf32, #tpu.memory_space<vmem>>, %arg9: memref<8x3xf32, #tpu.memory_space<vmem>>, %arg10: memref<256x102xf32, #tpu.memory_space<vmem>>, %arg11: memref<8x3264xf32, #tpu.memory_space<vmem>>) attributes {dimension_semantics = [], scalar_prefetch = 0 : i64, scratch_operands = 2 : i64, tpu.core_type = #tpu.core_type<tc>} {
    %c0 = arith.constant 0 : index
    %c0_0 = arith.constant 0 : index
    %0 = vector.load %arg1[%c0, %c0_0] : memref<256x24xf32, #tpu.memory_space<vmem>>, vector<256x24xf32>
    %c0_1 = arith.constant 0 : index
    %c0_2 = arith.constant 0 : index
    %1 = vector.load %arg0[%c0_1, %c0_2] : memref<24x102xf32, #tpu.memory_space<vmem>>, vector<24x102xf32>
    %cst = arith.constant dense<0.000000e+00> : vector<256x102xf32>
    %2 = tpu.matmul %0, %1, %cst {dimension_numbers = #tpu.dot_dimension_numbers<[1], [0], [0], [1], [0, 0, 1, 1], [], []>} : vector<256x24xf32>, vector<24x102xf32>, vector<256x102xf32> -> vector<256x102xf32>
    %c0_3 = arith.constant 0 : index
    %c0_4 = arith.constant 0 : index
    %3 = vector.load %arg2[%c0_3, %c0_4] : memref<256x1xf32, #tpu.memory_space<vmem>>, vector<256x1xf32>
    %4 = vector.broadcast %3 : vector<256x1xf32> to vector<256x102xf32>
    %5 = arith.addf %2, %4 : vector<256x102xf32>
    %c0_5 = arith.constant 0 : index
    %c0_6 = arith.constant 0 : index
    %6 = vector.load %arg10[%c0_5, %c0_6] : memref<256x102xf32, #tpu.memory_space<vmem>>, vector<256x102xf32>
    tpu.vector_store %arg10[%c0_5, %c0_6], %5 {strides = array<i32>} : memref<256x102xf32, #tpu.memory_space<vmem>>, vector<256x102xf32>,
    %c0_7 = arith.constant 0 : index
    %c0_8 = arith.constant 0 : index
    %7 = vector.load %arg10[%c0_7, %c0_8] : memref<256x102xf32, #tpu.memory_space<vmem>>, vector<8x102xf32>
    %c0_9 = arith.constant 0 : index
    %c0_10 = arith.constant 0 : index
    %8 = vector.load %arg11[%c0_9, %c0_10] : memref<8x3264xf32, #tpu.memory_space<vmem>>, vector<8x102xf32>
    tpu.vector_store %arg11[%c0_9, %c0_10], %7 {strides = array<i32>} : memref<8x3264xf32, #tpu.memory_space<vmem>>, vector<8x102xf32>,
    %c8 = arith.constant 8 : index
    %c0_11 = arith.constant 0 : index
    %9 = vector.load %arg10[%c8, %c0_11] : memref<256x102xf32, #tpu.memory_space<vmem>>, vector<8x102xf32>
    %c0_12 = arith.constant 0 : index
    %c102 = arith.constant 102 : index
    %10 = vector.load %arg11[%c0_12, %c102] : memref<8x3264xf32, #tpu.memory_space<vmem>>, vector<8x102xf32>
    tpu.vector_store %arg11[%c0_12, %c102], %9 {strides = array<i32>} : memref<8x3264xf32, #tpu.memory_space<vmem>>, vector<8x102xf32>,
    %c16 = arith.constant 16 : index
    %c0_13 = arith.constant 0 : index
    %11 = vector.load %arg10[%c16, %c0_13] : memref<256x102xf32, #tpu.memory_space<vmem>>, vector<8x102xf32>
    %c0_14 = arith.constant 0 : index
    %c204 = arith.constant 204 : index
    %12 = vector.load %arg11[%c0_14, %c204] : memref<8x3264xf32, #tpu.memory_space<vmem>>, vector<8x102xf32>
    tpu.vector_store %arg11[%c0_14, %c204], %11 {strides = array<i32>} : memref<8x3264xf32, #tpu.memory_space<vmem>>, vector<8x102xf32>,
    %c24 = arith.constant 24 : index
    %c0_15 = arith.constant 0 : index
    %13 = vector.load %arg10[%c24, %c0_15] : memref<256x102xf32, #tpu.memory_space<vmem>>, vector<8x102xf32>
    %c0_16 = arith.constant 0 : index
    %c306 = arith.constant 306 : index
    %14 = vector.load %arg11[%c0_16, %c306] : memref<8x3264xf32, #tpu.memory_space<vmem>>, vector<8x102xf32>
    tpu.vector_store %arg11[%c0_16, %c306], %13 {strides = array<i32>} : memref<8x3264xf32, #tpu.memory_space<vmem>>, vector<8x102xf32>,
    %c32 = arith.constant 32 : index
    %c0_17 = arith.constant 0 : index
    %15 = vector.load %arg10[%c32, %c0_17] : memref<256x102xf32, #tpu.memory_space<vmem>>, vector<8x102xf32>
    %c0_18 = arith.constant 0 : index
    %c408 = arith.constant 408 : index
    %16 = vector.load %arg11[%c0_18, %c408] : memref<8x3264xf32, #tpu.memory_space<vmem>>, vector<8x102xf32>
    tpu.vector_store %arg11[%c0_18, %c408], %15 {strides = array<i32>} : memref<8x3264xf32, #tpu.memory_space<vmem>>, vector<8x102xf32>,
    %c40 = arith.constant 40 : index
    %c0_19 = arith.constant 0 : index
    %17 = vector.load %arg10[%c40, %c0_19] : memref<256x102xf32, #tpu.memory_space<vmem>>, vector<8x102xf32>
    %c0_20 = arith.constant 0 : index
    %c510 = arith.constant 510 : index
    %18 = vector.load %arg11[%c0_20, %c510] : memref<8x3264xf32, #tpu.memory_space<vmem>>, vector<8x102xf32>
    tpu.vector_store %arg11[%c0_20, %c510], %17 {strides = array<i32>} : memref<8x3264xf32, #tpu.memory_space<vmem>>, vector<8x102xf32>,
    %c48 = arith.constant 48 : index
    %c0_21 = arith.constant 0 : index
    %19 = vector.load %arg10[%c48, %c0_21] : memref<256x102xf32, #tpu.memory_space<vmem>>, vector<8x102xf32>
    %c0_22 = arith.constant 0 : index
    %c612 = arith.constant 612 : index
    %20 = vector.load %arg11[%c0_22, %c612] : memref<8x3264xf32, #tpu.memory_space<vmem>>, vector<8x102xf32>
    tpu.vector_store %arg11[%c0_22, %c612], %19 {strides = array<i32>} : memref<8x3264xf32, #tpu.memory_space<vmem>>, vector<8x102xf32>,
    %c56 = arith.constant 56 : index
    %c0_23 = arith.constant 0 : index
    %21 = vector.load %arg10[%c56, %c0_23] : memref<256x102xf32, #tpu.memory_space<vmem>>, vector<8x102xf32>
    %c0_24 = arith.constant 0 : index
    %c714 = arith.constant 714 : index
    %22 = vector.load %arg11[%c0_24, %c714] : memref<8x3264xf32, #tpu.memory_space<vmem>>, vector<8x102xf32>
    tpu.vector_store %arg11[%c0_24, %c714], %21 {strides = array<i32>} : memref<8x3264xf32, #tpu.memory_space<vmem>>, vector<8x102xf32>,
    %c64 = arith.constant 64 : index
    %c0_25 = arith.constant 0 : index
    %23 = vector.load %arg10[%c64, %c0_25] : memref<256x102xf32, #tpu.memory_space<vmem>>, vector<8x102xf32>
    %c0_26 = arith.constant 0 : index
    %c816 = arith.constant 816 : index
    %24 = vector.load %arg11[%c0_26, %c816] : memref<8x3264xf32, #tpu.memory_space<vmem>>, vector<8x102xf32>
    tpu.vector_store %arg11[%c0_26, %c816], %23 {strides = array<i32>} : memref<8x3264xf32, #tpu.memory_space<vmem>>, vector<8x102xf32>,
    %c72 = arith.constant 72 : index
    %c0_27 = arith.constant 0 : index
    %25 = vector.load %arg10[%c72, %c0_27] : memref<256x102xf32, #tpu.memory_space<vmem>>, vector<8x102xf32>
    %c0_28 = arith.constant 0 : index
    %c918 = arith.constant 918 : index
    %26 = vector.load %arg11[%c0_28, %c918] : memref<8x3264xf32, #tpu.memory_space<vmem>>, vector<8x102xf32>
    tpu.vector_store %arg11[%c0_28, %c918], %25 {strides = array<i32>} : memref<8x3264xf32, #tpu.memory_space<vmem>>, vector<8x102xf32>,
    %c80 = arith.constant 80 : index
    %c0_29 = arith.constant 0 : index
    %27 = vector.load %arg10[%c80, %c0_29] : memref<256x102xf32, #tpu.memory_space<vmem>>, vector<8x102xf32>
    %c0_30 = arith.constant 0 : index
    %c1020 = arith.constant 1020 : index
    %28 = vector.load %arg11[%c0_30, %c1020] : memref<8x3264xf32, #tpu.memory_space<vmem>>, vector<8x102xf32>
    tpu.vector_store %arg11[%c0_30, %c1020], %27 {strides = array<i32>} : memref<8x3264xf32, #tpu.memory_space<vmem>>, vector<8x102xf32>,
    %c88 = arith.constant 88 : index
    %c0_31 = arith.constant 0 : index
    %29 = vector.load %arg10[%c88, %c0_31] : memref<256x102xf32, #tpu.memory_space<vmem>>, vector<8x102xf32>
    %c0_32 = arith.constant 0 : index
    %c1122 = arith.constant 1122 : index
    %30 = vector.load %arg11[%c0_32, %c1122] : memref<8x3264xf32, #tpu.memory_space<vmem>>, vector<8x102xf32>
    tpu.vector_store %arg11[%c0_32, %c1122], %29 {strides = array<i32>} : memref<8x3264xf32, #tpu.memory_space<vmem>>, vector<8x102xf32>,
    %c96 = arith.constant 96 : index
    %c0_33 = arith.constant 0 : index
    %31 = vector.load %arg10[%c96, %c0_33] : memref<256x102xf32, #tpu.memory_space<vmem>>, vector<8x102xf32>
    %c0_34 = arith.constant 0 : index
    %c1224 = arith.constant 1224 : index
    %32 = vector.load %arg11[%c0_34, %c1224] : memref<8x3264xf32, #tpu.memory_space<vmem>>, vector<8x102xf32>
    tpu.vector_store %arg11[%c0_34, %c1224], %31 {strides = array<i32>} : memref<8x3264xf32, #tpu.memory_space<vmem>>, vector<8x102xf32>,
    %c104 = arith.constant 104 : index
    %c0_35 = arith.constant 0 : index
    %33 = vector.load %arg10[%c104, %c0_35] : memref<256x102xf32, #tpu.memory_space<vmem>>, vector<8x102xf32>
    %c0_36 = arith.constant 0 : index
    %c1326 = arith.constant 1326 : index
    %34 = vector.load %arg11[%c0_36, %c1326] : memref<8x3264xf32, #tpu.memory_space<vmem>>, vector<8x102xf32>
    tpu.vector_store %arg11[%c0_36, %c1326], %33 {strides = array<i32>} : memref<8x3264xf32, #tpu.memory_space<vmem>>, vector<8x102xf32>,
    %c112 = arith.constant 112 : index
    %c0_37 = arith.constant 0 : index
    %35 = vector.load %arg10[%c112, %c0_37] : memref<256x102xf32, #tpu.memory_space<vmem>>, vector<8x102xf32>
    %c0_38 = arith.constant 0 : index
    %c1428 = arith.constant 1428 : index
    %36 = vector.load %arg11[%c0_38, %c1428] : memref<8x3264xf32, #tpu.memory_space<vmem>>, vector<8x102xf32>
    tpu.vector_store %arg11[%c0_38, %c1428], %35 {strides = array<i32>} : memref<8x3264xf32, #tpu.memory_space<vmem>>, vector<8x102xf32>,
    %c120 = arith.constant 120 : index
    %c0_39 = arith.constant 0 : index
    %37 = vector.load %arg10[%c120, %c0_39] : memref<256x102xf32, #tpu.memory_space<vmem>>, vector<8x102xf32>
    %c0_40 = arith.constant 0 : index
    %c1530 = arith.constant 1530 : index
    %38 = vector.load %arg11[%c0_40, %c1530] : memref<8x3264xf32, #tpu.memory_space<vmem>>, vector<8x102xf32>
    tpu.vector_store %arg11[%c0_40, %c1530], %37 {strides = array<i32>} : memref<8x3264xf32, #tpu.memory_space<vmem>>, vector<8x102xf32>,
    %c128 = arith.constant 128 : index
    %c0_41 = arith.constant 0 : index
    %39 = vector.load %arg10[%c128, %c0_41] : memref<256x102xf32, #tpu.memory_space<vmem>>, vector<8x102xf32>
    %c0_42 = arith.constant 0 : index
    %c1632 = arith.constant 1632 : index
    %40 = vector.load %arg11[%c0_42, %c1632] : memref<8x3264xf32, #tpu.memory_space<vmem>>, vector<8x102xf32>
    tpu.vector_store %arg11[%c0_42, %c1632], %39 {strides = array<i32>} : memref<8x3264xf32, #tpu.memory_space<vmem>>, vector<8x102xf32>,
    %c136 = arith.constant 136 : index
    %c0_43 = arith.constant 0 : index
    %41 = vector.load %arg10[%c136, %c0_43] : memref<256x102xf32, #tpu.memory_space<vmem>>, vector<8x102xf32>
    %c0_44 = arith.constant 0 : index
    %c1734 = arith.constant 1734 : index
    %42 = vector.load %arg11[%c0_44, %c1734] : memref<8x3264xf32, #tpu.memory_space<vmem>>, vector<8x102xf32>
    tpu.vector_store %arg11[%c0_44, %c1734], %41 {strides = array<i32>} : memref<8x3264xf32, #tpu.memory_space<vmem>>, vector<8x102xf32>,
    %c144 = arith.constant 144 : index
    %c0_45 = arith.constant 0 : index
    %43 = vector.load %arg10[%c144, %c0_45] : memref<256x102xf32, #tpu.memory_space<vmem>>, vector<8x102xf32>
    %c0_46 = arith.constant 0 : index
    %c1836 = arith.constant 1836 : index
    %44 = vector.load %arg11[%c0_46, %c1836] : memref<8x3264xf32, #tpu.memory_space<vmem>>, vector<8x102xf32>
    tpu.vector_store %arg11[%c0_46, %c1836], %43 {strides = array<i32>} : memref<8x3264xf32, #tpu.memory_space<vmem>>, vector<8x102xf32>,
    %c152 = arith.constant 152 : index
    %c0_47 = arith.constant 0 : index
    %45 = vector.load %arg10[%c152, %c0_47] : memref<256x102xf32, #tpu.memory_space<vmem>>, vector<8x102xf32>
    %c0_48 = arith.constant 0 : index
    %c1938 = arith.constant 1938 : index
    %46 = vector.load %arg11[%c0_48, %c1938] : memref<8x3264xf32, #tpu.memory_space<vmem>>, vector<8x102xf32>
    tpu.vector_store %arg11[%c0_48, %c1938], %45 {strides = array<i32>} : memref<8x3264xf32, #tpu.memory_space<vmem>>, vector<8x102xf32>,
    %c160 = arith.constant 160 : index
    %c0_49 = arith.constant 0 : index
    %47 = vector.load %arg10[%c160, %c0_49] : memref<256x102xf32, #tpu.memory_space<vmem>>, vector<8x102xf32>
    %c0_50 = arith.constant 0 : index
    %c2040 = arith.constant 2040 : index
    %48 = vector.load %arg11[%c0_50, %c2040] : memref<8x3264xf32, #tpu.memory_space<vmem>>, vector<8x102xf32>
    tpu.vector_store %arg11[%c0_50, %c2040], %47 {strides = array<i32>} : memref<8x3264xf32, #tpu.memory_space<vmem>>, vector<8x102xf32>,
    %c168 = arith.constant 168 : index
    %c0_51 = arith.constant 0 : index
    %49 = vector.load %arg10[%c168, %c0_51] : memref<256x102xf32, #tpu.memory_space<vmem>>, vector<8x102xf32>
    %c0_52 = arith.constant 0 : index
    %c2142 = arith.constant 2142 : index
    %50 = vector.load %arg11[%c0_52, %c2142] : memref<8x3264xf32, #tpu.memory_space<vmem>>, vector<8x102xf32>
    tpu.vector_store %arg11[%c0_52, %c2142], %49 {strides = array<i32>} : memref<8x3264xf32, #tpu.memory_space<vmem>>, vector<8x102xf32>,
    %c176 = arith.constant 176 : index
    %c0_53 = arith.constant 0 : index
    %51 = vector.load %arg10[%c176, %c0_53] : memref<256x102xf32, #tpu.memory_space<vmem>>, vector<8x102xf32>
    %c0_54 = arith.constant 0 : index
    %c2244 = arith.constant 2244 : index
    %52 = vector.load %arg11[%c0_54, %c2244] : memref<8x3264xf32, #tpu.memory_space<vmem>>, vector<8x102xf32>
    tpu.vector_store %arg11[%c0_54, %c2244], %51 {strides = array<i32>} : memref<8x3264xf32, #tpu.memory_space<vmem>>, vector<8x102xf32>,
    %c184 = arith.constant 184 : index
    %c0_55 = arith.constant 0 : index
    %53 = vector.load %arg10[%c184, %c0_55] : memref<256x102xf32, #tpu.memory_space<vmem>>, vector<8x102xf32>
    %c0_56 = arith.constant 0 : index
    %c2346 = arith.constant 2346 : index
    %54 = vector.load %arg11[%c0_56, %c2346] : memref<8x3264xf32, #tpu.memory_space<vmem>>, vector<8x102xf32>
    tpu.vector_store %arg11[%c0_56, %c2346], %53 {strides = array<i32>} : memref<8x3264xf32, #tpu.memory_space<vmem>>, vector<8x102xf32>,
    %c192 = arith.constant 192 : index
    %c0_57 = arith.constant 0 : index
    %55 = vector.load %arg10[%c192, %c0_57] : memref<256x102xf32, #tpu.memory_space<vmem>>, vector<8x102xf32>
    %c0_58 = arith.constant 0 : index
    %c2448 = arith.constant 2448 : index
    %56 = vector.load %arg11[%c0_58, %c2448] : memref<8x3264xf32, #tpu.memory_space<vmem>>, vector<8x102xf32>
    tpu.vector_store %arg11[%c0_58, %c2448], %55 {strides = array<i32>} : memref<8x3264xf32, #tpu.memory_space<vmem>>, vector<8x102xf32>,
    %c200 = arith.constant 200 : index
    %c0_59 = arith.constant 0 : index
    %57 = vector.load %arg10[%c200, %c0_59] : memref<256x102xf32, #tpu.memory_space<vmem>>, vector<8x102xf32>
    %c0_60 = arith.constant 0 : index
    %c2550 = arith.constant 2550 : index
    %58 = vector.load %arg11[%c0_60, %c2550] : memref<8x3264xf32, #tpu.memory_space<vmem>>, vector<8x102xf32>
    tpu.vector_store %arg11[%c0_60, %c2550], %57 {strides = array<i32>} : memref<8x3264xf32, #tpu.memory_space<vmem>>, vector<8x102xf32>,
    %c208 = arith.constant 208 : index
    %c0_61 = arith.constant 0 : index
    %59 = vector.load %arg10[%c208, %c0_61] : memref<256x102xf32, #tpu.memory_space<vmem>>, vector<8x102xf32>
    %c0_62 = arith.constant 0 : index
    %c2652 = arith.constant 2652 : index
    %60 = vector.load %arg11[%c0_62, %c2652] : memref<8x3264xf32, #tpu.memory_space<vmem>>, vector<8x102xf32>
    tpu.vector_store %arg11[%c0_62, %c2652], %59 {strides = array<i32>} : memref<8x3264xf32, #tpu.memory_space<vmem>>, vector<8x102xf32>,
    %c216 = arith.constant 216 : index
    %c0_63 = arith.constant 0 : index
    %61 = vector.load %arg10[%c216, %c0_63] : memref<256x102xf32, #tpu.memory_space<vmem>>, vector<8x102xf32>
    %c0_64 = arith.constant 0 : index
    %c2754 = arith.constant 2754 : index
    %62 = vector.load %arg11[%c0_64, %c2754] : memref<8x3264xf32, #tpu.memory_space<vmem>>, vector<8x102xf32>
    tpu.vector_store %arg11[%c0_64, %c2754], %61 {strides = array<i32>} : memref<8x3264xf32, #tpu.memory_space<vmem>>, vector<8x102xf32>,
    %c224 = arith.constant 224 : index
    %c0_65 = arith.constant 0 : index
    %63 = vector.load %arg10[%c224, %c0_65] : memref<256x102xf32, #tpu.memory_space<vmem>>, vector<8x102xf32>
    %c0_66 = arith.constant 0 : index
    %c2856 = arith.constant 2856 : index
    %64 = vector.load %arg11[%c0_66, %c2856] : memref<8x3264xf32, #tpu.memory_space<vmem>>, vector<8x102xf32>
    tpu.vector_store %arg11[%c0_66, %c2856], %63 {strides = array<i32>} : memref<8x3264xf32, #tpu.memory_space<vmem>>, vector<8x102xf32>,
    %c232 = arith.constant 232 : index
    %c0_67 = arith.constant 0 : index
    %65 = vector.load %arg10[%c232, %c0_67] : memref<256x102xf32, #tpu.memory_space<vmem>>, vector<8x102xf32>
    %c0_68 = arith.constant 0 : index
    %c2958 = arith.constant 2958 : index
    %66 = vector.load %arg11[%c0_68, %c2958] : memref<8x3264xf32, #tpu.memory_space<vmem>>, vector<8x102xf32>
    tpu.vector_store %arg11[%c0_68, %c2958], %65 {strides = array<i32>} : memref<8x3264xf32, #tpu.memory_space<vmem>>, vector<8x102xf32>,
    %c240 = arith.constant 240 : index
    %c0_69 = arith.constant 0 : index
    %67 = vector.load %arg10[%c240, %c0_69] : memref<256x102xf32, #tpu.memory_space<vmem>>, vector<8x102xf32>
    %c0_70 = arith.constant 0 : index
    %c3060 = arith.constant 3060 : index
    %68 = vector.load %arg11[%c0_70, %c3060] : memref<8x3264xf32, #tpu.memory_space<vmem>>, vector<8x102xf32>
    tpu.vector_store %arg11[%c0_70, %c3060], %67 {strides = array<i32>} : memref<8x3264xf32, #tpu.memory_space<vmem>>, vector<8x102xf32>,
    %c248 = arith.constant 248 : index
    %c0_71 = arith.constant 0 : index
    %69 = vector.load %arg10[%c248, %c0_71] : memref<256x102xf32, #tpu.memory_space<vmem>>, vector<8x102xf32>
    %c0_72 = arith.constant 0 : index
    %c3162 = arith.constant 3162 : index
    %70 = vector.load %arg11[%c0_72, %c3162] : memref<8x3264xf32, #tpu.memory_space<vmem>>, vector<8x102xf32>
    tpu.vector_store %arg11[%c0_72, %c3162], %69 {strides = array<i32>} : memref<8x3264xf32, #tpu.memory_space<vmem>>, vector<8x102xf32>,
    %c0_73 = arith.constant 0 : index
    %c0_74 = arith.constant 0 : index
    %71 = vector.load %arg11[%c0_73, %c0_74] : memref<8x3264xf32, #tpu.memory_space<vmem>>, vector<8x3264xf32>
    %72 = arith.truncf %71 : vector<8x3264xf32> to vector<8x3264xbf16>
    %c0_75 = arith.constant 0 : index
    %c0_76 = arith.constant 0 : index
    %73 = vector.load %arg3[%c0_75, %c0_76] : memref<3264x256xbf16, #tpu.memory_space<vmem>>, vector<3264x256xbf16>
    %cst_77 = arith.constant dense<0.000000e+00> : vector<8x256xf32>
    %74 = tpu.matmul %72, %73, %cst_77 {dimension_numbers = #tpu.dot_dimension_numbers<[1], [0], [0], [1], [0, 0, 1, 1], [], []>} : vector<8x3264xbf16>, vector<3264x256xbf16>, vector<8x256xf32> -> vector<8x256xf32>
    %c0_78 = arith.constant 0 : index
    %c0_79 = arith.constant 0 : index
    %75 = vector.load %arg4[%c0_78, %c0_79] : memref<1x256xf32, #tpu.memory_space<vmem>>, vector<1x256xf32>
    %76 = vector.broadcast %75 : vector<1x256xf32> to vector<8x256xf32>
    %77 = arith.addf %74, %76 : vector<8x256xf32>
    %cst_80 = arith.constant 0.000000e+00 : f32
    %78 = vector.broadcast %cst_80 : f32 to vector<8x256xf32>
    %79 = arith.maximumf %77, %78 : vector<8x256xf32>
    %80 = arith.truncf %79 : vector<8x256xf32> to vector<8x256xbf16>
    %c0_81 = arith.constant 0 : index
    %c0_82 = arith.constant 0 : index
    %81 = vector.load %arg5[%c0_81, %c0_82] : memref<256x128xbf16, #tpu.memory_space<vmem>>, vector<256x128xbf16>
    %cst_83 = arith.constant dense<0.000000e+00> : vector<8x128xf32>
    %82 = tpu.matmul %80, %81, %cst_83 {dimension_numbers = #tpu.dot_dimension_numbers<[1], [0], [0], [1], [0, 0, 1, 1], [], []>} : vector<8x256xbf16>, vector<256x128xbf16>, vector<8x128xf32> -> vector<8x128xf32>
    %c0_84 = arith.constant 0 : index
    %c0_85 = arith.constant 0 : index
    %83 = vector.load %arg6[%c0_84, %c0_85] : memref<1x128xf32, #tpu.memory_space<vmem>>, vector<1x128xf32>
    %84 = vector.broadcast %83 : vector<1x128xf32> to vector<8x128xf32>
    %85 = arith.addf %82, %84 : vector<8x128xf32>
    %cst_86 = arith.constant 0.000000e+00 : f32
    %86 = vector.broadcast %cst_86 : f32 to vector<8x128xf32>
    %87 = arith.maximumf %85, %86 : vector<8x128xf32>
    %c0_87 = arith.constant 0 : index
    %c0_88 = arith.constant 0 : index
    %88 = vector.load %arg7[%c0_87, %c0_88] : memref<128x3xf32, #tpu.memory_space<vmem>>, vector<128x3xf32>
    %cst_89 = arith.constant dense<0.000000e+00> : vector<8x3xf32>
    %89 = tpu.matmul %87, %88, %cst_89 {dimension_numbers = #tpu.dot_dimension_numbers<[1], [0], [0], [1], [0, 0, 1, 1], [], []>} : vector<8x128xf32>, vector<128x3xf32>, vector<8x3xf32> -> vector<8x3xf32>
    %c0_90 = arith.constant 0 : index
    %c0_91 = arith.constant 0 : index
    %90 = vector.load %arg8[%c0_90, %c0_91] : memref<1x3xf32, #tpu.memory_space<vmem>>, vector<1x3xf32>
    %91 = vector.broadcast %90 : vector<1x3xf32> to vector<8x3xf32>
    %92 = arith.addf %89, %91 : vector<8x3xf32>
    %c0_92 = arith.constant 0 : index
    %c0_93 = arith.constant 0 : index
    %93 = vector.load %arg9[%c0_92, %c0_93] : memref<8x3xf32, #tpu.memory_space<vmem>>, vector<8x3xf32>
    tpu.vector_store %arg9[%c0_92, %c0_93], %92 {strides = array<i32>} : memref<8x3xf32, #tpu.memory_space<vmem>>, vector<8x3xf32>,
    return
  }
}

</mosaic_0001>

<llo_original>
// kernel: model_forward.1
$region0: #{model_forward.1}
  #allocation0 [shape = 'u32[]', space=smem, size = 0x4, offset = 0x4, fixed_abs, tag = 'smem constant byte address 0x4 - core index']
  #allocation1 [shape = 'u32[144,128]{1,0:T(1,128)}', space=vmem, size = 0x12000, scoped, tag = 'internal scratch']
  #allocation2 [shape = 'f32[256,102]{1,0:T(8,128)}', space=vmem, size = 0x20000, scoped, tag = 'scratch operand']
  #allocation3 [shape = 'f32[8,3264]{1,0:T(8,128)}', space=vmem, size = 0x1a000, scoped, tag = 'scratch operand']
  %s0 = inlined_call_operand.vmem [shape: f32[24,102], index: 0, kind: input, shape index: {}]
  %s1 = inlined_call_operand.vmem [shape: f32[256,24], index: 1, kind: input, shape index: {}]
  %s2 = inlined_call_operand.vmem [shape: f32[256,1], index: 2, kind: input, shape index: {}]
  %s3 = inlined_call_operand.vmem [shape: bf16[3264,256], index: 3, kind: input, shape index: {}]
  %s4 = inlined_call_operand.vmem [shape: f32[1,256], index: 4, kind: input, shape index: {}]
  %s5 = inlined_call_operand.vmem [shape: bf16[256,128], index: 5, kind: input, shape index: {}]
  %s6 = inlined_call_operand.vmem [shape: f32[1,128], index: 6, kind: input, shape index: {}]
  %s7 = inlined_call_operand.vmem [shape: f32[128,3], index: 7, kind: input, shape index: {}]
  %s8 = inlined_call_operand.vmem [shape: f32[1,3], index: 8, kind: input, shape index: {}]
  %s9 = inlined_call_operand.vmem [shape: f32[8,3], index: 9, kind: output, shape index: {}]
  %s10 = sld [smem:[#allocation0]]
  $region46: #{model_forward.1} parent=0
    _
  %s12 = ssub.s32 1, %s10
  %s13 = scalar_select 0, %s12, %s10
  // Predicated region
  $region2: #{model_forward.1} parent=0 // pred_check
    _
  $region3: #{model_forward.1} parent=0 // pred_check_branch
    %15 = sbr.rel (0) target = $region5
  $region4: #{model_forward.1} parent=0 // pred_region
    _
  $region5: #{model_forward.1} parent=0 // pred_fallthru
    _
  // Predicated region
  $region6: #{model_forward.1} parent=0 // pred_check
    _
  $region7: #{model_forward.1} parent=0 // pred_check_branch
    %17 = sbr.rel (0) target = $region9
  $region8: #{model_forward.1} parent=0 // pred_region
    _
  $region9: #{model_forward.1} parent=0 // pred_fallthru
    _
  // Predicated region
  $region10: #{model_forward.1} parent=0 // pred_check
    _
  $region11: #{model_forward.1} parent=0 // pred_check_branch
    %19 = sbr.rel (0) target = $region13
  $region12: #{model_forward.1} parent=0 // pred_region
    _
  $region13: #{model_forward.1} parent=0 // pred_fallthru
    _
  // Predicated region
  $region14: #{model_forward.1} parent=0 // pred_check
    _
  $region15: #{model_forward.1} parent=0 // pred_check_branch
    %21 = sbr.rel (0) target = $region17
  $region16: #{model_forward.1} parent=0 // pred_region
    _
  $region17: #{model_forward.1} parent=0 // pred_fallthru
    _
  // Predicated region
  $region18: #{model_forward.1} parent=0 // pred_check
    _
  $region19: #{model_forward.1} parent=0 // pred_check_branch
    %23 = sbr.rel (0) target = $region21
  $region20: #{model_forward.1} parent=0 // pred_region
    _
  $region21: #{model_forward.1} parent=0 // pred_fallthru
    _
  // Predicated region
  $region22: #{model_forward.1} parent=0 // pred_check
    _
  $region23: #{model_forward.1} parent=0 // pred_check_branch
    %25 = sbr.rel (0) target = $region25
  $region24: #{model_forward.1} parent=0 // pred_region
    _
  $region25: #{model_forward.1} parent=0 // pred_fallthru
    _
  // Predicated region
  $region26: #{model_forward.1} parent=0 // pred_check
    _
  $region27: #{model_forward.1} parent=0 // pred_check_branch
    %27 = sbr.rel (0) target = $region29
  $region28: #{model_forward.1} parent=0 // pred_region
    _
  $region29: #{model_forward.1} parent=0 // pred_fallthru
    _
  // Predicated region
  $region30: #{model_forward.1} parent=0 // pred_check
    _
  $region31: #{model_forward.1} parent=0 // pred_check_branch
    %29 = sbr.rel (0) target = $region33
  $region32: #{model_forward.1} parent=0 // pred_region
    _
  $region33: #{model_forward.1} parent=0 // pred_fallthru
    _
  // Predicated region
  $region34: #{model_forward.1} parent=0 // pred_check
    _
  $region35: #{model_forward.1} parent=0 // pred_check_branch
    %31 = sbr.rel (0) target = $region37
  $region36: #{model_forward.1} parent=0 // pred_region
    _
  $region37: #{model_forward.1} parent=0 // pred_fallthru
    _
  %v33 = vld [vmem:[%s1] sm:$0xff]
  %v34 = vld [vmem:[%s1 + $0x8] sm:$0xff]
  %v35 = vld [vmem:[%s1 + $0x10] sm:$0xff]
  %v36 = vld [vmem:[%s1 + $0x18] sm:$0xff]
  %v37 = vld [vmem:[%s1 + $0x20] sm:$0xff]
  %v38 = vld [vmem:[%s1 + $0x28] sm:$0xff]
  %v39 = vld [vmem:[%s1 + $0x30] sm:$0xff]
  %v40 = vld [vmem:[%s1 + $0x38] sm:$0xff]
  %v41 = vld [vmem:[%s1 + $0x40] sm:$0xff]
  %v42 = vld [vmem:[%s1 + $0x48] sm:$0xff]
  %v43 = vld [vmem:[%s1 + $0x50] sm:$0xff]
  %v44 = vld [vmem:[%s1 + $0x58] sm:$0xff]
  %v45 = vld [vmem:[%s1 + $0x60] sm:$0xff]
  %v46 = vld [vmem:[%s1 + $0x68] sm:$0xff]
  %v47 = vld [vmem:[%s1 + $0x70] sm:$0xff]
  %v48 = vld [vmem:[%s1 + $0x78] sm:$0xff]
  %v49 = vld [vmem:[%s1 + $0x80] sm:$0xff]
  %v50 = vld [vmem:[%s1 + $0x88] sm:$0xff]
  %v51 = vld [vmem:[%s1 + $0x90] sm:$0xff]
  %v52 = vld [vmem:[%s1 + $0x98] sm:$0xff]
  %v53 = vld [vmem:[%s1 + $0xa0] sm:$0xff]
  %v54 = vld [vmem:[%s1 + $0xa8] sm:$0xff]
  %v55 = vld [vmem:[%s1 + $0xb0] sm:$0xff]
  %v56 = vld [vmem:[%s1 + $0xb8] sm:$0xff]
  %v57 = vld [vmem:[%s1 + $0xc0] sm:$0xff]
  %v58 = vld [vmem:[%s1 + $0xc8] sm:$0xff]
  %v59 = vld [vmem:[%s1 + $0xd0] sm:$0xff]
  %v60 = vld [vmem:[%s1 + $0xd8] sm:$0xff]
  %v61 = vld [vmem:[%s1 + $0xe0] sm:$0xff]
  %v62 = vld [vmem:[%s1 + $0xe8] sm:$0xff]
  %v63 = vld [vmem:[%s1 + $0xf0] sm:$0xff]
  %v64 = vld [vmem:[%s1 + $0xf8] sm:$0xff]
  %v65 = vld [vmem:[%s0] sm:$0xff]
  %v66 = vld [vmem:[%s0 + $0x8] sm:$0xff]
  %v67 = vld [vmem:[%s0 + $0x10] sm:$0xff]
  %v68 = vld [vmem:[%s2] sm:$0xff]
  %v69 = vld [vmem:[%s2 + $0x8] sm:$0xff]
  %v70 = vld [vmem:[%s2 + $0x10] sm:$0xff]
  %v71 = vld [vmem:[%s2 + $0x18] sm:$0xff]
  %v72 = vld [vmem:[%s2 + $0x20] sm:$0xff]
  %v73 = vld [vmem:[%s2 + $0x28] sm:$0xff]
  %v74 = vld [vmem:[%s2 + $0x30] sm:$0xff]
  %v75 = vld [vmem:[%s2 + $0x38] sm:$0xff]
  %v76 = vld [vmem:[%s2 + $0x40] sm:$0xff]
  %v77 = vld [vmem:[%s2 + $0x48] sm:$0xff]
  %v78 = vld [vmem:[%s2 + $0x50] sm:$0xff]
  %v79 = vld [vmem:[%s2 + $0x58] sm:$0xff]
  %v80 = vld [vmem:[%s2 + $0x60] sm:$0xff]
  %v81 = vld [vmem:[%s2 + $0x68] sm:$0xff]
  %v82 = vld [vmem:[%s2 + $0x70] sm:$0xff]
  %v83 = vld [vmem:[%s2 + $0x78] sm:$0xff]
  %v84 = vld [vmem:[%s2 + $0x80] sm:$0xff]
  %v85 = vld [vmem:[%s2 + $0x88] sm:$0xff]
  %v86 = vld [vmem:[%s2 + $0x90] sm:$0xff]
  %v87 = vld [vmem:[%s2 + $0x98] sm:$0xff]
  %v88 = vld [vmem:[%s2 + $0xa0] sm:$0xff]
  %v89 = vld [vmem:[%s2 + $0xa8] sm:$0xff]
  %v90 = vld [vmem:[%s2 + $0xb0] sm:$0xff]
  %v91 = vld [vmem:[%s2 + $0xb8] sm:$0xff]
  %v92 = vld [vmem:[%s2 + $0xc0] sm:$0xff]
  %v93 = vld [vmem:[%s2 + $0xc8] sm:$0xff]
  %v94 = vld [vmem:[%s2 + $0xd0] sm:$0xff]
  %v95 = vld [vmem:[%s2 + $0xd8] sm:$0xff]
  %v96 = vld [vmem:[%s2 + $0xe0] sm:$0xff]
  %v97 = vld [vmem:[%s2 + $0xe8] sm:$0xff]
  %v98 = vld [vmem:[%s2 + $0xf0] sm:$0xff]
  %v99 = vld [vmem:[%s2 + $0xf8] sm:$0xff]
  %101 = vset.pattern.permute.xlu0 0
  %102 = vperm.xlu0 %101, %v68
  %v103 = vpop.permute.xlu0 %102
  %106 = vset.pattern.permute.xlu0 0
  %107 = vperm.xlu0 %106, %v69
  %v108 = vpop.permute.xlu0 %107
  %111 = vset.pattern.permute.xlu0 0
  %112 = vperm.xlu0 %111, %v70
  %v113 = vpop.permute.xlu0 %112
  %116 = vset.pattern.permute.xlu0 0
  %117 = vperm.xlu0 %116, %v71
  %v118 = vpop.permute.xlu0 %117
  %121 = vset.pattern.permute.xlu0 0
  %122 = vperm.xlu0 %121, %v72
  %v123 = vpop.permute.xlu0 %122
  %126 = vset.pattern.permute.xlu0 0
  %127 = vperm.xlu0 %126, %v73
  %v128 = vpop.permute.xlu0 %127
  %131 = vset.pattern.permute.xlu0 0
  %132 = vperm.xlu0 %131, %v74
  %v133 = vpop.permute.xlu0 %132
  %136 = vset.pattern.permute.xlu0 0
  %137 = vperm.xlu0 %136, %v75
  %v138 = vpop.permute.xlu0 %137
  %141 = vset.pattern.permute.xlu0 0
  %142 = vperm.xlu0 %141, %v76
  %v143 = vpop.permute.xlu0 %142
  %146 = vset.pattern.permute.xlu0 0
  %147 = vperm.xlu0 %146, %v77
  %v148 = vpop.permute.xlu0 %147
  %151 = vset.pattern.permute.xlu0 0
  %152 = vperm.xlu0 %151, %v78
  %v153 = vpop.permute.xlu0 %152
  %156 = vset.pattern.permute.xlu0 0
  %157 = vperm.xlu0 %156, %v79
  %v158 = vpop.permute.xlu0 %157
  %161 = vset.pattern.permute.xlu0 0
  %162 = vperm.xlu0 %161, %v80
  %v163 = vpop.permute.xlu0 %162
  %166 = vset.pattern.permute.xlu0 0
  %167 = vperm.xlu0 %166, %v81
  %v168 = vpop.permute.xlu0 %167
  %171 = vset.pattern.permute.xlu0 0
  %172 = vperm.xlu0 %171, %v82
  %v173 = vpop.permute.xlu0 %172
  %176 = vset.pattern.permute.xlu0 0
  %177 = vperm.xlu0 %176, %v83
  %v178 = vpop.permute.xlu0 %177
  %181 = vset.pattern.permute.xlu0 0
  %182 = vperm.xlu0 %181, %v84
  %v183 = vpop.permute.xlu0 %182
  %186 = vset.pattern.permute.xlu0 0
  %187 = vperm.xlu0 %186, %v85
  %v188 = vpop.permute.xlu0 %187
  %191 = vset.pattern.permute.xlu0 0
  %192 = vperm.xlu0 %191, %v86
  %v193 = vpop.permute.xlu0 %192
  %196 = vset.pattern.permute.xlu0 0
  %197 = vperm.xlu0 %196, %v87
  %v198 = vpop.permute.xlu0 %197
  %201 = vset.pattern.permute.xlu0 0
  %202 = vperm.xlu0 %201, %v88
  %v203 = vpop.permute.xlu0 %202
  %206 = vset.pattern.permute.xlu0 0
  %207 = vperm.xlu0 %206, %v89
  %v208 = vpop.permute.xlu0 %207
  %211 = vset.pattern.permute.xlu0 0
  %212 = vperm.xlu0 %211, %v90
  %v213 = vpop.permute.xlu0 %212
  %216 = vset.pattern.permute.xlu0 0
  %217 = vperm.xlu0 %216, %v91
  %v218 = vpop.permute.xlu0 %217
  %221 = vset.pattern.permute.xlu0 0
  %222 = vperm.xlu0 %221, %v92
  %v223 = vpop.permute.xlu0 %222
  %226 = vset.pattern.permute.xlu0 0
  %227 = vperm.xlu0 %226, %v93
  %v228 = vpop.permute.xlu0 %227
  %231 = vset.pattern.permute.xlu0 0
  %232 = vperm.xlu0 %231, %v94
  %v233 = vpop.permute.xlu0 %232
  %236 = vset.pattern.permute.xlu0 0
  %237 = vperm.xlu0 %236, %v95
  %v238 = vpop.permute.xlu0 %237
  %241 = vset.pattern.permute.xlu0 0
  %242 = vperm.xlu0 %241, %v96
  %v243 = vpop.permute.xlu0 %242
  %246 = vset.pattern.permute.xlu0 0
  %247 = vperm.xlu0 %246, %v97
  %v248 = vpop.permute.xlu0 %247
  %251 = vset.pattern.permute.xlu0 0
  %252 = vperm.xlu0 %251, %v98
  %v253 = vpop.permute.xlu0 %252
  %256 = vset.pattern.permute.xlu0 0
  %257 = vperm.xlu0 %256, %v99
  %v258 = vpop.permute.xlu0 %257
  %vm260 = vcmask 195584
  %v262 = vsel %vm260, %v33, 0
  %v265 = vsel %vm260, %v34, 0
  %v268 = vsel %vm260, %v35, 0
  %v271 = vsel %vm260, %v36, 0
  %v274 = vsel %vm260, %v37, 0
  %v277 = vsel %vm260, %v38, 0
  %v280 = vsel %vm260, %v39, 0
  %v283 = vsel %vm260, %v40, 0
  %v286 = vsel %vm260, %v41, 0
  %v289 = vsel %vm260, %v42, 0
  %v292 = vsel %vm260, %v43, 0
  %v295 = vsel %vm260, %v44, 0
  %v298 = vsel %vm260, %v45, 0
  %v301 = vsel %vm260, %v46, 0
  %v304 = vsel %vm260, %v47, 0
  %v307 = vsel %vm260, %v48, 0
  %v310 = vsel %vm260, %v49, 0
  %v313 = vsel %vm260, %v50, 0
  %v316 = vsel %vm260, %v51, 0
  %v319 = vsel %vm260, %v52, 0
  %v322 = vsel %vm260, %v53, 0
  %v325 = vsel %vm260, %v54, 0
  %v328 = vsel %vm260, %v55, 0
  %v331 = vsel %vm260, %v56, 0
  %v334 = vsel %vm260, %v57, 0
  %v337 = vsel %vm260, %v58, 0
  %v340 = vsel %vm260, %v59, 0
  %v343 = vsel %vm260, %v60, 0
  %v346 = vsel %vm260, %v61, 0
  %v349 = vsel %vm260, %v62, 0
  %v352 = vsel %vm260, %v63, 0
  %v355 = vsel %vm260, %v64, 0
  %357 = vmatprep.subr.mxu0 0.0
  %358 = vmatpush1.msra.mxu0 %v65
  %359 = vmatprep.subr.mxu0 0.0
  %360 = vmatpush1.msra.mxu0 %v66
  %361 = vmatprep.subr.mxu0 0.0
  %362 = vmatpush1.msra.mxu0 %v67
  %363 = vmatprep.subr.mxu0 0.0
  %364 = vmatpush1.msra.mxu0 0.0
  %365 = vmatprep.subr.mxu0 0.0
  %366 = vmatpush1.msra.mxu0 0.0
  %367 = vmatprep.subr.mxu0 0.0
  %368 = vmatpush1.msra.mxu0 0.0
  %369 = vmatprep.subr.mxu0 0.0
  %370 = vmatpush1.msra.mxu0 0.0
  %371 = vmatprep.subr.mxu0 0.0
  %372 = vmatpush1.msra.mxu0 0.0
  %373 = vmatprep.subr.mxu0 0.0
  %374 = vmatpush1.msra.mxu0 0.0
  %375 = vmatprep.subr.mxu0 0.0
  %376 = vmatpush1.msra.mxu0 0.0
  %377 = vmatprep.subr.mxu0 0.0
  %378 = vmatpush1.msra.mxu0 0.0
  %379 = vmatprep.subr.mxu0 0.0
  %380 = vmatpush1.msra.mxu0 0.0
  %381 = vmatprep.subr.mxu0 0.0
  %382 = vmatpush1.msra.mxu0 0.0
  %383 = vmatprep.subr.mxu0 0.0
  %384 = vmatpush1.msra.mxu0 0.0
  %385 = vmatprep.subr.mxu0 0.0
  %386 = vmatpush1.msra.mxu0 0.0
  %387 = vmatprep.subr.mxu0 0.0
  %388 = vmatpush1.msra.mxu0 0.0
  %389 = vmatprep.subr.mxu0 0.0
  %390 = vmatpush1.msra.mxu0 0.0
  %391 = vmatprep.subr.mxu0 0.0
  %392 = vmatpush1.msra.mxu0 0.0
  %393 = vmatprep.subr.mxu0 0.0
  %394 = vmatpush1.msra.mxu0 0.0
  %395 = vmatprep.subr.mxu0 0.0
  %396 = vmatpush1.msra.mxu0 0.0
  %397 = vmatprep.subr.mxu0 0.0
  %398 = vmatpush1.msra.mxu0 0.0
  %399 = vmatprep.subr.mxu0 0.0
  %400 = vmatpush1.msra.mxu0 0.0
  %401 = vmatprep.subr.mxu0 0.0
  %402 = vmatpush1.msra.mxu0 0.0
  %403 = vmatprep.subr.mxu0 0.0
  %404 = vmatpush1.msra.mxu0 0.0
  %405 = vmatprep.subr.mxu0 0.0
  %406 = vmatpush1.msra.mxu0 0.0
  %407 = vmatprep.subr.mxu0 0.0
  %408 = vmatpush1.msra.mxu0 0.0
  %409 = vmatprep.subr.mxu0 0.0
  %410 = vmatpush1.msra.mxu0 0.0
  %411 = vmatprep.subr.mxu0 0.0
  %412 = vmatpush1.msra.mxu0 0.0
  %413 = vmatprep.subr.mxu0 0.0
  %414 = vmatpush1.msra.mxu0 0.0
  %415 = vmatprep.subr.mxu0 0.0
  %416 = vmatpush1.msra.mxu0 0.0
  %417 = vmatprep.subr.mxu0 0.0
  %418 = vmatpush1.msra.mxu0 0.0
  %419 = vmatprep.subr.mxu0 0.0
  %420 = vmatpush1.msra.mxu0 0.0
  %421 = vmatprep.mubr.f32.mxu0 0.0
  %422 = vmatmul.mubr.f32.gmra.mrb[0].mxu0 %v262
  %v423 = vpop.f32.mrb[0].mxu0
  %v424 = vadd.f32 %v103, %v423
  %v425 = vpop.f32.mrb[0].mxu0
  %426 = vmatprep.mubr.f32.mxu0 0.0
  %427 = vmatmul.mubr.f32.gmra.mrb[0].mxu0 %v265
  %v428 = vpop.f32.mrb[0].mxu0
  %v429 = vadd.f32 %v108, %v428
  %v430 = vpop.f32.mrb[0].mxu0
  %431 = vmatprep.mubr.f32.mxu0 0.0
  %432 = vmatmul.mubr.f32.gmra.mrb[0].mxu0 %v268
  %v433 = vpop.f32.mrb[0].mxu0
  %v434 = vadd.f32 %v113, %v433
  %v435 = vpop.f32.mrb[0].mxu0
  %436 = vmatprep.mubr.f32.mxu0 0.0
  %437 = vmatmul.mubr.f32.gmra.mrb[0].mxu0 %v271
  %v438 = vpop.f32.mrb[0].mxu0
  %v439 = vadd.f32 %v118, %v438
  %v440 = vpop.f32.mrb[0].mxu0
  %441 = vmatprep.mubr.f32.mxu0 0.0
  %442 = vmatmul.mubr.f32.gmra.mrb[0].mxu0 %v274
  %v443 = vpop.f32.mrb[0].mxu0
  %v444 = vadd.f32 %v123, %v443
  %v445 = vpop.f32.mrb[0].mxu0
  %446 = vmatprep.mubr.f32.mxu0 0.0
  %447 = vmatmul.mubr.f32.gmra.mrb[0].mxu0 %v277
  %v448 = vpop.f32.mrb[0].mxu0
  %v449 = vadd.f32 %v128, %v448
  %v450 = vpop.f32.mrb[0].mxu0
  %451 = vmatprep.mubr.f32.mxu0 0.0
  %452 = vmatmul.mubr.f32.gmra.mrb[0].mxu0 %v280
  %v453 = vpop.f32.mrb[0].mxu0
  %v454 = vadd.f32 %v133, %v453
  %v455 = vpop.f32.mrb[0].mxu0
  %456 = vmatprep.mubr.f32.mxu0 0.0
  %457 = vmatmul.mubr.f32.gmra.mrb[0].mxu0 %v283
  %v458 = vpop.f32.mrb[0].mxu0
  %v459 = vadd.f32 %v138, %v458
  %v460 = vpop.f32.mrb[0].mxu0
  %461 = vmatprep.mubr.f32.mxu0 0.0
  %462 = vmatmul.mubr.f32.gmra.mrb[0].mxu0 %v286
  %v463 = vpop.f32.mrb[0].mxu0
  %v464 = vadd.f32 %v143, %v463
  %v465 = vpop.f32.mrb[0].mxu0
  %466 = vmatprep.mubr.f32.mxu0 0.0
  %467 = vmatmul.mubr.f32.gmra.mrb[0].mxu0 %v289
  %v468 = vpop.f32.mrb[0].mxu0
  %v469 = vadd.f32 %v148, %v468
  %v470 = vpop.f32.mrb[0].mxu0
  %471 = vmatprep.mubr.f32.mxu0 0.0
  %472 = vmatmul.mubr.f32.gmra.mrb[0].mxu0 %v292
  %v473 = vpop.f32.mrb[0].mxu0
  %v474 = vadd.f32 %v153, %v473
  %v475 = vpop.f32.mrb[0].mxu0
  %476 = vmatprep.mubr.f32.mxu0 0.0
  %477 = vmatmul.mubr.f32.gmra.mrb[0].mxu0 %v295
  %v478 = vpop.f32.mrb[0].mxu0
  %v479 = vadd.f32 %v158, %v478
  %v480 = vpop.f32.mrb[0].mxu0
  %481 = vmatprep.mubr.f32.mxu0 0.0
  %482 = vmatmul.mubr.f32.gmra.mrb[0].mxu0 %v298
  %v483 = vpop.f32.mrb[0].mxu0
  %v484 = vadd.f32 %v163, %v483
  %v485 = vpop.f32.mrb[0].mxu0
  %486 = vmatprep.mubr.f32.mxu0 0.0
  %487 = vmatmul.mubr.f32.gmra.mrb[0].mxu0 %v301
  %v488 = vpop.f32.mrb[0].mxu0
  %v489 = vadd.f32 %v168, %v488
  %v490 = vpop.f32.mrb[0].mxu0
  %491 = vmatprep.mubr.f32.mxu0 0.0
  %492 = vmatmul.mubr.f32.gmra.mrb[0].mxu0 %v304
  %v493 = vpop.f32.mrb[0].mxu0
  %v494 = vadd.f32 %v173, %v493
  %v495 = vpop.f32.mrb[0].mxu0
  %496 = vmatprep.mubr.f32.mxu0 0.0
  %497 = vmatmul.mubr.f32.gmra.mrb[0].mxu0 %v307
  %v498 = vpop.f32.mrb[0].mxu0
  %v499 = vadd.f32 %v178, %v498
  %v500 = vpop.f32.mrb[0].mxu0
  %501 = vmatprep.mubr.f32.mxu0 0.0
  %502 = vmatmul.mubr.f32.gmra.mrb[0].mxu0 %v310
  %v503 = vpop.f32.mrb[0].mxu0
  %v504 = vadd.f32 %v183, %v503
  %v505 = vpop.f32.mrb[0].mxu0
  %506 = vmatprep.mubr.f32.mxu0 0.0
  %507 = vmatmul.mubr.f32.gmra.mrb[0].mxu0 %v313
  %v508 = vpop.f32.mrb[0].mxu0
  %v509 = vadd.f32 %v188, %v508
  %v510 = vpop.f32.mrb[0].mxu0
  %511 = vmatprep.mubr.f32.mxu0 0.0
  %512 = vmatmul.mubr.f32.gmra.mrb[0].mxu0 %v316
  %v513 = vpop.f32.mrb[0].mxu0
  %v514 = vadd.f32 %v193, %v513
  %v515 = vpop.f32.mrb[0].mxu0
  %516 = vmatprep.mubr.f32.mxu0 0.0
  %517 = vmatmul.mubr.f32.gmra.mrb[0].mxu0 %v319
  %v518 = vpop.f32.mrb[0].mxu0
  %v519 = vadd.f32 %v198, %v518
  %v520 = vpop.f32.mrb[0].mxu0
  %521 = vmatprep.mubr.f32.mxu0 0.0
  %522 = vmatmul.mubr.f32.gmra.mrb[0].mxu0 %v322
  %v523 = vpop.f32.mrb[0].mxu0
  %v524 = vadd.f32 %v203, %v523
  %v525 = vpop.f32.mrb[0].mxu0
  %526 = vmatprep.mubr.f32.mxu0 0.0
  %527 = vmatmul.mubr.f32.gmra.mrb[0].mxu0 %v325
  %v528 = vpop.f32.mrb[0].mxu0
  %v529 = vadd.f32 %v208, %v528
  %v530 = vpop.f32.mrb[0].mxu0
  %531 = vmatprep.mubr.f32.mxu0 0.0
  %532 = vmatmul.mubr.f32.gmra.mrb[0].mxu0 %v328
  %v533 = vpop.f32.mrb[0].mxu0
  %v534 = vadd.f32 %v213, %v533
  %v535 = vpop.f32.mrb[0].mxu0
  %536 = vmatprep.mubr.f32.mxu0 0.0
  %537 = vmatmul.mubr.f32.gmra.mrb[0].mxu0 %v331
  %v538 = vpop.f32.mrb[0].mxu0
  %v539 = vadd.f32 %v218, %v538
  %v540 = vpop.f32.mrb[0].mxu0
  %541 = vmatprep.mubr.f32.mxu0 0.0
  %542 = vmatmul.mubr.f32.gmra.mrb[0].mxu0 %v334
  %v543 = vpop.f32.mrb[0].mxu0
  %v544 = vadd.f32 %v223, %v543
  %v545 = vpop.f32.mrb[0].mxu0
  %546 = vmatprep.mubr.f32.mxu0 0.0
  %547 = vmatmul.mubr.f32.gmra.mrb[0].mxu0 %v337
  %v548 = vpop.f32.mrb[0].mxu0
  %v549 = vadd.f32 %v228, %v548
  %v550 = vpop.f32.mrb[0].mxu0
  %551 = vmatprep.mubr.f32.mxu0 0.0
  %552 = vmatmul.mubr.f32.gmra.mrb[0].mxu0 %v340
  %v553 = vpop.f32.mrb[0].mxu0
  %v554 = vadd.f32 %v233, %v553
  %v555 = vpop.f32.mrb[0].mxu0
  %556 = vmatprep.mubr.f32.mxu0 0.0
  %557 = vmatmul.mubr.f32.gmra.mrb[0].mxu0 %v343
  %v558 = vpop.f32.mrb[0].mxu0
  %v559 = vadd.f32 %v238, %v558
  %v560 = vpop.f32.mrb[0].mxu0
  %561 = vmatprep.mubr.f32.mxu0 0.0
  %562 = vmatmul.mubr.f32.gmra.mrb[0].mxu0 %v346
  %v563 = vpop.f32.mrb[0].mxu0
  %v564 = vadd.f32 %v243, %v563
  %v565 = vpop.f32.mrb[0].mxu0
  %566 = vmatprep.mubr.f32.mxu0 0.0
  %567 = vmatmul.mubr.f32.gmra.mrb[0].mxu0 %v349
  %v568 = vpop.f32.mrb[0].mxu0
  %v569 = vadd.f32 %v248, %v568
  %v570 = vpop.f32.mrb[0].mxu0
  %571 = vmatprep.mubr.f32.mxu0 0.0
  %572 = vmatmul.mubr.f32.gmra.mrb[0].mxu0 %v352
  %v573 = vpop.f32.mrb[0].mxu0
  %v574 = vadd.f32 %v253, %v573
  %v575 = vpop.f32.mrb[0].mxu0
  %576 = vmatprep.mubr.f32.mxu0 0.0
  %577 = vmatmul.mubr.f32.gmra.mrb[0].mxu0 %v355
  %v578 = vpop.f32.mrb[0].mxu0
  %v579 = vadd.f32 %v258, %v578
  %v580 = vpop.f32.mrb[0].mxu0
  %581 = vdwg.mxu0
  %vm582 = vcmask 834560
  %583 = vst.msk [vmem:[#allocation2] sm:$0xff] %vm582, %v424
  %584 = vst.msk [vmem:[#allocation2 + $0x8] sm:$0xff] %vm582, %v429
  %585 = vst.msk [vmem:[#allocation2 + $0x10] sm:$0xff] %vm582, %v434
  %586 = vst.msk [vmem:[#allocation2 + $0x18] sm:$0xff] %vm582, %v439
  %587 = vst.msk [vmem:[#allocation2 + $0x20] sm:$0xff] %vm582, %v444
  %588 = vst.msk [vmem:[#allocation2 + $0x28] sm:$0xff] %vm582, %v449
  %589 = vst.msk [vmem:[#allocation2 + $0x30] sm:$0xff] %vm582, %v454
  %590 = vst.msk [vmem:[#allocation2 + $0x38] sm:$0xff] %vm582, %v459
  %591 = vst.msk [vmem:[#allocation2 + $0x40] sm:$0xff] %vm582, %v464
  %592 = vst.msk [vmem:[#allocation2 + $0x48] sm:$0xff] %vm582, %v469
  %593 = vst.msk [vmem:[#allocation2 + $0x50] sm:$0xff] %vm582, %v474
  %594 = vst.msk [vmem:[#allocation2 + $0x58] sm:$0xff] %vm582, %v479
  %595 = vst.msk [vmem:[#allocation2 + $0x60] sm:$0xff] %vm582, %v484
  %596 = vst.msk [vmem:[#allocation2 + $0x68] sm:$0xff] %vm582, %v489
  %597 = vst.msk [vmem:[#allocation2 + $0x70] sm:$0xff] %vm582, %v494
  %598 = vst.msk [vmem:[#allocation2 + $0x78] sm:$0xff] %vm582, %v499
  %599 = vst.msk [vmem:[#allocation2 + $0x80] sm:$0xff] %vm582, %v504
  %600 = vst.msk [vmem:[#allocation2 + $0x88] sm:$0xff] %vm582, %v509
  %601 = vst.msk [vmem:[#allocation2 + $0x90] sm:$0xff] %vm582, %v514
  %602 = vst.msk [vmem:[#allocation2 + $0x98] sm:$0xff] %vm582, %v519
  %603 = vst.msk [vmem:[#allocation2 + $0xa0] sm:$0xff] %vm582, %v524
  %604 = vst.msk [vmem:[#allocation2 + $0xa8] sm:$0xff] %vm582, %v529
  %605 = vst.msk [vmem:[#allocation2 + $0xb0] sm:$0xff] %vm582, %v534
  %606 = vst.msk [vmem:[#allocation2 + $0xb8] sm:$0xff] %vm582, %v539
  %607 = vst.msk [vmem:[#allocation2 + $0xc0] sm:$0xff] %vm582, %v544
  %608 = vst.msk [vmem:[#allocation2 + $0xc8] sm:$0xff] %vm582, %v549
  %609 = vst.msk [vmem:[#allocation2 + $0xd0] sm:$0xff] %vm582, %v554
  %610 = vst.msk [vmem:[#allocation2 + $0xd8] sm:$0xff] %vm582, %v559
  %611 = vst.msk [vmem:[#allocation2 + $0xe0] sm:$0xff] %vm582, %v564
  %612 = vst.msk [vmem:[#allocation2 + $0xe8] sm:$0xff] %vm582, %v569
  %613 = vst.msk [vmem:[#allocation2 + $0xf0] sm:$0xff] %vm582, %v574
  %614 = vst.msk [vmem:[#allocation2 + $0xf8] sm:$0xff] %vm582, %v579
  %v615 = vld [vmem:[#allocation2] sm:$0xff]
  %616 = vst.msk [vmem:[#allocation3] sm:$0xff] %vm582, %v615
  %v617 = vld [vmem:[#allocation2 + $0x8] sm:$0xff]
  %619 = vrot.lane.b32.xlu0 %v617, 102
  %v620 = vpop.permute.xlu0 %619
  %vm622 = vcmask 1048368
  %623 = vst.msk [vmem:[#allocation3] sm:$0xff] %vm622, %v620
  %vm624 = vcmask 621568
  %625 = vst.msk [vmem:[#allocation3 + $0x8] sm:$0xff] %vm624, %v620
  %v626 = vld [vmem:[#allocation2 + $0x10] sm:$0xff]
  %628 = vrot.lane.b32.xlu0 %v626, 76
  %v629 = vpop.permute.xlu0 %628
  %vm631 = vcmask 1048160
  %632 = vst.msk [vmem:[#allocation3 + $0x8] sm:$0xff] %vm631, %v629
  %vm633 = vcmask 408576
  %634 = vst.msk [vmem:[#allocation3 + $0x10] sm:$0xff] %vm633, %v629
  %v635 = vld [vmem:[#allocation2 + $0x18] sm:$0xff]
  %637 = vrot.lane.b32.xlu0 %v635, 50
  %v638 = vpop.permute.xlu0 %637
  %vm640 = vcmask 1047952
  %641 = vst.msk [vmem:[#allocation3 + $0x10] sm:$0xff] %vm640, %v638
  %642 = vst.msk [vmem:[#allocation3 + $0x18] sm:$0xff] %vm260, %v638
  %v643 = vld [vmem:[#allocation2 + $0x20] sm:$0xff]
  %645 = vrot.lane.b32.xlu0 %v643, 24
  %v646 = vpop.permute.xlu0 %645
  %vm648 = vcmask 1031360
  %649 = vst.msk [vmem:[#allocation3 + $0x18] sm:$0xff] %vm648, %v646
  %v650 = vld [vmem:[#allocation2 + $0x28] sm:$0xff]
  %652 = vrot.lane.b32.xlu0 %v650, 126
  %v653 = vpop.permute.xlu0 %652
  %vm655 = vcmask 1048560
  %656 = vst.msk [vmem:[#allocation3 + $0x18] sm:$0xff] %vm655, %v653
  %vm657 = vcmask 818176
  %658 = vst.msk [vmem:[#allocation3 + $0x20] sm:$0xff] %vm657, %v653
  %v659 = vld [vmem:[#allocation2 + $0x30] sm:$0xff]
  %661 = vrot.lane.b32.xlu0 %v659, 100
  %v662 = vpop.permute.xlu0 %661
  %vm664 = vcmask 1048352
  %665 = vst.msk [vmem:[#allocation3 + $0x20] sm:$0xff] %vm664, %v662
  %vm666 = vcmask 605184
  %667 = vst.msk [vmem:[#allocation3 + $0x28] sm:$0xff] %vm666, %v662
  %v668 = vld [vmem:[#allocation2 + $0x38] sm:$0xff]
  %670 = vrot.lane.b32.xlu0 %v668, 74
  %v671 = vpop.permute.xlu0 %670
  %vm673 = vcmask 1048144
  %674 = vst.msk [vmem:[#allocation3 + $0x28] sm:$0xff] %vm673, %v671
  %vm675 = vcmask 392192
  %676 = vst.msk [vmem:[#allocation3 + $0x30] sm:$0xff] %vm675, %v671
  %v677 = vld [vmem:[#allocation2 + $0x40] sm:$0xff]
  %679 = vrot.lane.b32.xlu0 %v677, 48
  %v680 = vpop.permute.xlu0 %679
  %vm682 = vcmask 1047936
  %683 = vst.msk [vmem:[#allocation3 + $0x30] sm:$0xff] %vm682, %v680
  %vm684 = vcmask 179200
  %685 = vst.msk [vmem:[#allocation3 + $0x38] sm:$0xff] %vm684, %v680
  %v686 = vld [vmem:[#allocation2 + $0x48] sm:$0xff]
  %688 = vrot.lane.b32.xlu0 %v686, 22
  %v689 = vpop.permute.xlu0 %688
  %vm691 = vcmask 1014960
  %692 = vst.msk [vmem:[#allocation3 + $0x38] sm:$0xff] %vm691, %v689
  %v693 = vld [vmem:[#allocation2 + $0x50] sm:$0xff]
  %695 = vrot.lane.b32.xlu0 %v693, 124
  %v696 = vpop.permute.xlu0 %695
  %vm698 = vcmask 1048544
  %699 = vst.msk [vmem:[#allocation3 + $0x38] sm:$0xff] %vm698, %v696
  %vm700 = vcmask 801792
  %701 = vst.msk [vmem:[#allocation3 + $0x40] sm:$0xff] %vm700, %v696
  %v702 = vld [vmem:[#allocation2 + $0x58] sm:$0xff]
  %704 = vrot.lane.b32.xlu0 %v702, 98
  %v705 = vpop.permute.xlu0 %704
  %vm707 = vcmask 1048336
  %708 = vst.msk [vmem:[#allocation3 + $0x40] sm:$0xff] %vm707, %v705
  %vm709 = vcmask 588800
  %710 = vst.msk [vmem:[#allocation3 + $0x48] sm:$0xff] %vm709, %v705
  %v711 = vld [vmem:[#allocation2 + $0x60] sm:$0xff]
  %713 = vrot.lane.b32.xlu0 %v711, 72
  %v714 = vpop.permute.xlu0 %713
  %vm716 = vcmask 1048128
  %717 = vst.msk [vmem:[#allocation3 + $0x48] sm:$0xff] %vm716, %v714
  %vm718 = vcmask 375808
  %719 = vst.msk [vmem:[#allocation3 + $0x50] sm:$0xff] %vm718, %v714
  %v720 = vld [vmem:[#allocation2 + $0x68] sm:$0xff]
  %722 = vrot.lane.b32.xlu0 %v720, 46
  %v723 = vpop.permute.xlu0 %722
  %vm725 = vcmask 1047920
  %726 = vst.msk [vmem:[#allocation3 + $0x50] sm:$0xff] %vm725, %v723
  %vm727 = vcmask 162816
  %728 = vst.msk [vmem:[#allocation3 + $0x58] sm:$0xff] %vm727, %v723
  %v729 = vld [vmem:[#allocation2 + $0x70] sm:$0xff]
  %731 = vrot.lane.b32.xlu0 %v729, 20
  %v732 = vpop.permute.xlu0 %731
  %vm734 = vcmask 998560
  %735 = vst.msk [vmem:[#allocation3 + $0x58] sm:$0xff] %vm734, %v732
  %v736 = vld [vmem:[#allocation2 + $0x78] sm:$0xff]
  %738 = vrot.lane.b32.xlu0 %v736, 122
  %v739 = vpop.permute.xlu0 %738
  %vm741 = vcmask 1048528
  %742 = vst.msk [vmem:[#allocation3 + $0x58] sm:$0xff] %vm741, %v739
  %vm743 = vcmask 785408
  %744 = vst.msk [vmem:[#allocation3 + $0x60] sm:$0xff] %vm743, %v739
  %v745 = vld [vmem:[#allocation2 + $0x80] sm:$0xff]
  %747 = vrot.lane.b32.xlu0 %v745, 96
  %v748 = vpop.permute.xlu0 %747
  %vm750 = vcmask 1048320
  %751 = vst.msk [vmem:[#allocation3 + $0x60] sm:$0xff] %vm750, %v748
  %vm752 = vcmask 572416
  %753 = vst.msk [vmem:[#allocation3 + $0x68] sm:$0xff] %vm752, %v748
  %v754 = vld [vmem:[#allocation2 + $0x88] sm:$0xff]
  %756 = vrot.lane.b32.xlu0 %v754, 70
  %v757 = vpop.permute.xlu0 %756
  %vm759 = vcmask 1048112
  %760 = vst.msk [vmem:[#allocation3 + $0x68] sm:$0xff] %vm759, %v757
  %vm761 = vcmask 359424
  %762 = vst.msk [vmem:[#allocation3 + $0x70] sm:$0xff] %vm761, %v757
  %v763 = vld [vmem:[#allocation2 + $0x90] sm:$0xff]
  %765 = vrot.lane.b32.xlu0 %v763, 44
  %v766 = vpop.permute.xlu0 %765
  %vm768 = vcmask 1047904
  %769 = vst.msk [vmem:[#allocation3 + $0x70] sm:$0xff] %vm768, %v766
  %vm770 = vcmask 146432
  %771 = vst.msk [vmem:[#allocation3 + $0x78] sm:$0xff] %vm770, %v766
  %v772 = vld [vmem:[#allocation2 + $0x98] sm:$0xff]
  %774 = vrot.lane.b32.xlu0 %v772, 18
  %v775 = vpop.permute.xlu0 %774
  %vm777 = vcmask 982160
  %778 = vst.msk [vmem:[#allocation3 + $0x78] sm:$0xff] %vm777, %v775
  %v779 = vld [vmem:[#allocation2 + $0xa0] sm:$0xff]
  %781 = vrot.lane.b32.xlu0 %v779, 120
  %v782 = vpop.permute.xlu0 %781
  %vm784 = vcmask 1048512
  %785 = vst.msk [vmem:[#allocation3 + $0x78] sm:$0xff] %vm784, %v782
  %vm786 = vcmask 769024
  %787 = vst.msk [vmem:[#allocation3 + $0x80] sm:$0xff] %vm786, %v782
  %v788 = vld [vmem:[#allocation2 + $0xa8] sm:$0xff]
  %790 = vrot.lane.b32.xlu0 %v788, 94
  %v791 = vpop.permute.xlu0 %790
  %vm793 = vcmask 1048304
  %794 = vst.msk [vmem:[#allocation3 + $0x80] sm:$0xff] %vm793, %v791
  %vm795 = vcmask 556032
  %796 = vst.msk [vmem:[#allocation3 + $0x88] sm:$0xff] %vm795, %v791
  %v797 = vld [vmem:[#allocation2 + $0xb0] sm:$0xff]
  %799 = vrot.lane.b32.xlu0 %v797, 68
  %v800 = vpop.permute.xlu0 %799
  %vm802 = vcmask 1048096
  %803 = vst.msk [vmem:[#allocation3 + $0x88] sm:$0xff] %vm802, %v800
  %vm804 = vcmask 343040
  %805 = vst.msk [vmem:[#allocation3 + $0x90] sm:$0xff] %vm804, %v800
  %v806 = vld [vmem:[#allocation2 + $0xb8] sm:$0xff]
  %808 = vrot.lane.b32.xlu0 %v806, 42
  %v809 = vpop.permute.xlu0 %808
  %vm811 = vcmask 1047888
  %812 = vst.msk [vmem:[#allocation3 + $0x90] sm:$0xff] %vm811, %v809
  %vm813 = vcmask 130048
  %814 = vst.msk [vmem:[#allocation3 + $0x98] sm:$0xff] %vm813, %v809
  %v815 = vld [vmem:[#allocation2 + $0xc0] sm:$0xff]
  %817 = vrot.lane.b32.xlu0 %v815, 16
  %v818 = vpop.permute.xlu0 %817
  %vm820 = vcmask 965760
  %821 = vst.msk [vmem:[#allocation3 + $0x98] sm:$0xff] %vm820, %v818
  %v822 = vld [vmem:[#allocation2 + $0xc8] sm:$0xff]
  %824 = vrot.lane.b32.xlu0 %v822, 118
  %v825 = vpop.permute.xlu0 %824
  %vm827 = vcmask 1048496
  %828 = vst.msk [vmem:[#allocation3 + $0x98] sm:$0xff] %vm827, %v825
  %vm829 = vcmask 752640
  %830 = vst.msk [vmem:[#allocation3 + $0xa0] sm:$0xff] %vm829, %v825
  %v831 = vld [vmem:[#allocation2 + $0xd0] sm:$0xff]
  %833 = vrot.lane.b32.xlu0 %v831, 92
  %v834 = vpop.permute.xlu0 %833
  %vm836 = vcmask 1048288
  %837 = vst.msk [vmem:[#allocation3 + $0xa0] sm:$0xff] %vm836, %v834
  %vm838 = vcmask 539648
  %839 = vst.msk [vmem:[#allocation3 + $0xa8] sm:$0xff] %vm838, %v834
  %v840 = vld [vmem:[#allocation2 + $0xd8] sm:$0xff]
  %842 = vrot.lane.b32.xlu0 %v840, 66
  %v843 = vpop.permute.xlu0 %842
  %vm845 = vcmask 1048080
  %846 = vst.msk [vmem:[#allocation3 + $0xa8] sm:$0xff] %vm845, %v843
  %vm847 = vcmask 326656
  %848 = vst.msk [vmem:[#allocation3 + $0xb0] sm:$0xff] %vm847, %v843
  %v849 = vld [vmem:[#allocation2 + $0xe0] sm:$0xff]
  %851 = vrot.lane.b32.xlu0 %v849, 40
  %v852 = vpop.permute.xlu0 %851
  %vm854 = vcmask 1047872
  %855 = vst.msk [vmem:[#allocation3 + $0xb0] sm:$0xff] %vm854, %v852
  %vm856 = vcmask 113664
  %857 = vst.msk [vmem:[#allocation3 + $0xb8] sm:$0xff] %vm856, %v852
  %v858 = vld [vmem:[#allocation2 + $0xe8] sm:$0xff]
  %860 = vrot.lane.b32.xlu0 %v858, 14
  %v861 = vpop.permute.xlu0 %860
  %vm863 = vcmask 949360
  %864 = vst.msk [vmem:[#allocation3 + $0xb8] sm:$0xff] %vm863, %v861
  %v865 = vld [vmem:[#allocation2 + $0xf0] sm:$0xff]
  %867 = vrot.lane.b32.xlu0 %v865, 116
  %v868 = vpop.permute.xlu0 %867
  %vm870 = vcmask 1048480
  %871 = vst.msk [vmem:[#allocation3 + $0xb8] sm:$0xff] %vm870, %v868
  %vm872 = vcmask 736256
  %873 = vst.msk [vmem:[#allocation3 + $0xc0] sm:$0xff] %vm872, %v868
  %v874 = vld [vmem:[#allocation2 + $0xf8] sm:$0xff]
  %876 = vrot.lane.b32.xlu0 %v874, 90
  %v877 = vpop.permute.xlu0 %876
  %vm879 = vcmask 1048272
  %880 = vst.msk [vmem:[#allocation3 + $0xc0] sm:$0xff] %vm879, %v877
  %vm881 = vcmask 523264
  %882 = vst.msk [vmem:[#allocation3 + $0xc8] sm:$0xff] %vm881, %v877
  %v883 = vld [vmem:[#allocation3] sm:$0xff]
  %v884 = vld [vmem:[#allocation3 + $0x8] sm:$0xff]
  %v885 = vld [vmem:[#allocation3 + $0x10] sm:$0xff]
  %v886 = vld [vmem:[#allocation3 + $0x18] sm:$0xff]
  %v887 = vld [vmem:[#allocation3 + $0x20] sm:$0xff]
  %v888 = vld [vmem:[#allocation3 + $0x28] sm:$0xff]
  %v889 = vld [vmem:[#allocation3 + $0x30] sm:$0xff]
  %v890 = vld [vmem:[#allocation3 + $0x38] sm:$0xff]
  %v891 = vld [vmem:[#allocation3 + $0x40] sm:$0xff]
  %v892 = vld [vmem:[#allocation3 + $0x48] sm:$0xff]
  %v893 = vld [vmem:[#allocation3 + $0x50] sm:$0xff]
  %v894 = vld [vmem:[#allocation3 + $0x58] sm:$0xff]
  %v895 = vld [vmem:[#allocation3 + $0x60] sm:$0xff]
  %v896 = vld [vmem:[#allocation3 + $0x68] sm:$0xff]
  %v897 = vld [vmem:[#allocation3 + $0x70] sm:$0xff]
  %v898 = vld [vmem:[#allocation3 + $0x78] sm:$0xff]
  %v899 = vld [vmem:[#allocation3 + $0x80] sm:$0xff]
  %v900 = vld [vmem:[#allocation3 + $0x88] sm:$0xff]
  %v901 = vld [vmem:[#allocation3 + $0x90] sm:$0xff]
  %v902 = vld [vmem:[#allocation3 + $0x98] sm:$0xff]
  %v903 = vld [vmem:[#allocation3 + $0xa0] sm:$0xff]
  %v904 = vld [vmem:[#allocation3 + $0xa8] sm:$0xff]
  %v905 = vld [vmem:[#allocation3 + $0xb0] sm:$0xff]
  %v906 = vld [vmem:[#allocation3 + $0xb8] sm:$0xff]
  %v907 = vld [vmem:[#allocation3 + $0xc0] sm:$0xff]
  %v908 = vld [vmem:[#allocation3 + $0xc8] sm:$0xff]
  %v909 = vpack.c.bf16 %v883, %v883
  %v910 = vpack.c.bf16 %v884, %v884
  %v911 = vpack.c.bf16 %v885, %v885
  %v912 = vpack.c.bf16 %v886, %v886
  %v913 = vpack.c.bf16 %v887, %v887
  %v914 = vpack.c.bf16 %v888, %v888
  %v915 = vpack.c.bf16 %v889, %v889
  %v916 = vpack.c.bf16 %v890, %v890
  %v917 = vpack.c.bf16 %v891, %v891
  %v918 = vpack.c.bf16 %v892, %v892
  %v919 = vpack.c.bf16 %v893, %v893
  %v920 = vpack.c.bf16 %v894, %v894
  %v921 = vpack.c.bf16 %v895, %v895
  %v922 = vpack.c.bf16 %v896, %v896
  %v923 = vpack.c.bf16 %v897, %v897
  %v924 = vpack.c.bf16 %v898, %v898
  %v925 = vpack.c.bf16 %v899, %v899
  %v926 = vpack.c.bf16 %v900, %v900
  %v927 = vpack.c.bf16 %v901, %v901
  %v928 = vpack.c.bf16 %v902, %v902
  %v929 = vpack.c.bf16 %v903, %v903
  %v930 = vpack.c.bf16 %v904, %v904
  %v931 = vpack.c.bf16 %v905, %v905
  %v932 = vpack.c.bf16 %v906, %v906
  %v933 = vpack.c.bf16 %v907, %v907
  %v934 = vpack.c.bf16 %v908, %v908
  %v935 = vld [vmem:[%s3] sm:$0xff]
  %v936 = vld [vmem:[%s3 + $0x8] sm:$0xff]
  %v937 = vld [vmem:[%s3 + $0x10] sm:$0xff]
  %v938 = vld [vmem:[%s3 + $0x18] sm:$0xff]
  %v939 = vld [vmem:[%s3 + $0x20] sm:$0xff]
  %v940 = vld [vmem:[%s3 + $0x28] sm:$0xff]
  %v941 = vld [vmem:[%s3 + $0x30] sm:$0xff]
  %v942 = vld [vmem:[%s3 + $0x38] sm:$0xff]
  %v943 = vld [vmem:[%s3 + $0x40] sm:$0xff]
  %v944 = vld [vmem:[%s3 + $0x48] sm:$0xff]
  %v945 = vld [vmem:[%s3 + $0x50] sm:$0xff]
  %v946 = vld [vmem:[%s3 + $0x58] sm:$0xff]
  %v947 = vld [vmem:[%s3 + $0x60] sm:$0xff]
  %v948 = vld [vmem:[%s3 + $0x68] sm:$0xff]
  %v949 = vld [vmem:[%s3 + $0x70] sm:$0xff]
  %v950 = vld [vmem:[%s3 + $0x78] sm:$0xff]
  %v951 = vld [vmem:[%s3 + $0x80] sm:$0xff]
  %v952 = vld [vmem:[%s3 + $0x88] sm:$0xff]
  %v953 = vld [vmem:[%s3 + $0x90] sm:$0xff]
  %v954 = vld [vmem:[%s3 + $0x98] sm:$0xff]
  %v955 = vld [vmem:[%s3 + $0xa0] sm:$0xff]
  %v956 = vld [vmem:[%s3 + $0xa8] sm:$0xff]
  %v957 = vld [vmem:[%s3 + $0xb0] sm:$0xff]
  %v958 = vld [vmem:[%s3 + $0xb8] sm:$0xff]
  %v959 = vld [vmem:[%s3 + $0xc0] sm:$0xff]
  %v960 = vld [vmem:[%s3 + $0xc8] sm:$0xff]
  %v961 = vld [vmem:[%s3 + $0xd0] sm:$0xff]
  %v962 = vld [vmem:[%s3 + $0xd8] sm:$0xff]
  %v963 = vld [vmem:[%s3 + $0xe0] sm:$0xff]
  %v964 = vld [vmem:[%s3 + $0xe8] sm:$0xff]
  %v965 = vld [vmem:[%s3 + $0xf0] sm:$0xff]
  %v966 = vld [vmem:[%s3 + $0xf8] sm:$0xff]
  %v967 = vld [vmem:[%s3 + $0x100] sm:$0xff]
  %v968 = vld [vmem:[%s3 + $0x108] sm:$0xff]
  %v969 = vld [vmem:[%s3 + $0x110] sm:$0xff]
  %v970 = vld [vmem:[%s3 + $0x118] sm:$0xff]
  %v971 = vld [vmem:[%s3 + $0x120] sm:$0xff]
  %v972 = vld [vmem:[%s3 + $0x128] sm:$0xff]
  %v973 = vld [vmem:[%s3 + $0x130] sm:$0xff]
  %v974 = vld [vmem:[%s3 + $0x138] sm:$0xff]
  %v975 = vld [vmem:[%s3 + $0x140] sm:$0xff]
  %v976 = vld [vmem:[%s3 + $0x148] sm:$0xff]
  %v977 = vld [vmem:[%s3 + $0x150] sm:$0xff]
  %v978 = vld [vmem:[%s3 + $0x158] sm:$0xff]
  %v979 = vld [vmem:[%s3 + $0x160] sm:$0xff]
  %v980 = vld [vmem:[%s3 + $0x168] sm:$0xff]
  %v981 = vld [vmem:[%s3 + $0x170] sm:$0xff]
  %v982 = vld [vmem:[%s3 + $0x178] sm:$0xff]
  %v983 = vld [vmem:[%s3 + $0x180] sm:$0xff]
  %v984 = vld [vmem:[%s3 + $0x188] sm:$0xff]
  %v985 = vld [vmem:[%s3 + $0x190] sm:$0xff]
  %v986 = vld [vmem:[%s3 + $0x198] sm:$0xff]
  %v987 = vld [vmem:[%s3 + $0x1a0] sm:$0xff]
  %v988 = vld [vmem:[%s3 + $0x1a8] sm:$0xff]
  %v989 = vld [vmem:[%s3 + $0x1b0] sm:$0xff]
  %v990 = vld [vmem:[%s3 + $0x1b8] sm:$0xff]
  %v991 = vld [vmem:[%s3 + $0x1c0] sm:$0xff]
  %v992 = vld [vmem:[%s3 + $0x1c8] sm:$0xff]
  %v993 = vld [vmem:[%s3 + $0x1d0] sm:$0xff]
  %v994 = vld [vmem:[%s3 + $0x1d8] sm:$0xff]
  %v995 = vld [vmem:[%s3 + $0x1e0] sm:$0xff]
  %v996 = vld [vmem:[%s3 + $0x1e8] sm:$0xff]
  %v997 = vld [vmem:[%s3 + $0x1f0] sm:$0xff]
  %v998 = vld [vmem:[%s3 + $0x1f8] sm:$0xff]
  %v999 = vld [vmem:[%s3 + $0x200] sm:$0xff]
  %v1000 = vld [vmem:[%s3 + $0x208] sm:$0xff]
  %v1001 = vld [vmem:[%s3 + $0x210] sm:$0xff]
  %v1002 = vld [vmem:[%s3 + $0x218] sm:$0xff]
  %v1003 = vld [vmem:[%s3 + $0x220] sm:$0xff]
  %v1004 = vld [vmem:[%s3 + $0x228] sm:$0xff]
  %v1005 = vld [vmem:[%s3 + $0x230] sm:$0xff]
  %v1006 = vld [vmem:[%s3 + $0x238] sm:$0xff]
  %v1007 = vld [vmem:[%s3 + $0x240] sm:$0xff]
  %v1008 = vld [vmem:[%s3 + $0x248] sm:$0xff]
  %v1009 = vld [vmem:[%s3 + $0x250] sm:$0xff]
  %v1010 = vld [vmem:[%s3 + $0x258] sm:$0xff]
  %v1011 = vld [vmem:[%s3 + $0x260] sm:$0xff]
  %v1012 = vld [vmem:[%s3 + $0x268] sm:$0xff]
  %v1013 = vld [vmem:[%s3 + $0x270] sm:$0xff]
  %v1014 = vld [vmem:[%s3 + $0x278] sm:$0xff]
  %v1015 = vld [vmem:[%s3 + $0x280] sm:$0xff]
  %v1016 = vld [vmem:[%s3 + $0x288] sm:$0xff]
  %v1017 = vld [vmem:[%s3 + $0x290] sm:$0xff]
  %v1018 = vld [vmem:[%s3 + $0x298] sm:$0xff]
  %v1019 = vld [vmem:[%s3 + $0x2a0] sm:$0xff]
  %v1020 = vld [vmem:[%s3 + $0x2a8] sm:$0xff]
  %v1021 = vld [vmem:[%s3 + $0x2b0] sm:$0xff]
  %v1022 = vld [vmem:[%s3 + $0x2b8] sm:$0xff]
  %v1023 = vld [vmem:[%s3 + $0x2c0] sm:$0xff]
  %v1024 = vld [vmem:[%s3 + $0x2c8] sm:$0xff]
  %v1025 = vld [vmem:[%s3 + $0x2d0] sm:$0xff]
  %v1026 = vld [vmem:[%s3 + $0x2d8] sm:$0xff]
  %v1027 = vld [vmem:[%s3 + $0x2e0] sm:$0xff]
  %v1028 = vld [vmem:[%s3 + $0x2e8] sm:$0xff]
  %v1029 = vld [vmem:[%s3 + $0x2f0] sm:$0xff]
  %v1030 = vld [vmem:[%s3 + $0x2f8] sm:$0xff]
  %v1031 = vld [vmem:[%s3 + $0x300] sm:$0xff]
  %v1032 = vld [vmem:[%s3 + $0x308] sm:$0xff]
  %v1033 = vld [vmem:[%s3 + $0x310] sm:$0xff]
  %v1034 = vld [vmem:[%s3 + $0x318] sm:$0xff]
  %v1035 = vld [vmem:[%s3 + $0x320] sm:$0xff]
  %v1036 = vld [vmem:[%s3 + $0x328] sm:$0xff]
  %v1037 = vld [vmem:[%s3 + $0x330] sm:$0xff]
  %v1038 = vld [vmem:[%s3 + $0x338] sm:$0xff]
  %v1039 = vld [vmem:[%s3 + $0x340] sm:$0xff]
  %v1040 = vld [vmem:[%s3 + $0x348] sm:$0xff]
  %v1041 = vld [vmem:[%s3 + $0x350] sm:$0xff]
  %v1042 = vld [vmem:[%s3 + $0x358] sm:$0xff]
  %v1043 = vld [vmem:[%s3 + $0x360] sm:$0xff]
  %v1044 = vld [vmem:[%s3 + $0x368] sm:$0xff]
  %v1045 = vld [vmem:[%s3 + $0x370] sm:$0xff]
  %v1046 = vld [vmem:[%s3 + $0x378] sm:$0xff]
  %v1047 = vld [vmem:[%s3 + $0x380] sm:$0xff]
  %v1048 = vld [vmem:[%s3 + $0x388] sm:$0xff]
  %v1049 = vld [vmem:[%s3 + $0x390] sm:$0xff]
  %v1050 = vld [vmem:[%s3 + $0x398] sm:$0xff]
  %v1051 = vld [vmem:[%s3 + $0x3a0] sm:$0xff]
  %v1052 = vld [vmem:[%s3 + $0x3a8] sm:$0xff]
  %v1053 = vld [vmem:[%s3 + $0x3b0] sm:$0xff]
  %v1054 = vld [vmem:[%s3 + $0x3b8] sm:$0xff]
  %v1055 = vld [vmem:[%s3 + $0x3c0] sm:$0xff]
  %v1056 = vld [vmem:[%s3 + $0x3c8] sm:$0xff]
  %v1057 = vld [vmem:[%s3 + $0x3d0] sm:$0xff]
  %v1058 = vld [vmem:[%s3 + $0x3d8] sm:$0xff]
  %v1059 = vld [vmem:[%s3 + $0x3e0] sm:$0xff]
  %v1060 = vld [vmem:[%s3 + $0x3e8] sm:$0xff]
  %v1061 = vld [vmem:[%s3 + $0x3f0] sm:$0xff]
  %v1062 = vld [vmem:[%s3 + $0x3f8] sm:$0xff]
  %v1063 = vld [vmem:[%s3 + $0x400] sm:$0xff]
  %v1064 = vld [vmem:[%s3 + $0x408] sm:$0xff]
  %v1065 = vld [vmem:[%s3 + $0x410] sm:$0xff]
  %v1066 = vld [vmem:[%s3 + $0x418] sm:$0xff]
  %v1067 = vld [vmem:[%s3 + $0x420] sm:$0xff]
  %v1068 = vld [vmem:[%s3 + $0x428] sm:$0xff]
  %v1069 = vld [vmem:[%s3 + $0x430] sm:$0xff]
  %v1070 = vld [vmem:[%s3 + $0x438] sm:$0xff]
  %v1071 = vld [vmem:[%s3 + $0x440] sm:$0xff]
  %v1072 = vld [vmem:[%s3 + $0x448] sm:$0xff]
  %v1073 = vld [vmem:[%s3 + $0x450] sm:$0xff]
  %v1074 = vld [vmem:[%s3 + $0x458] sm:$0xff]
  %v1075 = vld [vmem:[%s3 + $0x460] sm:$0xff]
  %v1076 = vld [vmem:[%s3 + $0x468] sm:$0xff]
  %v1077 = vld [vmem:[%s3 + $0x470] sm:$0xff]
  %v1078 = vld [vmem:[%s3 + $0x478] sm:$0xff]
  %v1079 = vld [vmem:[%s3 + $0x480] sm:$0xff]
  %v1080 = vld [vmem:[%s3 + $0x488] sm:$0xff]
  %v1081 = vld [vmem:[%s3 + $0x490] sm:$0xff]
  %v1082 = vld [vmem:[%s3 + $0x498] sm:$0xff]
  %v1083 = vld [vmem:[%s3 + $0x4a0] sm:$0xff]
  %v1084 = vld [vmem:[%s3 + $0x4a8] sm:$0xff]
  %v1085 = vld [vmem:[%s3 + $0x4b0] sm:$0xff]
  %v1086 = vld [vmem:[%s3 + $0x4b8] sm:$0xff]
  %v1087 = vld [vmem:[%s3 + $0x4c0] sm:$0xff]
  %v1088 = vld [vmem:[%s3 + $0x4c8] sm:$0xff]
  %v1089 = vld [vmem:[%s3 + $0x4d0] sm:$0xff]
  %v1090 = vld [vmem:[%s3 + $0x4d8] sm:$0xff]
  %v1091 = vld [vmem:[%s3 + $0x4e0] sm:$0xff]
  %v1092 = vld [vmem:[%s3 + $0x4e8] sm:$0xff]
  %v1093 = vld [vmem:[%s3 + $0x4f0] sm:$0xff]
  %v1094 = vld [vmem:[%s3 + $0x4f8] sm:$0xff]
  %v1095 = vld [vmem:[%s3 + $0x500] sm:$0xff]
  %v1096 = vld [vmem:[%s3 + $0x508] sm:$0xff]
  %v1097 = vld [vmem:[%s3 + $0x510] sm:$0xff]
  %v1098 = vld [vmem:[%s3 + $0x518] sm:$0xff]
  %v1099 = vld [vmem:[%s3 + $0x520] sm:$0xff]
  %v1100 = vld [vmem:[%s3 + $0x528] sm:$0xff]
  %v1101 = vld [vmem:[%s3 + $0x530] sm:$0xff]
  %v1102 = vld [vmem:[%s3 + $0x538] sm:$0xff]
  %v1103 = vld [vmem:[%s3 + $0x540] sm:$0xff]
  %v1104 = vld [vmem:[%s3 + $0x548] sm:$0xff]
  %v1105 = vld [vmem:[%s3 + $0x550] sm:$0xff]
  %v1106 = vld [vmem:[%s3 + $0x558] sm:$0xff]
  %v1107 = vld [vmem:[%s3 + $0x560] sm:$0xff]
  %v1108 = vld [vmem:[%s3 + $0x568] sm:$0xff]
  %v1109 = vld [vmem:[%s3 + $0x570] sm:$0xff]
  %v1110 = vld [vmem:[%s3 + $0x578] sm:$0xff]
  %v1111 = vld [vmem:[%s3 + $0x580] sm:$0xff]
  %v1112 = vld [vmem:[%s3 + $0x588] sm:$0xff]
  %v1113 = vld [vmem:[%s3 + $0x590] sm:$0xff]
  %v1114 = vld [vmem:[%s3 + $0x598] sm:$0xff]
  %v1115 = vld [vmem:[%s3 + $0x5a0] sm:$0xff]
  %v1116 = vld [vmem:[%s3 + $0x5a8] sm:$0xff]
  %v1117 = vld [vmem:[%s3 + $0x5b0] sm:$0xff]
  %v1118 = vld [vmem:[%s3 + $0x5b8] sm:$0xff]
  %v1119 = vld [vmem:[%s3 + $0x5c0] sm:$0xff]
  %v1120 = vld [vmem:[%s3 + $0x5c8] sm:$0xff]
  %v1121 = vld [vmem:[%s3 + $0x5d0] sm:$0xff]
  %v1122 = vld [vmem:[%s3 + $0x5d8] sm:$0xff]
  %v1123 = vld [vmem:[%s3 + $0x5e0] sm:$0xff]
  %v1124 = vld [vmem:[%s3 + $0x5e8] sm:$0xff]
  %v1125 = vld [vmem:[%s3 + $0x5f0] sm:$0xff]
  %v1126 = vld [vmem:[%s3 + $0x5f8] sm:$0xff]
  %v1127 = vld [vmem:[%s3 + $0x600] sm:$0xff]
  %v1128 = vld [vmem:[%s3 + $0x608] sm:$0xff]
  %v1129 = vld [vmem:[%s3 + $0x610] sm:$0xff]
  %v1130 = vld [vmem:[%s3 + $0x618] sm:$0xff]
  %v1131 = vld [vmem:[%s3 + $0x620] sm:$0xff]
  %v1132 = vld [vmem:[%s3 + $0x628] sm:$0xff]
  %v1133 = vld [vmem:[%s3 + $0x630] sm:$0xff]
  %v1134 = vld [vmem:[%s3 + $0x638] sm:$0xff]
  %v1135 = vld [vmem:[%s3 + $0x640] sm:$0xff]
  %v1136 = vld [vmem:[%s3 + $0x648] sm:$0xff]
  %v1137 = vld [vmem:[%s3 + $0x650] sm:$0xff]
  %v1138 = vld [vmem:[%s3 + $0x658] sm:$0xff]
  %v1139 = vld [vmem:[%s3 + $0x660] sm:$0xff]
  %v1140 = vld [vmem:[%s3 + $0x668] sm:$0xff]
  %v1141 = vld [vmem:[%s3 + $0x670] sm:$0xff]
  %v1142 = vld [vmem:[%s3 + $0x678] sm:$0xff]
  %v1143 = vld [vmem:[%s3 + $0x680] sm:$0xff]
  %v1144 = vld [vmem:[%s3 + $0x688] sm:$0xff]
  %v1145 = vld [vmem:[%s3 + $0x690] sm:$0xff]
  %v1146 = vld [vmem:[%s3 + $0x698] sm:$0xff]
  %v1147 = vld [vmem:[%s3 + $0x6a0] sm:$0xff]
  %v1148 = vld [vmem:[%s3 + $0x6a8] sm:$0xff]
  %v1149 = vld [vmem:[%s3 + $0x6b0] sm:$0xff]
  %v1150 = vld [vmem:[%s3 + $0x6b8] sm:$0xff]
  %v1151 = vld [vmem:[%s3 + $0x6c0] sm:$0xff]
  %v1152 = vld [vmem:[%s3 + $0x6c8] sm:$0xff]
  %v1153 = vld [vmem:[%s3 + $0x6d0] sm:$0xff]
  %v1154 = vld [vmem:[%s3 + $0x6d8] sm:$0xff]
  %v1155 = vld [vmem:[%s3 + $0x6e0] sm:$0xff]
  %v1156 = vld [vmem:[%s3 + $0x6e8] sm:$0xff]
  %v1157 = vld [vmem:[%s3 + $0x6f0] sm:$0xff]
  %v1158 = vld [vmem:[%s3 + $0x6f8] sm:$0xff]
  %v1159 = vld [vmem:[%s3 + $0x700] sm:$0xff]
  %v1160 = vld [vmem:[%s3 + $0x708] sm:$0xff]
  %v1161 = vld [vmem:[%s3 + $0x710] sm:$0xff]
  %v1162 = vld [vmem:[%s3 + $0x718] sm:$0xff]
  %v1163 = vld [vmem:[%s3 + $0x720] sm:$0xff]
  %v1164 = vld [vmem:[%s3 + $0x728] sm:$0xff]
  %v1165 = vld [vmem:[%s3 + $0x730] sm:$0xff]
  %v1166 = vld [vmem:[%s3 + $0x738] sm:$0xff]
  %v1167 = vld [vmem:[%s3 + $0x740] sm:$0xff]
  %v1168 = vld [vmem:[%s3 + $0x748] sm:$0xff]
  %v1169 = vld [vmem:[%s3 + $0x750] sm:$0xff]
  %v1170 = vld [vmem:[%s3 + $0x758] sm:$0xff]
  %v1171 = vld [vmem:[%s3 + $0x760] sm:$0xff]
  %v1172 = vld [vmem:[%s3 + $0x768] sm:$0xff]
  %v1173 = vld [vmem:[%s3 + $0x770] sm:$0xff]
  %v1174 = vld [vmem:[%s3 + $0x778] sm:$0xff]
  %v1175 = vld [vmem:[%s3 + $0x780] sm:$0xff]
  %v1176 = vld [vmem:[%s3 + $0x788] sm:$0xff]
  %v1177 = vld [vmem:[%s3 + $0x790] sm:$0xff]
  %v1178 = vld [vmem:[%s3 + $0x798] sm:$0xff]
  %v1179 = vld [vmem:[%s3 + $0x7a0] sm:$0xff]
  %v1180 = vld [vmem:[%s3 + $0x7a8] sm:$0xff]
  %v1181 = vld [vmem:[%s3 + $0x7b0] sm:$0xff]
  %v1182 = vld [vmem:[%s3 + $0x7b8] sm:$0xff]
  %v1183 = vld [vmem:[%s3 + $0x7c0] sm:$0xff]
  %v1184 = vld [vmem:[%s3 + $0x7c8] sm:$0xff]
  %v1185 = vld [vmem:[%s3 + $0x7d0] sm:$0xff]
  %v1186 = vld [vmem:[%s3 + $0x7d8] sm:$0xff]
  %v1187 = vld [vmem:[%s3 + $0x7e0] sm:$0xff]
  %v1188 = vld [vmem:[%s3 + $0x7e8] sm:$0xff]
  %v1189 = vld [vmem:[%s3 + $0x7f0] sm:$0xff]
  %v1190 = vld [vmem:[%s3 + $0x7f8] sm:$0xff]
  %v1191 = vld [vmem:[%s3 + $0x800] sm:$0xff]
  %v1192 = vld [vmem:[%s3 + $0x808] sm:$0xff]
  %v1193 = vld [vmem:[%s3 + $0x810] sm:$0xff]
  %v1194 = vld [vmem:[%s3 + $0x818] sm:$0xff]
  %v1195 = vld [vmem:[%s3 + $0x820] sm:$0xff]
  %v1196 = vld [vmem:[%s3 + $0x828] sm:$0xff]
  %v1197 = vld [vmem:[%s3 + $0x830] sm:$0xff]
  %v1198 = vld [vmem:[%s3 + $0x838] sm:$0xff]
  %v1199 = vld [vmem:[%s3 + $0x840] sm:$0xff]
  %v1200 = vld [vmem:[%s3 + $0x848] sm:$0xff]
  %v1201 = vld [vmem:[%s3 + $0x850] sm:$0xff]
  %v1202 = vld [vmem:[%s3 + $0x858] sm:$0xff]
  %v1203 = vld [vmem:[%s3 + $0x860] sm:$0xff]
  %v1204 = vld [vmem:[%s3 + $0x868] sm:$0xff]
  %v1205 = vld [vmem:[%s3 + $0x870] sm:$0xff]
  %v1206 = vld [vmem:[%s3 + $0x878] sm:$0xff]
  %v1207 = vld [vmem:[%s3 + $0x880] sm:$0xff]
  %v1208 = vld [vmem:[%s3 + $0x888] sm:$0xff]
  %v1209 = vld [vmem:[%s3 + $0x890] sm:$0xff]
  %v1210 = vld [vmem:[%s3 + $0x898] sm:$0xff]
  %v1211 = vld [vmem:[%s3 + $0x8a0] sm:$0xff]
  %v1212 = vld [vmem:[%s3 + $0x8a8] sm:$0xff]
  %v1213 = vld [vmem:[%s3 + $0x8b0] sm:$0xff]
  %v1214 = vld [vmem:[%s3 + $0x8b8] sm:$0xff]
  %v1215 = vld [vmem:[%s3 + $0x8c0] sm:$0xff]
  %v1216 = vld [vmem:[%s3 + $0x8c8] sm:$0xff]
  %v1217 = vld [vmem:[%s3 + $0x8d0] sm:$0xff]
  %v1218 = vld [vmem:[%s3 + $0x8d8] sm:$0xff]
  %v1219 = vld [vmem:[%s3 + $0x8e0] sm:$0xff]
  %v1220 = vld [vmem:[%s3 + $0x8e8] sm:$0xff]
  %v1221 = vld [vmem:[%s3 + $0x8f0] sm:$0xff]
  %v1222 = vld [vmem:[%s3 + $0x8f8] sm:$0xff]
  %v1223 = vld [vmem:[%s3 + $0x900] sm:$0xff]
  %v1224 = vld [vmem:[%s3 + $0x908] sm:$0xff]
  %v1225 = vld [vmem:[%s3 + $0x910] sm:$0xff]
  %v1226 = vld [vmem:[%s3 + $0x918] sm:$0xff]
  %v1227 = vld [vmem:[%s3 + $0x920] sm:$0xff]
  %v1228 = vld [vmem:[%s3 + $0x928] sm:$0xff]
  %v1229 = vld [vmem:[%s3 + $0x930] sm:$0xff]
  %v1230 = vld [vmem:[%s3 + $0x938] sm:$0xff]
  %v1231 = vld [vmem:[%s3 + $0x940] sm:$0xff]
  %v1232 = vld [vmem:[%s3 + $0x948] sm:$0xff]
  %v1233 = vld [vmem:[%s3 + $0x950] sm:$0xff]
  %v1234 = vld [vmem:[%s3 + $0x958] sm:$0xff]
  %v1235 = vld [vmem:[%s3 + $0x960] sm:$0xff]
  %v1236 = vld [vmem:[%s3 + $0x968] sm:$0xff]
  %v1237 = vld [vmem:[%s3 + $0x970] sm:$0xff]
  %v1238 = vld [vmem:[%s3 + $0x978] sm:$0xff]
  %v1239 = vld [vmem:[%s3 + $0x980] sm:$0xff]
  %v1240 = vld [vmem:[%s3 + $0x988] sm:$0xff]
  %v1241 = vld [vmem:[%s3 + $0x990] sm:$0xff]
  %v1242 = vld [vmem:[%s3 + $0x998] sm:$0xff]
  %v1243 = vld [vmem:[%s3 + $0x9a0] sm:$0xff]
  %v1244 = vld [vmem:[%s3 + $0x9a8] sm:$0xff]
  %v1245 = vld [vmem:[%s3 + $0x9b0] sm:$0xff]
  %v1246 = vld [vmem:[%s3 + $0x9b8] sm:$0xff]
  %v1247 = vld [vmem:[%s3 + $0x9c0] sm:$0xff]
  %v1248 = vld [vmem:[%s3 + $0x9c8] sm:$0xff]
  %v1249 = vld [vmem:[%s3 + $0x9d0] sm:$0xff]
  %v1250 = vld [vmem:[%s3 + $0x9d8] sm:$0xff]
  %v1251 = vld [vmem:[%s3 + $0x9e0] sm:$0xff]
  %v1252 = vld [vmem:[%s3 + $0x9e8] sm:$0xff]
  %v1253 = vld [vmem:[%s3 + $0x9f0] sm:$0xff]
  %v1254 = vld [vmem:[%s3 + $0x9f8] sm:$0xff]
  %v1255 = vld [vmem:[%s3 + $0xa00] sm:$0xff]
  %v1256 = vld [vmem:[%s3 + $0xa08] sm:$0xff]
  %v1257 = vld [vmem:[%s3 + $0xa10] sm:$0xff]
  %v1258 = vld [vmem:[%s3 + $0xa18] sm:$0xff]
  %v1259 = vld [vmem:[%s3 + $0xa20] sm:$0xff]
  %v1260 = vld [vmem:[%s3 + $0xa28] sm:$0xff]
  %v1261 = vld [vmem:[%s3 + $0xa30] sm:$0xff]
  %v1262 = vld [vmem:[%s3 + $0xa38] sm:$0xff]
  %v1263 = vld [vmem:[%s3 + $0xa40] sm:$0xff]
  %v1264 = vld [vmem:[%s3 + $0xa48] sm:$0xff]
  %v1265 = vld [vmem:[%s3 + $0xa50] sm:$0xff]
  %v1266 = vld [vmem:[%s3 + $0xa58] sm:$0xff]
  %v1267 = vld [vmem:[%s3 + $0xa60] sm:$0xff]
  %v1268 = vld [vmem:[%s3 + $0xa68] sm:$0xff]
  %v1269 = vld [vmem:[%s3 + $0xa70] sm:$0xff]
  %v1270 = vld [vmem:[%s3 + $0xa78] sm:$0xff]
  %v1271 = vld [vmem:[%s3 + $0xa80] sm:$0xff]
  %v1272 = vld [vmem:[%s3 + $0xa88] sm:$0xff]
  %v1273 = vld [vmem:[%s3 + $0xa90] sm:$0xff]
  %v1274 = vld [vmem:[%s3 + $0xa98] sm:$0xff]
  %v1275 = vld [vmem:[%s3 + $0xaa0] sm:$0xff]
  %v1276 = vld [vmem:[%s3 + $0xaa8] sm:$0xff]
  %v1277 = vld [vmem:[%s3 + $0xab0] sm:$0xff]
  %v1278 = vld [vmem:[%s3 + $0xab8] sm:$0xff]
  %v1279 = vld [vmem:[%s3 + $0xac0] sm:$0xff]
  %v1280 = vld [vmem:[%s3 + $0xac8] sm:$0xff]
  %v1281 = vld [vmem:[%s3 + $0xad0] sm:$0xff]
  %v1282 = vld [vmem:[%s3 + $0xad8] sm:$0xff]
  %v1283 = vld [vmem:[%s3 + $0xae0] sm:$0xff]
  %v1284 = vld [vmem:[%s3 + $0xae8] sm:$0xff]
  %v1285 = vld [vmem:[%s3 + $0xaf0] sm:$0xff]
  %v1286 = vld [vmem:[%s3 + $0xaf8] sm:$0xff]
  %v1287 = vld [vmem:[%s3 + $0xb00] sm:$0xff]
  %v1288 = vld [vmem:[%s3 + $0xb08] sm:$0xff]
  %v1289 = vld [vmem:[%s3 + $0xb10] sm:$0xff]
  %v1290 = vld [vmem:[%s3 + $0xb18] sm:$0xff]
  %v1291 = vld [vmem:[%s3 + $0xb20] sm:$0xff]
  %v1292 = vld [vmem:[%s3 + $0xb28] sm:$0xff]
  %v1293 = vld [vmem:[%s3 + $0xb30] sm:$0xff]
  %v1294 = vld [vmem:[%s3 + $0xb38] sm:$0xff]
  %v1295 = vld [vmem:[%s3 + $0xb40] sm:$0xff]
  %v1296 = vld [vmem:[%s3 + $0xb48] sm:$0xff]
  %v1297 = vld [vmem:[%s3 + $0xb50] sm:$0xff]
  %v1298 = vld [vmem:[%s3 + $0xb58] sm:$0xff]
  %v1299 = vld [vmem:[%s3 + $0xb60] sm:$0xff]
  %v1300 = vld [vmem:[%s3 + $0xb68] sm:$0xff]
  %v1301 = vld [vmem:[%s3 + $0xb70] sm:$0xff]
  %v1302 = vld [vmem:[%s3 + $0xb78] sm:$0xff]
  %v1303 = vld [vmem:[%s3 + $0xb80] sm:$0xff]
  %v1304 = vld [vmem:[%s3 + $0xb88] sm:$0xff]
  %v1305 = vld [vmem:[%s3 + $0xb90] sm:$0xff]
  %v1306 = vld [vmem:[%s3 + $0xb98] sm:$0xff]
  %v1307 = vld [vmem:[%s3 + $0xba0] sm:$0xff]
  %v1308 = vld [vmem:[%s3 + $0xba8] sm:$0xff]
  %v1309 = vld [vmem:[%s3 + $0xbb0] sm:$0xff]
  %v1310 = vld [vmem:[%s3 + $0xbb8] sm:$0xff]
  %v1311 = vld [vmem:[%s3 + $0xbc0] sm:$0xff]
  %v1312 = vld [vmem:[%s3 + $0xbc8] sm:$0xff]
  %v1313 = vld [vmem:[%s3 + $0xbd0] sm:$0xff]
  %v1314 = vld [vmem:[%s3 + $0xbd8] sm:$0xff]
  %v1315 = vld [vmem:[%s3 + $0xbe0] sm:$0xff]
  %v1316 = vld [vmem:[%s3 + $0xbe8] sm:$0xff]
  %v1317 = vld [vmem:[%s3 + $0xbf0] sm:$0xff]
  %v1318 = vld [vmem:[%s3 + $0xbf8] sm:$0xff]
  %v1319 = vld [vmem:[%s3 + $0xc00] sm:$0xff]
  %v1320 = vld [vmem:[%s3 + $0xc08] sm:$0xff]
  %v1321 = vld [vmem:[%s3 + $0xc10] sm:$0xff]
  %v1322 = vld [vmem:[%s3 + $0xc18] sm:$0xff]
  %v1323 = vld [vmem:[%s3 + $0xc20] sm:$0xff]
  %v1324 = vld [vmem:[%s3 + $0xc28] sm:$0xff]
  %v1325 = vld [vmem:[%s3 + $0xc30] sm:$0xff]
  %v1326 = vld [vmem:[%s3 + $0xc38] sm:$0xff]
  %v1327 = vld [vmem:[%s3 + $0xc40] sm:$0xff]
  %v1328 = vld [vmem:[%s3 + $0xc48] sm:$0xff]
  %v1329 = vld [vmem:[%s3 + $0xc50] sm:$0xff]
  %v1330 = vld [vmem:[%s3 + $0xc58] sm:$0xff]
  %v1331 = vld [vmem:[%s3 + $0xc60] sm:$0xff]
  %v1332 = vld [vmem:[%s3 + $0xc68] sm:$0xff]
  %v1333 = vld [vmem:[%s3 + $0xc70] sm:$0xff]
  %v1334 = vld [vmem:[%s3 + $0xc78] sm:$0xff]
  %v1335 = vld [vmem:[%s3 + $0xc80] sm:$0xff]
  %v1336 = vld [vmem:[%s3 + $0xc88] sm:$0xff]
  %v1337 = vld [vmem:[%s3 + $0xc90] sm:$0xff]
  %v1338 = vld [vmem:[%s3 + $0xc98] sm:$0xff]
  %v1339 = vld [vmem:[%s3 + $0xca0] sm:$0xff]
  %v1340 = vld [vmem:[%s3 + $0xca8] sm:$0xff]
  %v1341 = vld [vmem:[%s3 + $0xcb0] sm:$0xff]
  %v1342 = vld [vmem:[%s3 + $0xcb8] sm:$0xff]
  %v1343 = vld [vmem:[%s4] sm:$0x3]
  %v1345 = vlaneseq
  %v1346 = vshrl.u32 %v1345, 7
  %v1347 = vsub.s32 0, %v1346
  %v1348 = vrot.slane %v1343, %v1347
  %v1349 = vlaneseq
  %v1350 = vshrl.u32 %v1349, 7
  %v1351 = vsub.s32 1, %v1350
  %v1352 = vrot.slane %v1343, %v1351
  %v1763 = vunpack.c.l.b16 %v935
  %v1764 = vunpack.c.h.b16 %v935
  %v1765 = vunpack.c.l.b16 %v936
  %v1766 = vunpack.c.h.b16 %v936
  %v1767 = vunpack.c.l.b16 %v937
  %v1768 = vunpack.c.h.b16 %v937
  %v1769 = vunpack.c.l.b16 %v938
  %v1770 = vunpack.c.h.b16 %v938
  %v1771 = vunpack.c.l.b16 %v939
  %v1772 = vunpack.c.h.b16 %v939
  %v1773 = vunpack.c.l.b16 %v940
  %v1774 = vunpack.c.h.b16 %v940
  %v1775 = vunpack.c.l.b16 %v941
  %v1776 = vunpack.c.h.b16 %v941
  %v1777 = vunpack.c.l.b16 %v942
  %v1778 = vunpack.c.h.b16 %v942
  %v1779 = vunpack.c.l.b16 %v943
  %v1780 = vunpack.c.h.b16 %v943
  %v1781 = vunpack.c.l.b16 %v944
  %v1782 = vunpack.c.h.b16 %v944
  %v1783 = vunpack.c.l.b16 %v945
  %v1784 = vunpack.c.h.b16 %v945
  %v1785 = vunpack.c.l.b16 %v946
  %v1786 = vunpack.c.h.b16 %v946
  %v1787 = vunpack.c.l.b16 %v947
  %v1788 = vunpack.c.h.b16 %v947
  %v1789 = vunpack.c.l.b16 %v948
  %v1790 = vunpack.c.h.b16 %v948
  %v1791 = vunpack.c.l.b16 %v949
  %v1792 = vunpack.c.h.b16 %v949
  %v1793 = vunpack.c.l.b16 %v950
  %v1794 = vunpack.c.h.b16 %v950
  %v1795 = vunpack.c.l.b16 %v951
  %v1796 = vunpack.c.h.b16 %v951
  %v1797 = vunpack.c.l.b16 %v952
  %v1798 = vunpack.c.h.b16 %v952
  %v1799 = vunpack.c.l.b16 %v953
  %v1800 = vunpack.c.h.b16 %v953
  %v1801 = vunpack.c.l.b16 %v954
  %v1802 = vunpack.c.h.b16 %v954
  %v1803 = vunpack.c.l.b16 %v955
  %v1804 = vunpack.c.h.b16 %v955
  %v1805 = vunpack.c.l.b16 %v956
  %v1806 = vunpack.c.h.b16 %v956
  %v1807 = vunpack.c.l.b16 %v957
  %v1808 = vunpack.c.h.b16 %v957
  %v1809 = vunpack.c.l.b16 %v958
  %v1810 = vunpack.c.h.b16 %v958
  %v1811 = vunpack.c.l.b16 %v959
  %v1812 = vunpack.c.h.b16 %v959
  %v1813 = vunpack.c.l.b16 %v960
  %v1814 = vunpack.c.h.b16 %v960
  %v1815 = vunpack.c.l.b16 %v961
  %v1816 = vunpack.c.h.b16 %v961
  %v1817 = vunpack.c.l.b16 %v962
  %v1818 = vunpack.c.h.b16 %v962
  %v1819 = vunpack.c.l.b16 %v963
  %v1820 = vunpack.c.h.b16 %v963
  %v1821 = vunpack.c.l.b16 %v964
  %v1822 = vunpack.c.h.b16 %v964
  %v1823 = vunpack.c.l.b16 %v965
  %v1824 = vunpack.c.h.b16 %v965
  %v1825 = vunpack.c.l.b16 %v966
  %v1826 = vunpack.c.h.b16 %v966
  %v1827 = vunpack.c.l.b16 %v967
  %v1828 = vunpack.c.h.b16 %v967
  %v1829 = vunpack.c.l.b16 %v968
  %v1830 = vunpack.c.h.b16 %v968
  %v1831 = vunpack.c.l.b16 %v969
  %v1832 = vunpack.c.h.b16 %v969
  %v1833 = vunpack.c.l.b16 %v970
  %v1834 = vunpack.c.h.b16 %v970
  %v1835 = vunpack.c.l.b16 %v971
  %v1836 = vunpack.c.h.b16 %v971
  %v1837 = vunpack.c.l.b16 %v972
  %v1838 = vunpack.c.h.b16 %v972
  %v1839 = vunpack.c.l.b16 %v973
  %v1840 = vunpack.c.h.b16 %v973
  %v1841 = vunpack.c.l.b16 %v974
  %v1842 = vunpack.c.h.b16 %v974
  %v1843 = vunpack.c.l.b16 %v975
  %v1844 = vunpack.c.h.b16 %v975
  %v1845 = vunpack.c.l.b16 %v976
  %v1846 = vunpack.c.h.b16 %v976
  %v1847 = vunpack.c.l.b16 %v977
  %v1848 = vunpack.c.h.b16 %v977
  %v1849 = vunpack.c.l.b16 %v978
  %v1850 = vunpack.c.h.b16 %v978
  %v1851 = vunpack.c.l.b16 %v979
  %v1852 = vunpack.c.h.b16 %v979
  %v1853 = vunpack.c.l.b16 %v980
  %v1854 = vunpack.c.h.b16 %v980
  %v1855 = vunpack.c.l.b16 %v981
  %v1856 = vunpack.c.h.b16 %v981
  %v1857 = vunpack.c.l.b16 %v982
  %v1858 = vunpack.c.h.b16 %v982
  %v1859 = vunpack.c.l.b16 %v983
  %v1860 = vunpack.c.h.b16 %v983
  %v1861 = vunpack.c.l.b16 %v984
  %v1862 = vunpack.c.h.b16 %v984
  %v1863 = vunpack.c.l.b16 %v985
  %v1864 = vunpack.c.h.b16 %v985
  %v1865 = vunpack.c.l.b16 %v986
  %v1866 = vunpack.c.h.b16 %v986
  %v1867 = vunpack.c.l.b16 %v987
  %v1868 = vunpack.c.h.b16 %v987
  %v1869 = vunpack.c.l.b16 %v988
  %v1870 = vunpack.c.h.b16 %v988
  %v1871 = vunpack.c.l.b16 %v989
  %v1872 = vunpack.c.h.b16 %v989
  %v1873 = vunpack.c.l.b16 %v990
  %v1874 = vunpack.c.h.b16 %v990
  %v1875 = vunpack.c.l.b16 %v991
  %v1876 = vunpack.c.h.b16 %v991
  %v1877 = vunpack.c.l.b16 %v992
  %v1878 = vunpack.c.h.b16 %v992
  %v1879 = vunpack.c.l.b16 %v993
  %v1880 = vunpack.c.h.b16 %v993
  %v1881 = vunpack.c.l.b16 %v994
  %v1882 = vunpack.c.h.b16 %v994
  %v1883 = vunpack.c.l.b16 %v995
  %v1884 = vunpack.c.h.b16 %v995
  %v1885 = vunpack.c.l.b16 %v996
  %v1886 = vunpack.c.h.b16 %v996
  %v1887 = vunpack.c.l.b16 %v997
  %v1888 = vunpack.c.h.b16 %v997
  %v1889 = vunpack.c.l.b16 %v998
  %v1890 = vunpack.c.h.b16 %v998
  %v1891 = vunpack.c.l.b16 %v999
  %v1892 = vunpack.c.h.b16 %v999
  %v1893 = vunpack.c.l.b16 %v1000
  %v1894 = vunpack.c.h.b16 %v1000
  %v1895 = vunpack.c.l.b16 %v1001
  %v1896 = vunpack.c.h.b16 %v1001
  %v1897 = vunpack.c.l.b16 %v1002
  %v1898 = vunpack.c.h.b16 %v1002
  %v1899 = vunpack.c.l.b16 %v1003
  %v1900 = vunpack.c.h.b16 %v1003
  %v1901 = vunpack.c.l.b16 %v1004
  %v1902 = vunpack.c.h.b16 %v1004
  %v1903 = vunpack.c.l.b16 %v1005
  %v1904 = vunpack.c.h.b16 %v1005
  %v1905 = vunpack.c.l.b16 %v1006
  %v1906 = vunpack.c.h.b16 %v1006
  %v1907 = vunpack.c.l.b16 %v1007
  %v1908 = vunpack.c.h.b16 %v1007
  %v1909 = vunpack.c.l.b16 %v1008
  %v1910 = vunpack.c.h.b16 %v1008
  %v1911 = vunpack.c.l.b16 %v1009
  %v1912 = vunpack.c.h.b16 %v1009
  %v1913 = vunpack.c.l.b16 %v1010
  %v1914 = vunpack.c.h.b16 %v1010
  %v1915 = vunpack.c.l.b16 %v1011
  %v1916 = vunpack.c.h.b16 %v1011
  %v1917 = vunpack.c.l.b16 %v1012
  %v1918 = vunpack.c.h.b16 %v1012
  %v1919 = vunpack.c.l.b16 %v1013
  %v1920 = vunpack.c.h.b16 %v1013
  %v1921 = vunpack.c.l.b16 %v1014
  %v1922 = vunpack.c.h.b16 %v1014
  %v1923 = vunpack.c.l.b16 %v1015
  %v1924 = vunpack.c.h.b16 %v1015
  %v1925 = vunpack.c.l.b16 %v1016
  %v1926 = vunpack.c.h.b16 %v1016
  %v1927 = vunpack.c.l.b16 %v1017
  %v1928 = vunpack.c.h.b16 %v1017
  %v1929 = vunpack.c.l.b16 %v1018
  %v1930 = vunpack.c.h.b16 %v1018
  %v1931 = vunpack.c.l.b16 %v1019
  %v1932 = vunpack.c.h.b16 %v1019
  %v1933 = vunpack.c.l.b16 %v1020
  %v1934 = vunpack.c.h.b16 %v1020
  %v1935 = vunpack.c.l.b16 %v1021
  %v1936 = vunpack.c.h.b16 %v1021
  %v1937 = vunpack.c.l.b16 %v1022
  %v1938 = vunpack.c.h.b16 %v1022
  %v1939 = vunpack.c.l.b16 %v1023
  %v1940 = vunpack.c.h.b16 %v1023
  %v1941 = vunpack.c.l.b16 %v1024
  %v1942 = vunpack.c.h.b16 %v1024
  %v1943 = vunpack.c.l.b16 %v1025
  %v1944 = vunpack.c.h.b16 %v1025
  %v1945 = vunpack.c.l.b16 %v1026
  %v1946 = vunpack.c.h.b16 %v1026
  %v1947 = vunpack.c.l.b16 %v1027
  %v1948 = vunpack.c.h.b16 %v1027
  %v1949 = vunpack.c.l.b16 %v1028
  %v1950 = vunpack.c.h.b16 %v1028
  %v1951 = vunpack.c.l.b16 %v1029
  %v1952 = vunpack.c.h.b16 %v1029
  %v1953 = vunpack.c.l.b16 %v1030
  %v1954 = vunpack.c.h.b16 %v1030
  %v1955 = vunpack.c.l.b16 %v1031
  %v1956 = vunpack.c.h.b16 %v1031
  %v1957 = vunpack.c.l.b16 %v1032
  %v1958 = vunpack.c.h.b16 %v1032
  %v1959 = vunpack.c.l.b16 %v1033
  %v1960 = vunpack.c.h.b16 %v1033
  %v1961 = vunpack.c.l.b16 %v1034
  %v1962 = vunpack.c.h.b16 %v1034
  %v1963 = vunpack.c.l.b16 %v1035
  %v1964 = vunpack.c.h.b16 %v1035
  %v1965 = vunpack.c.l.b16 %v1036
  %v1966 = vunpack.c.h.b16 %v1036
  %v1967 = vunpack.c.l.b16 %v1037
  %v1968 = vunpack.c.h.b16 %v1037
  %v1969 = vunpack.c.l.b16 %v1038
  %v1970 = vunpack.c.h.b16 %v1038
  %v1971 = vunpack.c.l.b16 %v1039
  %v1972 = vunpack.c.h.b16 %v1039
  %v1973 = vunpack.c.l.b16 %v1040
  %v1974 = vunpack.c.h.b16 %v1040
  %v1975 = vunpack.c.l.b16 %v1041
  %v1976 = vunpack.c.h.b16 %v1041
  %v1977 = vunpack.c.l.b16 %v1042
  %v1978 = vunpack.c.h.b16 %v1042
  %v1979 = vunpack.c.l.b16 %v1043
  %v1980 = vunpack.c.h.b16 %v1043
  %v1981 = vunpack.c.l.b16 %v1044
  %v1982 = vunpack.c.h.b16 %v1044
  %v1983 = vunpack.c.l.b16 %v1045
  %v1984 = vunpack.c.h.b16 %v1045
  %v1985 = vunpack.c.l.b16 %v1046
  %v1986 = vunpack.c.h.b16 %v1046
  %v1987 = vunpack.c.l.b16 %v1047
  %v1988 = vunpack.c.h.b16 %v1047
  %v1989 = vunpack.c.l.b16 %v1048
  %v1990 = vunpack.c.h.b16 %v1048
  %v1991 = vunpack.c.l.b16 %v1049
  %v1992 = vunpack.c.h.b16 %v1049
  %v1993 = vunpack.c.l.b16 %v1050
  %v1994 = vunpack.c.h.b16 %v1050
  %v1995 = vunpack.c.l.b16 %v1051
  %v1996 = vunpack.c.h.b16 %v1051
  %v1997 = vunpack.c.l.b16 %v1052
  %v1998 = vunpack.c.h.b16 %v1052
  %v1999 = vunpack.c.l.b16 %v1053
  %v2000 = vunpack.c.h.b16 %v1053
  %v2001 = vunpack.c.l.b16 %v1054
  %v2002 = vunpack.c.h.b16 %v1054
  %v2003 = vunpack.c.l.b16 %v1055
  %v2004 = vunpack.c.h.b16 %v1055
  %v2005 = vunpack.c.l.b16 %v1056
  %v2006 = vunpack.c.h.b16 %v1056
  %v2007 = vunpack.c.l.b16 %v1057
  %v2008 = vunpack.c.h.b16 %v1057
  %v2009 = vunpack.c.l.b16 %v1058
  %v2010 = vunpack.c.h.b16 %v1058
  %v2011 = vunpack.c.l.b16 %v1059
  %v2012 = vunpack.c.h.b16 %v1059
  %v2013 = vunpack.c.l.b16 %v1060
  %v2014 = vunpack.c.h.b16 %v1060
  %v2015 = vunpack.c.l.b16 %v1061
  %v2016 = vunpack.c.h.b16 %v1061
  %v2017 = vunpack.c.l.b16 %v1062
  %v2018 = vunpack.c.h.b16 %v1062
  %v2019 = vunpack.c.l.b16 %v1063
  %v2020 = vunpack.c.h.b16 %v1063
  %v2021 = vunpack.c.l.b16 %v1064
  %v2022 = vunpack.c.h.b16 %v1064
  %v2023 = vunpack.c.l.b16 %v1065
  %v2024 = vunpack.c.h.b16 %v1065
  %v2025 = vunpack.c.l.b16 %v1066
  %v2026 = vunpack.c.h.b16 %v1066
  %v2027 = vunpack.c.l.b16 %v1067
  %v2028 = vunpack.c.h.b16 %v1067
  %v2029 = vunpack.c.l.b16 %v1068
  %v2030 = vunpack.c.h.b16 %v1068
  %v2031 = vunpack.c.l.b16 %v1069
  %v2032 = vunpack.c.h.b16 %v1069
  %v2033 = vunpack.c.l.b16 %v1070
  %v2034 = vunpack.c.h.b16 %v1070
  %v2035 = vunpack.c.l.b16 %v1071
  %v2036 = vunpack.c.h.b16 %v1071
  %v2037 = vunpack.c.l.b16 %v1072
  %v2038 = vunpack.c.h.b16 %v1072
  %v2039 = vunpack.c.l.b16 %v1073
  %v2040 = vunpack.c.h.b16 %v1073
  %v2041 = vunpack.c.l.b16 %v1074
  %v2042 = vunpack.c.h.b16 %v1074
  %v2043 = vunpack.c.l.b16 %v1075
  %v2044 = vunpack.c.h.b16 %v1075
  %v2045 = vunpack.c.l.b16 %v1076
  %v2046 = vunpack.c.h.b16 %v1076
  %v2047 = vunpack.c.l.b16 %v1077
  %v2048 = vunpack.c.h.b16 %v1077
  %v2049 = vunpack.c.l.b16 %v1078
  %v2050 = vunpack.c.h.b16 %v1078
  %v2051 = vunpack.c.l.b16 %v1079
  %v2052 = vunpack.c.h.b16 %v1079
  %v2053 = vunpack.c.l.b16 %v1080
  %v2054 = vunpack.c.h.b16 %v1080
  %v2055 = vunpack.c.l.b16 %v1081
  %v2056 = vunpack.c.h.b16 %v1081
  %v2057 = vunpack.c.l.b16 %v1082
  %v2058 = vunpack.c.h.b16 %v1082
  %v2059 = vunpack.c.l.b16 %v1083
  %v2060 = vunpack.c.h.b16 %v1083
  %v2061 = vunpack.c.l.b16 %v1084
  %v2062 = vunpack.c.h.b16 %v1084
  %v2063 = vunpack.c.l.b16 %v1085
  %v2064 = vunpack.c.h.b16 %v1085
  %v2065 = vunpack.c.l.b16 %v1086
  %v2066 = vunpack.c.h.b16 %v1086
  %v2067 = vunpack.c.l.b16 %v1087
  %v2068 = vunpack.c.h.b16 %v1087
  %v2069 = vunpack.c.l.b16 %v1088
  %v2070 = vunpack.c.h.b16 %v1088
  %v2071 = vunpack.c.l.b16 %v1089
  %v2072 = vunpack.c.h.b16 %v1089
  %v2073 = vunpack.c.l.b16 %v1090
  %v2074 = vunpack.c.h.b16 %v1090
  %v2075 = vunpack.c.l.b16 %v1091
  %v2076 = vunpack.c.h.b16 %v1091
  %v2077 = vunpack.c.l.b16 %v1092
  %v2078 = vunpack.c.h.b16 %v1092
  %v2079 = vunpack.c.l.b16 %v1093
  %v2080 = vunpack.c.h.b16 %v1093
  %v2081 = vunpack.c.l.b16 %v1094
  %v2082 = vunpack.c.h.b16 %v1094
  %v2083 = vunpack.c.l.b16 %v1095
  %v2084 = vunpack.c.h.b16 %v1095
  %v2085 = vunpack.c.l.b16 %v1096
  %v2086 = vunpack.c.h.b16 %v1096
  %v2087 = vunpack.c.l.b16 %v1097
  %v2088 = vunpack.c.h.b16 %v1097
  %v2089 = vunpack.c.l.b16 %v1098
  %v2090 = vunpack.c.h.b16 %v1098
  %v2091 = vunpack.c.l.b16 %v1099
  %v2092 = vunpack.c.h.b16 %v1099
  %v2093 = vunpack.c.l.b16 %v1100
  %v2094 = vunpack.c.h.b16 %v1100
  %v2095 = vunpack.c.l.b16 %v1101
  %v2096 = vunpack.c.h.b16 %v1101
  %v2097 = vunpack.c.l.b16 %v1102
  %v2098 = vunpack.c.h.b16 %v1102
  %v2099 = vunpack.c.l.b16 %v1103
  %v2100 = vunpack.c.h.b16 %v1103
  %v2101 = vunpack.c.l.b16 %v1104
  %v2102 = vunpack.c.h.b16 %v1104
  %v2103 = vunpack.c.l.b16 %v1105
  %v2104 = vunpack.c.h.b16 %v1105
  %v2105 = vunpack.c.l.b16 %v1106
  %v2106 = vunpack.c.h.b16 %v1106
  %v2107 = vunpack.c.l.b16 %v1107
  %v2108 = vunpack.c.h.b16 %v1107
  %v2109 = vunpack.c.l.b16 %v1108
  %v2110 = vunpack.c.h.b16 %v1108
  %v2111 = vunpack.c.l.b16 %v1109
  %v2112 = vunpack.c.h.b16 %v1109
  %v2113 = vunpack.c.l.b16 %v1110
  %v2114 = vunpack.c.h.b16 %v1110
  %v2115 = vunpack.c.l.b16 %v1111
  %v2116 = vunpack.c.h.b16 %v1111
  %v2117 = vunpack.c.l.b16 %v1112
  %v2118 = vunpack.c.h.b16 %v1112
  %v2119 = vunpack.c.l.b16 %v1113
  %v2120 = vunpack.c.h.b16 %v1113
  %v2121 = vunpack.c.l.b16 %v1114
  %v2122 = vunpack.c.h.b16 %v1114
  %v2123 = vunpack.c.l.b16 %v1115
  %v2124 = vunpack.c.h.b16 %v1115
  %v2125 = vunpack.c.l.b16 %v1116
  %v2126 = vunpack.c.h.b16 %v1116
  %v2127 = vunpack.c.l.b16 %v1117
  %v2128 = vunpack.c.h.b16 %v1117
  %v2129 = vunpack.c.l.b16 %v1118
  %v2130 = vunpack.c.h.b16 %v1118
  %v2131 = vunpack.c.l.b16 %v1119
  %v2132 = vunpack.c.h.b16 %v1119
  %v2133 = vunpack.c.l.b16 %v1120
  %v2134 = vunpack.c.h.b16 %v1120
  %v2135 = vunpack.c.l.b16 %v1121
  %v2136 = vunpack.c.h.b16 %v1121
  %v2137 = vunpack.c.l.b16 %v1122
  %v2138 = vunpack.c.h.b16 %v1122
  %v2139 = vunpack.c.l.b16 %v1123
  %v2140 = vunpack.c.h.b16 %v1123
  %v2141 = vunpack.c.l.b16 %v1124
  %v2142 = vunpack.c.h.b16 %v1124
  %v2143 = vunpack.c.l.b16 %v1125
  %v2144 = vunpack.c.h.b16 %v1125
  %v2145 = vunpack.c.l.b16 %v1126
  %v2146 = vunpack.c.h.b16 %v1126
  %v2147 = vunpack.c.l.b16 %v1127
  %v2148 = vunpack.c.h.b16 %v1127
  %v2149 = vunpack.c.l.b16 %v1128
  %v2150 = vunpack.c.h.b16 %v1128
  %v2151 = vunpack.c.l.b16 %v1129
  %v2152 = vunpack.c.h.b16 %v1129
  %v2153 = vunpack.c.l.b16 %v1130
  %v2154 = vunpack.c.h.b16 %v1130
  %v2155 = vunpack.c.l.b16 %v1131
  %v2156 = vunpack.c.h.b16 %v1131
  %v2157 = vunpack.c.l.b16 %v1132
  %v2158 = vunpack.c.h.b16 %v1132
  %v2159 = vunpack.c.l.b16 %v1133
  %v2160 = vunpack.c.h.b16 %v1133
  %v2161 = vunpack.c.l.b16 %v1134
  %v2162 = vunpack.c.h.b16 %v1134
  %v2163 = vunpack.c.l.b16 %v1135
  %v2164 = vunpack.c.h.b16 %v1135
  %v2165 = vunpack.c.l.b16 %v1136
  %v2166 = vunpack.c.h.b16 %v1136
  %v2167 = vunpack.c.l.b16 %v1137
  %v2168 = vunpack.c.h.b16 %v1137
  %v2169 = vunpack.c.l.b16 %v1138
  %v2170 = vunpack.c.h.b16 %v1138
  %v2171 = vunpack.c.l.b16 %v1139
  %v2172 = vunpack.c.h.b16 %v1139
  %v2173 = vunpack.c.l.b16 %v1140
  %v2174 = vunpack.c.h.b16 %v1140
  %v2175 = vunpack.c.l.b16 %v1141
  %v2176 = vunpack.c.h.b16 %v1141
  %v2177 = vunpack.c.l.b16 %v1142
  %v2178 = vunpack.c.h.b16 %v1142
  %v2179 = vunpack.c.l.b16 %v1143
  %v2180 = vunpack.c.h.b16 %v1143
  %v2181 = vunpack.c.l.b16 %v1144
  %v2182 = vunpack.c.h.b16 %v1144
  %v2183 = vunpack.c.l.b16 %v1145
  %v2184 = vunpack.c.h.b16 %v1145
  %v2185 = vunpack.c.l.b16 %v1146
  %v2186 = vunpack.c.h.b16 %v1146
  %v2187 = vunpack.c.l.b16 %v1147
  %v2188 = vunpack.c.h.b16 %v1147
  %v2189 = vunpack.c.l.b16 %v1148
  %v2190 = vunpack.c.h.b16 %v1148
  %v2191 = vunpack.c.l.b16 %v1149
  %v2192 = vunpack.c.h.b16 %v1149
  %v2193 = vunpack.c.l.b16 %v1150
  %v2194 = vunpack.c.h.b16 %v1150
  %v2195 = vunpack.c.l.b16 %v1151
  %v2196 = vunpack.c.h.b16 %v1151
  %v2197 = vunpack.c.l.b16 %v1152
  %v2198 = vunpack.c.h.b16 %v1152
  %v2199 = vunpack.c.l.b16 %v1153
  %v2200 = vunpack.c.h.b16 %v1153
  %v2201 = vunpack.c.l.b16 %v1154
  %v2202 = vunpack.c.h.b16 %v1154
  %v2203 = vunpack.c.l.b16 %v1155
  %v2204 = vunpack.c.h.b16 %v1155
  %v2205 = vunpack.c.l.b16 %v1156
  %v2206 = vunpack.c.h.b16 %v1156
  %v2207 = vunpack.c.l.b16 %v1157
  %v2208 = vunpack.c.h.b16 %v1157
  %v2209 = vunpack.c.l.b16 %v1158
  %v2210 = vunpack.c.h.b16 %v1158
  %v2211 = vunpack.c.l.b16 %v1159
  %v2212 = vunpack.c.h.b16 %v1159
  %v2213 = vunpack.c.l.b16 %v1160
  %v2214 = vunpack.c.h.b16 %v1160
  %v2215 = vunpack.c.l.b16 %v1161
  %v2216 = vunpack.c.h.b16 %v1161
  %v2217 = vunpack.c.l.b16 %v1162
  %v2218 = vunpack.c.h.b16 %v1162
  %v2219 = vunpack.c.l.b16 %v1163
  %v2220 = vunpack.c.h.b16 %v1163
  %v2221 = vunpack.c.l.b16 %v1164
  %v2222 = vunpack.c.h.b16 %v1164
  %v2223 = vunpack.c.l.b16 %v1165
  %v2224 = vunpack.c.h.b16 %v1165
  %v2225 = vunpack.c.l.b16 %v1166
  %v2226 = vunpack.c.h.b16 %v1166
  %v2227 = vunpack.c.l.b16 %v1167
  %v2228 = vunpack.c.h.b16 %v1167
  %v2229 = vunpack.c.l.b16 %v1168
  %v2230 = vunpack.c.h.b16 %v1168
  %v2231 = vunpack.c.l.b16 %v1169
  %v2232 = vunpack.c.h.b16 %v1169
  %v2233 = vunpack.c.l.b16 %v1170
  %v2234 = vunpack.c.h.b16 %v1170
  %v2235 = vunpack.c.l.b16 %v1171
  %v2236 = vunpack.c.h.b16 %v1171
  %v2237 = vunpack.c.l.b16 %v1172
  %v2238 = vunpack.c.h.b16 %v1172
  %v2239 = vunpack.c.l.b16 %v1173
  %v2240 = vunpack.c.h.b16 %v1173
  %v2241 = vunpack.c.l.b16 %v1174
  %v2242 = vunpack.c.h.b16 %v1174
  %v2243 = vunpack.c.l.b16 %v1175
  %v2244 = vunpack.c.h.b16 %v1175
  %v2245 = vunpack.c.l.b16 %v1176
  %v2246 = vunpack.c.h.b16 %v1176
  %v2247 = vunpack.c.l.b16 %v1177
  %v2248 = vunpack.c.h.b16 %v1177
  %v2249 = vunpack.c.l.b16 %v1178
  %v2250 = vunpack.c.h.b16 %v1178
  %v2251 = vunpack.c.l.b16 %v1179
  %v2252 = vunpack.c.h.b16 %v1179
  %v2253 = vunpack.c.l.b16 %v1180
  %v2254 = vunpack.c.h.b16 %v1180
  %v2255 = vunpack.c.l.b16 %v1181
  %v2256 = vunpack.c.h.b16 %v1181
  %v2257 = vunpack.c.l.b16 %v1182
  %v2258 = vunpack.c.h.b16 %v1182
  %v2259 = vunpack.c.l.b16 %v1183
  %v2260 = vunpack.c.h.b16 %v1183
  %v2261 = vunpack.c.l.b16 %v1184
  %v2262 = vunpack.c.h.b16 %v1184
  %v2263 = vunpack.c.l.b16 %v1185
  %v2264 = vunpack.c.h.b16 %v1185
  %v2265 = vunpack.c.l.b16 %v1186
  %v2266 = vunpack.c.h.b16 %v1186
  %v2267 = vunpack.c.l.b16 %v1187
  %v2268 = vunpack.c.h.b16 %v1187
  %v2269 = vunpack.c.l.b16 %v1188
  %v2270 = vunpack.c.h.b16 %v1188
  %v2271 = vunpack.c.l.b16 %v1189
  %v2272 = vunpack.c.h.b16 %v1189
  %v2273 = vunpack.c.l.b16 %v1190
  %v2274 = vunpack.c.h.b16 %v1190
  %v2275 = vunpack.c.l.b16 %v1191
  %v2276 = vunpack.c.h.b16 %v1191
  %v2277 = vunpack.c.l.b16 %v1192
  %v2278 = vunpack.c.h.b16 %v1192
  %v2279 = vunpack.c.l.b16 %v1193
  %v2280 = vunpack.c.h.b16 %v1193
  %v2281 = vunpack.c.l.b16 %v1194
  %v2282 = vunpack.c.h.b16 %v1194
  %v2283 = vunpack.c.l.b16 %v1195
  %v2284 = vunpack.c.h.b16 %v1195
  %v2285 = vunpack.c.l.b16 %v1196
  %v2286 = vunpack.c.h.b16 %v1196
  %v2287 = vunpack.c.l.b16 %v1197
  %v2288 = vunpack.c.h.b16 %v1197
  %v2289 = vunpack.c.l.b16 %v1198
  %v2290 = vunpack.c.h.b16 %v1198
  %v2291 = vunpack.c.l.b16 %v1199
  %v2292 = vunpack.c.h.b16 %v1199
  %v2293 = vunpack.c.l.b16 %v1200
  %v2294 = vunpack.c.h.b16 %v1200
  %v2295 = vunpack.c.l.b16 %v1201
  %v2296 = vunpack.c.h.b16 %v1201
  %v2297 = vunpack.c.l.b16 %v1202
  %v2298 = vunpack.c.h.b16 %v1202
  %v2299 = vunpack.c.l.b16 %v1203
  %v2300 = vunpack.c.h.b16 %v1203
  %v2301 = vunpack.c.l.b16 %v1204
  %v2302 = vunpack.c.h.b16 %v1204
  %v2303 = vunpack.c.l.b16 %v1205
  %v2304 = vunpack.c.h.b16 %v1205
  %v2305 = vunpack.c.l.b16 %v1206
  %v2306 = vunpack.c.h.b16 %v1206
  %v2307 = vunpack.c.l.b16 %v1207
  %v2308 = vunpack.c.h.b16 %v1207
  %v2309 = vunpack.c.l.b16 %v1208
  %v2310 = vunpack.c.h.b16 %v1208
  %v2311 = vunpack.c.l.b16 %v1209
  %v2312 = vunpack.c.h.b16 %v1209
  %v2313 = vunpack.c.l.b16 %v1210
  %v2314 = vunpack.c.h.b16 %v1210
  %v2315 = vunpack.c.l.b16 %v1211
  %v2316 = vunpack.c.h.b16 %v1211
  %v2317 = vunpack.c.l.b16 %v1212
  %v2318 = vunpack.c.h.b16 %v1212
  %v2319 = vunpack.c.l.b16 %v1213
  %v2320 = vunpack.c.h.b16 %v1213
  %v2321 = vunpack.c.l.b16 %v1214
  %v2322 = vunpack.c.h.b16 %v1214
  %v2323 = vunpack.c.l.b16 %v1215
  %v2324 = vunpack.c.h.b16 %v1215
  %v2325 = vunpack.c.l.b16 %v1216
  %v2326 = vunpack.c.h.b16 %v1216
  %v2327 = vunpack.c.l.b16 %v1217
  %v2328 = vunpack.c.h.b16 %v1217
  %v2329 = vunpack.c.l.b16 %v1218
  %v2330 = vunpack.c.h.b16 %v1218
  %v2331 = vunpack.c.l.b16 %v1219
  %v2332 = vunpack.c.h.b16 %v1219
  %v2333 = vunpack.c.l.b16 %v1220
  %v2334 = vunpack.c.h.b16 %v1220
  %v2335 = vunpack.c.l.b16 %v1221
  %v2336 = vunpack.c.h.b16 %v1221
  %v2337 = vunpack.c.l.b16 %v1222
  %v2338 = vunpack.c.h.b16 %v1222
  %v2339 = vunpack.c.l.b16 %v1223
  %v2340 = vunpack.c.h.b16 %v1223
  %v2341 = vunpack.c.l.b16 %v1224
  %v2342 = vunpack.c.h.b16 %v1224
  %v2343 = vunpack.c.l.b16 %v1225
  %v2344 = vunpack.c.h.b16 %v1225
  %v2345 = vunpack.c.l.b16 %v1226
  %v2346 = vunpack.c.h.b16 %v1226
  %v2347 = vunpack.c.l.b16 %v1227
  %v2348 = vunpack.c.h.b16 %v1227
  %v2349 = vunpack.c.l.b16 %v1228
  %v2350 = vunpack.c.h.b16 %v1228
  %v2351 = vunpack.c.l.b16 %v1229
  %v2352 = vunpack.c.h.b16 %v1229
  %v2353 = vunpack.c.l.b16 %v1230
  %v2354 = vunpack.c.h.b16 %v1230
  %v2355 = vunpack.c.l.b16 %v1231
  %v2356 = vunpack.c.h.b16 %v1231
  %v2357 = vunpack.c.l.b16 %v1232
  %v2358 = vunpack.c.h.b16 %v1232
  %v2359 = vunpack.c.l.b16 %v1233
  %v2360 = vunpack.c.h.b16 %v1233
  %v2361 = vunpack.c.l.b16 %v1234
  %v2362 = vunpack.c.h.b16 %v1234
  %v2363 = vunpack.c.l.b16 %v1235
  %v2364 = vunpack.c.h.b16 %v1235
  %v2365 = vunpack.c.l.b16 %v1236
  %v2366 = vunpack.c.h.b16 %v1236
  %v2367 = vunpack.c.l.b16 %v1237
  %v2368 = vunpack.c.h.b16 %v1237
  %v2369 = vunpack.c.l.b16 %v1238
  %v2370 = vunpack.c.h.b16 %v1238
  %v2371 = vunpack.c.l.b16 %v1239
  %v2372 = vunpack.c.h.b16 %v1239
  %v2373 = vunpack.c.l.b16 %v1240
  %v2374 = vunpack.c.h.b16 %v1240
  %v2375 = vunpack.c.l.b16 %v1241
  %v2376 = vunpack.c.h.b16 %v1241
  %v2377 = vunpack.c.l.b16 %v1242
  %v2378 = vunpack.c.h.b16 %v1242
  %v2379 = vunpack.c.l.b16 %v1243
  %v2380 = vunpack.c.h.b16 %v1243
  %v2381 = vunpack.c.l.b16 %v1244
  %v2382 = vunpack.c.h.b16 %v1244
  %v2383 = vunpack.c.l.b16 %v1245
  %v2384 = vunpack.c.h.b16 %v1245
  %v2385 = vunpack.c.l.b16 %v1246
  %v2386 = vunpack.c.h.b16 %v1246
  %v2387 = vunpack.c.l.b16 %v1247
  %v2388 = vunpack.c.h.b16 %v1247
  %v2389 = vunpack.c.l.b16 %v1248
  %v2390 = vunpack.c.h.b16 %v1248
  %v2391 = vunpack.c.l.b16 %v1249
  %v2392 = vunpack.c.h.b16 %v1249
  %v2393 = vunpack.c.l.b16 %v1250
  %v2394 = vunpack.c.h.b16 %v1250
  %v2395 = vunpack.c.l.b16 %v1251
  %v2396 = vunpack.c.h.b16 %v1251
  %v2397 = vunpack.c.l.b16 %v1252
  %v2398 = vunpack.c.h.b16 %v1252
  %v2399 = vunpack.c.l.b16 %v1253
  %v2400 = vunpack.c.h.b16 %v1253
  %v2401 = vunpack.c.l.b16 %v1254
  %v2402 = vunpack.c.h.b16 %v1254
  %v2403 = vunpack.c.l.b16 %v1255
  %v2404 = vunpack.c.h.b16 %v1255
  %v2405 = vunpack.c.l.b16 %v1256
  %v2406 = vunpack.c.h.b16 %v1256
  %v2407 = vunpack.c.l.b16 %v1257
  %v2408 = vunpack.c.h.b16 %v1257
  %v2409 = vunpack.c.l.b16 %v1258
  %v2410 = vunpack.c.h.b16 %v1258
  %v2411 = vunpack.c.l.b16 %v1259
  %v2412 = vunpack.c.h.b16 %v1259
  %v2413 = vunpack.c.l.b16 %v1260
  %v2414 = vunpack.c.h.b16 %v1260
  %v2415 = vunpack.c.l.b16 %v1261
  %v2416 = vunpack.c.h.b16 %v1261
  %v2417 = vunpack.c.l.b16 %v1262
  %v2418 = vunpack.c.h.b16 %v1262
  %v2419 = vunpack.c.l.b16 %v1263
  %v2420 = vunpack.c.h.b16 %v1263
  %v2421 = vunpack.c.l.b16 %v1264
  %v2422 = vunpack.c.h.b16 %v1264
  %v2423 = vunpack.c.l.b16 %v1265
  %v2424 = vunpack.c.h.b16 %v1265
  %v2425 = vunpack.c.l.b16 %v1266
  %v2426 = vunpack.c.h.b16 %v1266
  %v2427 = vunpack.c.l.b16 %v1267
  %v2428 = vunpack.c.h.b16 %v1267
  %v2429 = vunpack.c.l.b16 %v1268
  %v2430 = vunpack.c.h.b16 %v1268
  %v2431 = vunpack.c.l.b16 %v1269
  %v2432 = vunpack.c.h.b16 %v1269
  %v2433 = vunpack.c.l.b16 %v1270
  %v2434 = vunpack.c.h.b16 %v1270
  %v2435 = vunpack.c.l.b16 %v1271
  %v2436 = vunpack.c.h.b16 %v1271
  %v2437 = vunpack.c.l.b16 %v1272
  %v2438 = vunpack.c.h.b16 %v1272
  %v2439 = vunpack.c.l.b16 %v1273
  %v2440 = vunpack.c.h.b16 %v1273
  %v2441 = vunpack.c.l.b16 %v1274
  %v2442 = vunpack.c.h.b16 %v1274
  %v2443 = vunpack.c.l.b16 %v1275
  %v2444 = vunpack.c.h.b16 %v1275
  %v2445 = vunpack.c.l.b16 %v1276
  %v2446 = vunpack.c.h.b16 %v1276
  %v2447 = vunpack.c.l.b16 %v1277
  %v2448 = vunpack.c.h.b16 %v1277
  %v2449 = vunpack.c.l.b16 %v1278
  %v2450 = vunpack.c.h.b16 %v1278
  %v2451 = vunpack.c.l.b16 %v1279
  %v2452 = vunpack.c.h.b16 %v1279
  %v2453 = vunpack.c.l.b16 %v1280
  %v2454 = vunpack.c.h.b16 %v1280
  %v2455 = vunpack.c.l.b16 %v1281
  %v2456 = vunpack.c.h.b16 %v1281
  %v2457 = vunpack.c.l.b16 %v1282
  %v2458 = vunpack.c.h.b16 %v1282
  %v2459 = vunpack.c.l.b16 %v1283
  %v2460 = vunpack.c.h.b16 %v1283
  %v2461 = vunpack.c.l.b16 %v1284
  %v2462 = vunpack.c.h.b16 %v1284
  %v2463 = vunpack.c.l.b16 %v1285
  %v2464 = vunpack.c.h.b16 %v1285
  %v2465 = vunpack.c.l.b16 %v1286
  %v2466 = vunpack.c.h.b16 %v1286
  %v2467 = vunpack.c.l.b16 %v1287
  %v2468 = vunpack.c.h.b16 %v1287
  %v2469 = vunpack.c.l.b16 %v1288
  %v2470 = vunpack.c.h.b16 %v1288
  %v2471 = vunpack.c.l.b16 %v1289
  %v2472 = vunpack.c.h.b16 %v1289
  %v2473 = vunpack.c.l.b16 %v1290
  %v2474 = vunpack.c.h.b16 %v1290
  %v2475 = vunpack.c.l.b16 %v1291
  %v2476 = vunpack.c.h.b16 %v1291
  %v2477 = vunpack.c.l.b16 %v1292
  %v2478 = vunpack.c.h.b16 %v1292
  %v2479 = vunpack.c.l.b16 %v1293
  %v2480 = vunpack.c.h.b16 %v1293
  %v2481 = vunpack.c.l.b16 %v1294
  %v2482 = vunpack.c.h.b16 %v1294
  %v2483 = vunpack.c.l.b16 %v1295
  %v2484 = vunpack.c.h.b16 %v1295
  %v2485 = vunpack.c.l.b16 %v1296
  %v2486 = vunpack.c.h.b16 %v1296
  %v2487 = vunpack.c.l.b16 %v1297
  %v2488 = vunpack.c.h.b16 %v1297
  %v2489 = vunpack.c.l.b16 %v1298
  %v2490 = vunpack.c.h.b16 %v1298
  %v2491 = vunpack.c.l.b16 %v1299
  %v2492 = vunpack.c.h.b16 %v1299
  %v2493 = vunpack.c.l.b16 %v1300
  %v2494 = vunpack.c.h.b16 %v1300
  %v2495 = vunpack.c.l.b16 %v1301
  %v2496 = vunpack.c.h.b16 %v1301
  %v2497 = vunpack.c.l.b16 %v1302
  %v2498 = vunpack.c.h.b16 %v1302
  %v2499 = vunpack.c.l.b16 %v1303
  %v2500 = vunpack.c.h.b16 %v1303
  %v2501 = vunpack.c.l.b16 %v1304
  %v2502 = vunpack.c.h.b16 %v1304
  %v2503 = vunpack.c.l.b16 %v1305
  %v2504 = vunpack.c.h.b16 %v1305
  %v2505 = vunpack.c.l.b16 %v1306
  %v2506 = vunpack.c.h.b16 %v1306
  %v2507 = vunpack.c.l.b16 %v1307
  %v2508 = vunpack.c.h.b16 %v1307
  %v2509 = vunpack.c.l.b16 %v1308
  %v2510 = vunpack.c.h.b16 %v1308
  %v2511 = vunpack.c.l.b16 %v1309
  %v2512 = vunpack.c.h.b16 %v1309
  %v2513 = vunpack.c.l.b16 %v1310
  %v2514 = vunpack.c.h.b16 %v1310
  %v2515 = vunpack.c.l.b16 %v1311
  %v2516 = vunpack.c.h.b16 %v1311
  %v2517 = vunpack.c.l.b16 %v1312
  %v2518 = vunpack.c.h.b16 %v1312
  %v2519 = vunpack.c.l.b16 %v1313
  %v2520 = vunpack.c.h.b16 %v1313
  %v2521 = vunpack.c.l.b16 %v1314
  %v2522 = vunpack.c.h.b16 %v1314
  %v2523 = vunpack.c.l.b16 %v1315
  %v2524 = vunpack.c.h.b16 %v1315
  %v2525 = vunpack.c.l.b16 %v1316
  %v2526 = vunpack.c.h.b16 %v1316
  %v2527 = vunpack.c.l.b16 %v1317
  %v2528 = vunpack.c.h.b16 %v1317
  %v2529 = vunpack.c.l.b16 %v1318
  %v2530 = vunpack.c.h.b16 %v1318
  %v2531 = vunpack.c.l.b16 %v1319
  %v2532 = vunpack.c.h.b16 %v1319
  %v2533 = vunpack.c.l.b16 %v1320
  %v2534 = vunpack.c.h.b16 %v1320
  %v2535 = vunpack.c.l.b16 %v1321
  %v2536 = vunpack.c.h.b16 %v1321
  %v2537 = vunpack.c.l.b16 %v1322
  %v2538 = vunpack.c.h.b16 %v1322
  %v2539 = vunpack.c.l.b16 %v1323
  %v2540 = vunpack.c.h.b16 %v1323
  %v2541 = vunpack.c.l.b16 %v1324
  %v2542 = vunpack.c.h.b16 %v1324
  %v2543 = vunpack.c.l.b16 %v1325
  %v2544 = vunpack.c.h.b16 %v1325
  %v2545 = vunpack.c.l.b16 %v1326
  %v2546 = vunpack.c.h.b16 %v1326
  %v2547 = vunpack.c.l.b16 %v1327
  %v2548 = vunpack.c.h.b16 %v1327
  %v2549 = vunpack.c.l.b16 %v1328
  %v2550 = vunpack.c.h.b16 %v1328
  %v2551 = vunpack.c.l.b16 %v1329
  %v2552 = vunpack.c.h.b16 %v1329
  %v2553 = vunpack.c.l.b16 %v1330
  %v2554 = vunpack.c.h.b16 %v1330
  %v2555 = vunpack.c.l.b16 %v1331
  %v2556 = vunpack.c.h.b16 %v1331
  %v2557 = vunpack.c.l.b16 %v1332
  %v2558 = vunpack.c.h.b16 %v1332
  %v2559 = vunpack.c.l.b16 %v1333
  %v2560 = vunpack.c.h.b16 %v1333
  %v2561 = vunpack.c.l.b16 %v1334
  %v2562 = vunpack.c.h.b16 %v1334
  %v2563 = vunpack.c.l.b16 %v1335
  %v2564 = vunpack.c.h.b16 %v1335
  %v2565 = vunpack.c.l.b16 %v1336
  %v2566 = vunpack.c.h.b16 %v1336
  %v2567 = vunpack.c.l.b16 %v1337
  %v2568 = vunpack.c.h.b16 %v1337
  %v2569 = vunpack.c.l.b16 %v1338
  %v2570 = vunpack.c.h.b16 %v1338
  %v2571 = vunpack.c.l.b16 %v1339
  %v2572 = vunpack.c.h.b16 %v1339
  %v2573 = vunpack.c.l.b16 %v1340
  %v2574 = vunpack.c.h.b16 %v1340
  %v2575 = vunpack.c.l.b16 %v1341
  %v2576 = vunpack.c.h.b16 %v1341
  %v2577 = vunpack.c.l.b16 %v1342
  %v2578 = vunpack.c.h.b16 %v1342
  %v2579 = vpack.c.b16 %v1765, %v1763
  %v2580 = vpack.c.b16 %v1766, %v1764
  %v2581 = vpack.c.b16 %v1769, %v1767
  %v2582 = vpack.c.b16 %v1770, %v1768
  %v2583 = vpack.c.b16 %v1773, %v1771
  %v2584 = vpack.c.b16 %v1774, %v1772
  %v2585 = vpack.c.b16 %v1777, %v1775
  %v2586 = vpack.c.b16 %v1778, %v1776
  %v2587 = vpack.c.b16 %v1781, %v1779
  %v2588 = vpack.c.b16 %v1782, %v1780
  %v2589 = vpack.c.b16 %v1785, %v1783
  %v2590 = vpack.c.b16 %v1786, %v1784
  %v2591 = vpack.c.b16 %v1789, %v1787
  %v2592 = vpack.c.b16 %v1790, %v1788
  %v2593 = vpack.c.b16 %v1793, %v1791
  %v2594 = vpack.c.b16 %v1794, %v1792
  %v2595 = vpack.c.b16 %v1797, %v1795
  %v2596 = vpack.c.b16 %v1798, %v1796
  %v2597 = vpack.c.b16 %v1801, %v1799
  %v2598 = vpack.c.b16 %v1802, %v1800
  %v2599 = vpack.c.b16 %v1805, %v1803
  %v2600 = vpack.c.b16 %v1806, %v1804
  %v2601 = vpack.c.b16 %v1809, %v1807
  %v2602 = vpack.c.b16 %v1810, %v1808
  %v2603 = vpack.c.b16 %v1813, %v1811
  %v2604 = vpack.c.b16 %v1814, %v1812
  %v2605 = vpack.c.b16 %v1817, %v1815
  %v2606 = vpack.c.b16 %v1818, %v1816
  %v2607 = vpack.c.b16 %v1821, %v1819
  %v2608 = vpack.c.b16 %v1822, %v1820
  %v2609 = vpack.c.b16 %v1825, %v1823
  %v2610 = vpack.c.b16 %v1826, %v1824
  %v2611 = vpack.c.b16 %v1829, %v1827
  %v2612 = vpack.c.b16 %v1830, %v1828
  %v2613 = vpack.c.b16 %v1833, %v1831
  %v2614 = vpack.c.b16 %v1834, %v1832
  %v2615 = vpack.c.b16 %v1837, %v1835
  %v2616 = vpack.c.b16 %v1838, %v1836
  %v2617 = vpack.c.b16 %v1841, %v1839
  %v2618 = vpack.c.b16 %v1842, %v1840
  %v2619 = vpack.c.b16 %v1845, %v1843
  %v2620 = vpack.c.b16 %v1846, %v1844
  %v2621 = vpack.c.b16 %v1849, %v1847
  %v2622 = vpack.c.b16 %v1850, %v1848
  %v2623 = vpack.c.b16 %v1853, %v1851
  %v2624 = vpack.c.b16 %v1854, %v1852
  %v2625 = vpack.c.b16 %v1857, %v1855
  %v2626 = vpack.c.b16 %v1858, %v1856
  %v2627 = vpack.c.b16 %v1861, %v1859
  %v2628 = vpack.c.b16 %v1862, %v1860
  %v2629 = vpack.c.b16 %v1865, %v1863
  %v2630 = vpack.c.b16 %v1866, %v1864
  %v2631 = vpack.c.b16 %v1869, %v1867
  %v2632 = vpack.c.b16 %v1870, %v1868
  %v2633 = vpack.c.b16 %v1873, %v1871
  %v2634 = vpack.c.b16 %v1874, %v1872
  %v2635 = vpack.c.b16 %v1877, %v1875
  %v2636 = vpack.c.b16 %v1878, %v1876
  %v2637 = vpack.c.b16 %v1881, %v1879
  %v2638 = vpack.c.b16 %v1882, %v1880
  %v2639 = vpack.c.b16 %v1885, %v1883
  %v2640 = vpack.c.b16 %v1886, %v1884
  %v2641 = vpack.c.b16 %v1889, %v1887
  %v2642 = vpack.c.b16 %v1890, %v1888
  %v2643 = vpack.c.b16 %v1893, %v1891
  %v2644 = vpack.c.b16 %v1894, %v1892
  %v2645 = vpack.c.b16 %v1897, %v1895
  %v2646 = vpack.c.b16 %v1898, %v1896
  %v2647 = vpack.c.b16 %v1901, %v1899
  %v2648 = vpack.c.b16 %v1902, %v1900
  %v2649 = vpack.c.b16 %v1905, %v1903
  %v2650 = vpack.c.b16 %v1906, %v1904
  %v2651 = vpack.c.b16 %v1909, %v1907
  %v2652 = vpack.c.b16 %v1910, %v1908
  %v2653 = vpack.c.b16 %v1913, %v1911
  %v2654 = vpack.c.b16 %v1914, %v1912
  %v2655 = vpack.c.b16 %v1917, %v1915
  %v2656 = vpack.c.b16 %v1918, %v1916
  %v2657 = vpack.c.b16 %v1921, %v1919
  %v2658 = vpack.c.b16 %v1922, %v1920
  %v2659 = vpack.c.b16 %v1925, %v1923
  %v2660 = vpack.c.b16 %v1926, %v1924
  %v2661 = vpack.c.b16 %v1929, %v1927
  %v2662 = vpack.c.b16 %v1930, %v1928
  %v2663 = vpack.c.b16 %v1933, %v1931
  %v2664 = vpack.c.b16 %v1934, %v1932
  %v2665 = vpack.c.b16 %v1937, %v1935
  %v2666 = vpack.c.b16 %v1938, %v1936
  %v2667 = vpack.c.b16 %v1941, %v1939
  %v2668 = vpack.c.b16 %v1942, %v1940
  %v2669 = vpack.c.b16 %v1945, %v1943
  %v2670 = vpack.c.b16 %v1946, %v1944
  %v2671 = vpack.c.b16 %v1949, %v1947
  %v2672 = vpack.c.b16 %v1950, %v1948
  %v2673 = vpack.c.b16 %v1953, %v1951
  %v2674 = vpack.c.b16 %v1954, %v1952
  %v2675 = vpack.c.b16 %v1957, %v1955
  %v2676 = vpack.c.b16 %v1958, %v1956
  %v2677 = vpack.c.b16 %v1961, %v1959
  %v2678 = vpack.c.b16 %v1962, %v1960
  %v2679 = vpack.c.b16 %v1965, %v1963
  %v2680 = vpack.c.b16 %v1966, %v1964
  %v2681 = vpack.c.b16 %v1969, %v1967
  %v2682 = vpack.c.b16 %v1970, %v1968
  %v2683 = vpack.c.b16 %v1973, %v1971
  %v2684 = vpack.c.b16 %v1974, %v1972
  %v2685 = vpack.c.b16 %v1977, %v1975
  %v2686 = vpack.c.b16 %v1978, %v1976
  %v2687 = vpack.c.b16 %v1981, %v1979
  %v2688 = vpack.c.b16 %v1982, %v1980
  %v2689 = vpack.c.b16 %v1985, %v1983
  %v2690 = vpack.c.b16 %v1986, %v1984
  %v2691 = vpack.c.b16 %v1989, %v1987
  %v2692 = vpack.c.b16 %v1990, %v1988
  %v2693 = vpack.c.b16 %v1993, %v1991
  %v2694 = vpack.c.b16 %v1994, %v1992
  %v2695 = vpack.c.b16 %v1997, %v1995
  %v2696 = vpack.c.b16 %v1998, %v1996
  %v2697 = vpack.c.b16 %v2001, %v1999
  %v2698 = vpack.c.b16 %v2002, %v2000
  %v2699 = vpack.c.b16 %v2005, %v2003
  %v2700 = vpack.c.b16 %v2006, %v2004
  %v2701 = vpack.c.b16 %v2009, %v2007
  %v2702 = vpack.c.b16 %v2010, %v2008
  %v2703 = vpack.c.b16 %v2013, %v2011
  %v2704 = vpack.c.b16 %v2014, %v2012
  %v2705 = vpack.c.b16 %v2017, %v2015
  %v2706 = vpack.c.b16 %v2018, %v2016
  %v2707 = vpack.c.b16 %v2021, %v2019
  %v2708 = vpack.c.b16 %v2022, %v2020
  %v2709 = vpack.c.b16 %v2025, %v2023
  %v2710 = vpack.c.b16 %v2026, %v2024
  %v2711 = vpack.c.b16 %v2029, %v2027
  %v2712 = vpack.c.b16 %v2030, %v2028
  %v2713 = vpack.c.b16 %v2033, %v2031
  %v2714 = vpack.c.b16 %v2034, %v2032
  %v2715 = vpack.c.b16 %v2037, %v2035
  %v2716 = vpack.c.b16 %v2038, %v2036
  %v2717 = vpack.c.b16 %v2041, %v2039
  %v2718 = vpack.c.b16 %v2042, %v2040
  %v2719 = vpack.c.b16 %v2045, %v2043
  %v2720 = vpack.c.b16 %v2046, %v2044
  %v2721 = vpack.c.b16 %v2049, %v2047
  %v2722 = vpack.c.b16 %v2050, %v2048
  %v2723 = vpack.c.b16 %v2053, %v2051
  %v2724 = vpack.c.b16 %v2054, %v2052
  %v2725 = vpack.c.b16 %v2057, %v2055
  %v2726 = vpack.c.b16 %v2058, %v2056
  %v2727 = vpack.c.b16 %v2061, %v2059
  %v2728 = vpack.c.b16 %v2062, %v2060
  %v2729 = vpack.c.b16 %v2065, %v2063
  %v2730 = vpack.c.b16 %v2066, %v2064
  %v2731 = vpack.c.b16 %v2069, %v2067
  %v2732 = vpack.c.b16 %v2070, %v2068
  %v2733 = vpack.c.b16 %v2073, %v2071
  %v2734 = vpack.c.b16 %v2074, %v2072
  %v2735 = vpack.c.b16 %v2077, %v2075
  %v2736 = vpack.c.b16 %v2078, %v2076
  %v2737 = vpack.c.b16 %v2081, %v2079
  %v2738 = vpack.c.b16 %v2082, %v2080
  %v2739 = vpack.c.b16 %v2085, %v2083
  %v2740 = vpack.c.b16 %v2086, %v2084
  %v2741 = vpack.c.b16 %v2089, %v2087
  %v2742 = vpack.c.b16 %v2090, %v2088
  %v2743 = vpack.c.b16 %v2093, %v2091
  %v2744 = vpack.c.b16 %v2094, %v2092
  %v2745 = vpack.c.b16 %v2097, %v2095
  %v2746 = vpack.c.b16 %v2098, %v2096
  %v2747 = vpack.c.b16 %v2101, %v2099
  %v2748 = vpack.c.b16 %v2102, %v2100
  %v2749 = vpack.c.b16 %v2105, %v2103
  %v2750 = vpack.c.b16 %v2106, %v2104
  %v2751 = vpack.c.b16 %v2109, %v2107
  %v2752 = vpack.c.b16 %v2110, %v2108
  %v2753 = vpack.c.b16 %v2113, %v2111
  %v2754 = vpack.c.b16 %v2114, %v2112
  %v2755 = vpack.c.b16 %v2117, %v2115
  %v2756 = vpack.c.b16 %v2118, %v2116
  %v2757 = vpack.c.b16 %v2121, %v2119
  %v2758 = vpack.c.b16 %v2122, %v2120
  %v2759 = vpack.c.b16 %v2125, %v2123
  %v2760 = vpack.c.b16 %v2126, %v2124
  %v2761 = vpack.c.b16 %v2129, %v2127
  %v2762 = vpack.c.b16 %v2130, %v2128
  %v2763 = vpack.c.b16 %v2133, %v2131
  %v2764 = vpack.c.b16 %v2134, %v2132
  %v2765 = vpack.c.b16 %v2137, %v2135
  %v2766 = vpack.c.b16 %v2138, %v2136
  %v2767 = vpack.c.b16 %v2141, %v2139
  %v2768 = vpack.c.b16 %v2142, %v2140
  %v2769 = vpack.c.b16 %v2145, %v2143
  %v2770 = vpack.c.b16 %v2146, %v2144
  %v2771 = vpack.c.b16 %v2149, %v2147
  %v2772 = vpack.c.b16 %v2150, %v2148
  %v2773 = vpack.c.b16 %v2153, %v2151
  %v2774 = vpack.c.b16 %v2154, %v2152
  %v2775 = vpack.c.b16 %v2157, %v2155
  %v2776 = vpack.c.b16 %v2158, %v2156
  %v2777 = vpack.c.b16 %v2161, %v2159
  %v2778 = vpack.c.b16 %v2162, %v2160
  %v2779 = vpack.c.b16 %v2165, %v2163
  %v2780 = vpack.c.b16 %v2166, %v2164
  %v2781 = vpack.c.b16 %v2169, %v2167
  %v2782 = vpack.c.b16 %v2170, %v2168
  %v2783 = vpack.c.b16 %v2173, %v2171
  %v2784 = vpack.c.b16 %v2174, %v2172
  %v2785 = vpack.c.b16 %v2177, %v2175
  %v2786 = vpack.c.b16 %v2178, %v2176
  %v2787 = vpack.c.b16 %v2181, %v2179
  %v2788 = vpack.c.b16 %v2182, %v2180
  %v2789 = vpack.c.b16 %v2185, %v2183
  %v2790 = vpack.c.b16 %v2186, %v2184
  %v2791 = vpack.c.b16 %v2189, %v2187
  %v2792 = vpack.c.b16 %v2190, %v2188
  %v2793 = vpack.c.b16 %v2193, %v2191
  %v2794 = vpack.c.b16 %v2194, %v2192
  %v2795 = vpack.c.b16 %v2197, %v2195
  %v2796 = vpack.c.b16 %v2198, %v2196
  %v2797 = vpack.c.b16 %v2201, %v2199
  %v2798 = vpack.c.b16 %v2202, %v2200
  %v2799 = vpack.c.b16 %v2205, %v2203
  %v2800 = vpack.c.b16 %v2206, %v2204
  %v2801 = vpack.c.b16 %v2209, %v2207
  %v2802 = vpack.c.b16 %v2210, %v2208
  %v2803 = vpack.c.b16 %v2213, %v2211
  %v2804 = vpack.c.b16 %v2214, %v2212
  %v2805 = vpack.c.b16 %v2217, %v2215
  %v2806 = vpack.c.b16 %v2218, %v2216
  %v2807 = vpack.c.b16 %v2221, %v2219
  %v2808 = vpack.c.b16 %v2222, %v2220
  %v2809 = vpack.c.b16 %v2225, %v2223
  %v2810 = vpack.c.b16 %v2226, %v2224
  %v2811 = vpack.c.b16 %v2229, %v2227
  %v2812 = vpack.c.b16 %v2230, %v2228
  %v2813 = vpack.c.b16 %v2233, %v2231
  %v2814 = vpack.c.b16 %v2234, %v2232
  %v2815 = vpack.c.b16 %v2237, %v2235
  %v2816 = vpack.c.b16 %v2238, %v2236
  %v2817 = vpack.c.b16 %v2241, %v2239
  %v2818 = vpack.c.b16 %v2242, %v2240
  %v2819 = vpack.c.b16 %v2245, %v2243
  %v2820 = vpack.c.b16 %v2246, %v2244
  %v2821 = vpack.c.b16 %v2249, %v2247
  %v2822 = vpack.c.b16 %v2250, %v2248
  %v2823 = vpack.c.b16 %v2253, %v2251
  %v2824 = vpack.c.b16 %v2254, %v2252
  %v2825 = vpack.c.b16 %v2257, %v2255
  %v2826 = vpack.c.b16 %v2258, %v2256
  %v2827 = vpack.c.b16 %v2261, %v2259
  %v2828 = vpack.c.b16 %v2262, %v2260
  %v2829 = vpack.c.b16 %v2265, %v2263
  %v2830 = vpack.c.b16 %v2266, %v2264
  %v2831 = vpack.c.b16 %v2269, %v2267
  %v2832 = vpack.c.b16 %v2270, %v2268
  %v2833 = vpack.c.b16 %v2273, %v2271
  %v2834 = vpack.c.b16 %v2274, %v2272
  %v2835 = vpack.c.b16 %v2277, %v2275
  %v2836 = vpack.c.b16 %v2278, %v2276
  %v2837 = vpack.c.b16 %v2281, %v2279
  %v2838 = vpack.c.b16 %v2282, %v2280
  %v2839 = vpack.c.b16 %v2285, %v2283
  %v2840 = vpack.c.b16 %v2286, %v2284
  %v2841 = vpack.c.b16 %v2289, %v2287
  %v2842 = vpack.c.b16 %v2290, %v2288
  %v2843 = vpack.c.b16 %v2293, %v2291
  %v2844 = vpack.c.b16 %v2294, %v2292
  %v2845 = vpack.c.b16 %v2297, %v2295
  %v2846 = vpack.c.b16 %v2298, %v2296
  %v2847 = vpack.c.b16 %v2301, %v2299
  %v2848 = vpack.c.b16 %v2302, %v2300
  %v2849 = vpack.c.b16 %v2305, %v2303
  %v2850 = vpack.c.b16 %v2306, %v2304
  %v2851 = vpack.c.b16 %v2309, %v2307
  %v2852 = vpack.c.b16 %v2310, %v2308
  %v2853 = vpack.c.b16 %v2313, %v2311
  %v2854 = vpack.c.b16 %v2314, %v2312
  %v2855 = vpack.c.b16 %v2317, %v2315
  %v2856 = vpack.c.b16 %v2318, %v2316
  %v2857 = vpack.c.b16 %v2321, %v2319
  %v2858 = vpack.c.b16 %v2322, %v2320
  %v2859 = vpack.c.b16 %v2325, %v2323
  %v2860 = vpack.c.b16 %v2326, %v2324
  %v2861 = vpack.c.b16 %v2329, %v2327
  %v2862 = vpack.c.b16 %v2330, %v2328
  %v2863 = vpack.c.b16 %v2333, %v2331
  %v2864 = vpack.c.b16 %v2334, %v2332
  %v2865 = vpack.c.b16 %v2337, %v2335
  %v2866 = vpack.c.b16 %v2338, %v2336
  %v2867 = vpack.c.b16 %v2341, %v2339
  %v2868 = vpack.c.b16 %v2342, %v2340
  %v2869 = vpack.c.b16 %v2345, %v2343
  %v2870 = vpack.c.b16 %v2346, %v2344
  %v2871 = vpack.c.b16 %v2349, %v2347
  %v2872 = vpack.c.b16 %v2350, %v2348
  %v2873 = vpack.c.b16 %v2353, %v2351
  %v2874 = vpack.c.b16 %v2354, %v2352
  %v2875 = vpack.c.b16 %v2357, %v2355
  %v2876 = vpack.c.b16 %v2358, %v2356
  %v2877 = vpack.c.b16 %v2361, %v2359
  %v2878 = vpack.c.b16 %v2362, %v2360
  %v2879 = vpack.c.b16 %v2365, %v2363
  %v2880 = vpack.c.b16 %v2366, %v2364
  %v2881 = vpack.c.b16 %v2369, %v2367
  %v2882 = vpack.c.b16 %v2370, %v2368
  %v2883 = vpack.c.b16 %v2373, %v2371
  %v2884 = vpack.c.b16 %v2374, %v2372
  %v2885 = vpack.c.b16 %v2377, %v2375
  %v2886 = vpack.c.b16 %v2378, %v2376
  %v2887 = vpack.c.b16 %v2381, %v2379
  %v2888 = vpack.c.b16 %v2382, %v2380
  %v2889 = vpack.c.b16 %v2385, %v2383
  %v2890 = vpack.c.b16 %v2386, %v2384
  %v2891 = vpack.c.b16 %v2389, %v2387
  %v2892 = vpack.c.b16 %v2390, %v2388
  %v2893 = vpack.c.b16 %v2393, %v2391
  %v2894 = vpack.c.b16 %v2394, %v2392
  %v2895 = vpack.c.b16 %v2397, %v2395
  %v2896 = vpack.c.b16 %v2398, %v2396
  %v2897 = vpack.c.b16 %v2401, %v2399
  %v2898 = vpack.c.b16 %v2402, %v2400
  %v2899 = vpack.c.b16 %v2405, %v2403
  %v2900 = vpack.c.b16 %v2406, %v2404
  %v2901 = vpack.c.b16 %v2409, %v2407
  %v2902 = vpack.c.b16 %v2410, %v2408
  %v2903 = vpack.c.b16 %v2413, %v2411
  %v2904 = vpack.c.b16 %v2414, %v2412
  %v2905 = vpack.c.b16 %v2417, %v2415
  %v2906 = vpack.c.b16 %v2418, %v2416
  %v2907 = vpack.c.b16 %v2421, %v2419
  %v2908 = vpack.c.b16 %v2422, %v2420
  %v2909 = vpack.c.b16 %v2425, %v2423
  %v2910 = vpack.c.b16 %v2426, %v2424
  %v2911 = vpack.c.b16 %v2429, %v2427
  %v2912 = vpack.c.b16 %v2430, %v2428
  %v2913 = vpack.c.b16 %v2433, %v2431
  %v2914 = vpack.c.b16 %v2434, %v2432
  %v2915 = vpack.c.b16 %v2437, %v2435
  %v2916 = vpack.c.b16 %v2438, %v2436
  %v2917 = vpack.c.b16 %v2441, %v2439
  %v2918 = vpack.c.b16 %v2442, %v2440
  %v2919 = vpack.c.b16 %v2445, %v2443
  %v2920 = vpack.c.b16 %v2446, %v2444
  %v2921 = vpack.c.b16 %v2449, %v2447
  %v2922 = vpack.c.b16 %v2450, %v2448
  %v2923 = vpack.c.b16 %v2453, %v2451
  %v2924 = vpack.c.b16 %v2454, %v2452
  %v2925 = vpack.c.b16 %v2457, %v2455
  %v2926 = vpack.c.b16 %v2458, %v2456
  %v2927 = vpack.c.b16 %v2461, %v2459
  %v2928 = vpack.c.b16 %v2462, %v2460
  %v2929 = vpack.c.b16 %v2465, %v2463
  %v2930 = vpack.c.b16 %v2466, %v2464
  %v2931 = vpack.c.b16 %v2469, %v2467
  %v2932 = vpack.c.b16 %v2470, %v2468
  %v2933 = vpack.c.b16 %v2473, %v2471
  %v2934 = vpack.c.b16 %v2474, %v2472
  %v2935 = vpack.c.b16 %v2477, %v2475
  %v2936 = vpack.c.b16 %v2478, %v2476
  %v2937 = vpack.c.b16 %v2481, %v2479
  %v2938 = vpack.c.b16 %v2482, %v2480
  %v2939 = vpack.c.b16 %v2485, %v2483
  %v2940 = vpack.c.b16 %v2486, %v2484
  %v2941 = vpack.c.b16 %v2489, %v2487
  %v2942 = vpack.c.b16 %v2490, %v2488
  %v2943 = vpack.c.b16 %v2493, %v2491
  %v2944 = vpack.c.b16 %v2494, %v2492
  %v2945 = vpack.c.b16 %v2497, %v2495
  %v2946 = vpack.c.b16 %v2498, %v2496
  %v2947 = vpack.c.b16 %v2501, %v2499
  %v2948 = vpack.c.b16 %v2502, %v2500
  %v2949 = vpack.c.b16 %v2505, %v2503
  %v2950 = vpack.c.b16 %v2506, %v2504
  %v2951 = vpack.c.b16 %v2509, %v2507
  %v2952 = vpack.c.b16 %v2510, %v2508
  %v2953 = vpack.c.b16 %v2513, %v2511
  %v2954 = vpack.c.b16 %v2514, %v2512
  %v2955 = vpack.c.b16 %v2517, %v2515
  %v2956 = vpack.c.b16 %v2518, %v2516
  %v2957 = vpack.c.b16 %v2521, %v2519
  %v2958 = vpack.c.b16 %v2522, %v2520
  %v2959 = vpack.c.b16 %v2525, %v2523
  %v2960 = vpack.c.b16 %v2526, %v2524
  %v2961 = vpack.c.b16 %v2529, %v2527
  %v2962 = vpack.c.b16 %v2530, %v2528
  %v2963 = vpack.c.b16 %v2533, %v2531
  %v2964 = vpack.c.b16 %v2534, %v2532
  %v2965 = vpack.c.b16 %v2537, %v2535
  %v2966 = vpack.c.b16 %v2538, %v2536
  %v2967 = vpack.c.b16 %v2541, %v2539
  %v2968 = vpack.c.b16 %v2542, %v2540
  %v2969 = vpack.c.b16 %v2545, %v2543
  %v2970 = vpack.c.b16 %v2546, %v2544
  %v2971 = vpack.c.b16 %v2549, %v2547
  %v2972 = vpack.c.b16 %v2550, %v2548
  %v2973 = vpack.c.b16 %v2553, %v2551
  %v2974 = vpack.c.b16 %v2554, %v2552
  %v2975 = vpack.c.b16 %v2557, %v2555
  %v2976 = vpack.c.b16 %v2558, %v2556
  %v2977 = vpack.c.b16 %v2561, %v2559
  %v2978 = vpack.c.b16 %v2562, %v2560
  %v2979 = vpack.c.b16 %v2565, %v2563
  %v2980 = vpack.c.b16 %v2566, %v2564
  %v2981 = vpack.c.b16 %v2569, %v2567
  %v2982 = vpack.c.b16 %v2570, %v2568
  %v2983 = vpack.c.b16 %v2573, %v2571
  %v2984 = vpack.c.b16 %v2574, %v2572
  %v2985 = vpack.c.b16 %v2577, %v2575
  %v2986 = vpack.c.b16 %v2578, %v2576
  %v3396 = vsel %vm881, %v934, 0
  %3398 = vmatprep.subr.bf16.mxu0 %v2580
  %3399 = vmatpush1.bf16.msra.mxu0 %v2579
  %3400 = vmatprep.subr.bf16.mxu0 %v2582
  %3401 = vmatpush1.bf16.msra.mxu0 %v2581
  %3402 = vmatprep.subr.bf16.mxu0 %v2584
  %3403 = vmatpush1.bf16.msra.mxu0 %v2583
  %3404 = vmatprep.subr.bf16.mxu0 %v2586
  %3405 = vmatpush1.bf16.msra.mxu0 %v2585
  %3406 = vmatprep.subr.bf16.mxu0 %v2588
  %3407 = vmatpush1.bf16.msra.mxu0 %v2587
  %3408 = vmatprep.subr.bf16.mxu0 %v2590
  %3409 = vmatpush1.bf16.msra.mxu0 %v2589
  %3410 = vmatprep.subr.bf16.mxu0 %v2592
  %3411 = vmatpush1.bf16.msra.mxu0 %v2591
  %3412 = vmatprep.subr.bf16.mxu0 %v2594
  %3413 = vmatpush1.bf16.msra.mxu0 %v2593
  %3414 = vmatprep.subr.bf16.mxu0 %v2596
  %3415 = vmatpush1.bf16.msra.mxu0 %v2595
  %3416 = vmatprep.subr.bf16.mxu0 %v2598
  %3417 = vmatpush1.bf16.msra.mxu0 %v2597
  %3418 = vmatprep.subr.bf16.mxu0 %v2600
  %3419 = vmatpush1.bf16.msra.mxu0 %v2599
  %3420 = vmatprep.subr.bf16.mxu0 %v2602
  %3421 = vmatpush1.bf16.msra.mxu0 %v2601
  %3422 = vmatprep.subr.bf16.mxu0 %v2604
  %3423 = vmatpush1.bf16.msra.mxu0 %v2603
  %3424 = vmatprep.subr.bf16.mxu0 %v2606
  %3425 = vmatpush1.bf16.msra.mxu0 %v2605
  %3426 = vmatprep.subr.bf16.mxu0 %v2608
  %3427 = vmatpush1.bf16.msra.mxu0 %v2607
  %3428 = vmatprep.subr.bf16.mxu0 %v2610
  %3429 = vmatpush1.bf16.msra.mxu0 %v2609
  %3430 = vmatprep.mubr.bf16.mxu0 %v910
  %3431 = vmatmul.mubr.bf16.gmra.mrb[0].mxu0 %v909
  %v3432 = vpop.f32.mrb[0].mxu0
  %v3433 = vadd.f32 %v1348, %v3432
  %v3434 = vpop.f32.mrb[0].mxu0
  %v3435 = vadd.f32 %v1352, %v3434
  %v3436 = vpop.f32.mrb[0].mxu0
  %v3437 = vpop.f32.mrb[0].mxu0
  %3438 = vdwg.mxu0
  %3439 = vmatprep.subr.bf16.mxu0 %v2612
  %3440 = vmatpush1.bf16.msra.mxu0 %v2611
  %3441 = vmatprep.subr.bf16.mxu0 %v2614
  %3442 = vmatpush1.bf16.msra.mxu0 %v2613
  %3443 = vmatprep.subr.bf16.mxu0 %v2616
  %3444 = vmatpush1.bf16.msra.mxu0 %v2615
  %3445 = vmatprep.subr.bf16.mxu0 %v2618
  %3446 = vmatpush1.bf16.msra.mxu0 %v2617
  %3447 = vmatprep.subr.bf16.mxu0 %v2620
  %3448 = vmatpush1.bf16.msra.mxu0 %v2619
  %3449 = vmatprep.subr.bf16.mxu0 %v2622
  %3450 = vmatpush1.bf16.msra.mxu0 %v2621
  %3451 = vmatprep.subr.bf16.mxu0 %v2624
  %3452 = vmatpush1.bf16.msra.mxu0 %v2623
  %3453 = vmatprep.subr.bf16.mxu0 %v2626
  %3454 = vmatpush1.bf16.msra.mxu0 %v2625
  %3455 = vmatprep.subr.bf16.mxu0 %v2628
  %3456 = vmatpush1.bf16.msra.mxu0 %v2627
  %3457 = vmatprep.subr.bf16.mxu0 %v2630
  %3458 = vmatpush1.bf16.msra.mxu0 %v2629
  %3459 = vmatprep.subr.bf16.mxu0 %v2632
  %3460 = vmatpush1.bf16.msra.mxu0 %v2631
  %3461 = vmatprep.subr.bf16.mxu0 %v2634
  %3462 = vmatpush1.bf16.msra.mxu0 %v2633
  %3463 = vmatprep.subr.bf16.mxu0 %v2636
  %3464 = vmatpush1.bf16.msra.mxu0 %v2635
  %3465 = vmatprep.subr.bf16.mxu0 %v2638
  %3466 = vmatpush1.bf16.msra.mxu0 %v2637
  %3467 = vmatprep.subr.bf16.mxu0 %v2640
  %3468 = vmatpush1.bf16.msra.mxu0 %v2639
  %3469 = vmatprep.subr.bf16.mxu0 %v2642
  %3470 = vmatpush1.bf16.msra.mxu0 %v2641
  %3471 = vmatprep.mubr.bf16.mxu0 %v912
  %3472 = vmatmul.mubr.bf16.gmra.mrb[0].mxu0 %v911
  %v3473 = vpop.f32.mrb[0].mxu0
  %v3474 = vadd.f32 %v3433, %v3473
  %v3475 = vpop.f32.mrb[0].mxu0
  %v3476 = vadd.f32 %v3435, %v3475
  %v3477 = vpop.f32.mrb[0].mxu0
  %v3478 = vpop.f32.mrb[0].mxu0
  %3479 = vdwg.mxu0
  %3480 = vmatprep.subr.bf16.mxu0 %v2644
  %3481 = vmatpush1.bf16.msra.mxu0 %v2643
  %3482 = vmatprep.subr.bf16.mxu0 %v2646
  %3483 = vmatpush1.bf16.msra.mxu0 %v2645
  %3484 = vmatprep.subr.bf16.mxu0 %v2648
  %3485 = vmatpush1.bf16.msra.mxu0 %v2647
  %3486 = vmatprep.subr.bf16.mxu0 %v2650
  %3487 = vmatpush1.bf16.msra.mxu0 %v2649
  %3488 = vmatprep.subr.bf16.mxu0 %v2652
  %3489 = vmatpush1.bf16.msra.mxu0 %v2651
  %3490 = vmatprep.subr.bf16.mxu0 %v2654
  %3491 = vmatpush1.bf16.msra.mxu0 %v2653
  %3492 = vmatprep.subr.bf16.mxu0 %v2656
  %3493 = vmatpush1.bf16.msra.mxu0 %v2655
  %3494 = vmatprep.subr.bf16.mxu0 %v2658
  %3495 = vmatpush1.bf16.msra.mxu0 %v2657
  %3496 = vmatprep.subr.bf16.mxu0 %v2660
  %3497 = vmatpush1.bf16.msra.mxu0 %v2659
  %3498 = vmatprep.subr.bf16.mxu0 %v2662
  %3499 = vmatpush1.bf16.msra.mxu0 %v2661
  %3500 = vmatprep.subr.bf16.mxu0 %v2664
  %3501 = vmatpush1.bf16.msra.mxu0 %v2663
  %3502 = vmatprep.subr.bf16.mxu0 %v2666
  %3503 = vmatpush1.bf16.msra.mxu0 %v2665
  %3504 = vmatprep.subr.bf16.mxu0 %v2668
  %3505 = vmatpush1.bf16.msra.mxu0 %v2667
  %3506 = vmatprep.subr.bf16.mxu0 %v2670
  %3507 = vmatpush1.bf16.msra.mxu0 %v2669
  %3508 = vmatprep.subr.bf16.mxu0 %v2672
  %3509 = vmatpush1.bf16.msra.mxu0 %v2671
  %3510 = vmatprep.subr.bf16.mxu0 %v2674
  %3511 = vmatpush1.bf16.msra.mxu0 %v2673
  %3512 = vmatprep.mubr.bf16.mxu0 %v914
  %3513 = vmatmul.mubr.bf16.gmra.mrb[0].mxu0 %v913
  %v3514 = vpop.f32.mrb[0].mxu0
  %v3515 = vadd.f32 %v3474, %v3514
  %v3516 = vpop.f32.mrb[0].mxu0
  %v3517 = vadd.f32 %v3476, %v3516
  %v3518 = vpop.f32.mrb[0].mxu0
  %v3519 = vpop.f32.mrb[0].mxu0
  %3520 = vdwg.mxu0
  %3521 = vmatprep.subr.bf16.mxu0 %v2676
  %3522 = vmatpush1.bf16.msra.mxu0 %v2675
  %3523 = vmatprep.subr.bf16.mxu0 %v2678
  %3524 = vmatpush1.bf16.msra.mxu0 %v2677
  %3525 = vmatprep.subr.bf16.mxu0 %v2680
  %3526 = vmatpush1.bf16.msra.mxu0 %v2679
  %3527 = vmatprep.subr.bf16.mxu0 %v2682
  %3528 = vmatpush1.bf16.msra.mxu0 %v2681
  %3529 = vmatprep.subr.bf16.mxu0 %v2684
  %3530 = vmatpush1.bf16.msra.mxu0 %v2683
  %3531 = vmatprep.subr.bf16.mxu0 %v2686
  %3532 = vmatpush1.bf16.msra.mxu0 %v2685
  %3533 = vmatprep.subr.bf16.mxu0 %v2688
  %3534 = vmatpush1.bf16.msra.mxu0 %v2687
  %3535 = vmatprep.subr.bf16.mxu0 %v2690
  %3536 = vmatpush1.bf16.msra.mxu0 %v2689
  %3537 = vmatprep.subr.bf16.mxu0 %v2692
  %3538 = vmatpush1.bf16.msra.mxu0 %v2691
  %3539 = vmatprep.subr.bf16.mxu0 %v2694
  %3540 = vmatpush1.bf16.msra.mxu0 %v2693
  %3541 = vmatprep.subr.bf16.mxu0 %v2696
  %3542 = vmatpush1.bf16.msra.mxu0 %v2695
  %3543 = vmatprep.subr.bf16.mxu0 %v2698
  %3544 = vmatpush1.bf16.msra.mxu0 %v2697
  %3545 = vmatprep.subr.bf16.mxu0 %v2700
  %3546 = vmatpush1.bf16.msra.mxu0 %v2699
  %3547 = vmatprep.subr.bf16.mxu0 %v2702
  %3548 = vmatpush1.bf16.msra.mxu0 %v2701
  %3549 = vmatprep.subr.bf16.mxu0 %v2704
  %3550 = vmatpush1.bf16.msra.mxu0 %v2703
  %3551 = vmatprep.subr.bf16.mxu0 %v2706
  %3552 = vmatpush1.bf16.msra.mxu0 %v2705
  %3553 = vmatprep.mubr.bf16.mxu0 %v916
  %3554 = vmatmul.mubr.bf16.gmra.mrb[0].mxu0 %v915
  %v3555 = vpop.f32.mrb[0].mxu0
  %v3556 = vadd.f32 %v3515, %v3555
  %v3557 = vpop.f32.mrb[0].mxu0
  %v3558 = vadd.f32 %v3517, %v3557
  %v3559 = vpop.f32.mrb[0].mxu0
  %v3560 = vpop.f32.mrb[0].mxu0
  %3561 = vdwg.mxu0
  %3562 = vmatprep.subr.bf16.mxu0 %v2708
  %3563 = vmatpush1.bf16.msra.mxu0 %v2707
  %3564 = vmatprep.subr.bf16.mxu0 %v2710
  %3565 = vmatpush1.bf16.msra.mxu0 %v2709
  %3566 = vmatprep.subr.bf16.mxu0 %v2712
  %3567 = vmatpush1.bf16.msra.mxu0 %v2711
  %3568 = vmatprep.subr.bf16.mxu0 %v2714
  %3569 = vmatpush1.bf16.msra.mxu0 %v2713
  %3570 = vmatprep.subr.bf16.mxu0 %v2716
  %3571 = vmatpush1.bf16.msra.mxu0 %v2715
  %3572 = vmatprep.subr.bf16.mxu0 %v2718
  %3573 = vmatpush1.bf16.msra.mxu0 %v2717
  %3574 = vmatprep.subr.bf16.mxu0 %v2720
  %3575 = vmatpush1.bf16.msra.mxu0 %v2719
  %3576 = vmatprep.subr.bf16.mxu0 %v2722
  %3577 = vmatpush1.bf16.msra.mxu0 %v2721
  %3578 = vmatprep.subr.bf16.mxu0 %v2724
  %3579 = vmatpush1.bf16.msra.mxu0 %v2723
  %3580 = vmatprep.subr.bf16.mxu0 %v2726
  %3581 = vmatpush1.bf16.msra.mxu0 %v2725
  %3582 = vmatprep.subr.bf16.mxu0 %v2728
  %3583 = vmatpush1.bf16.msra.mxu0 %v2727
  %3584 = vmatprep.subr.bf16.mxu0 %v2730
  %3585 = vmatpush1.bf16.msra.mxu0 %v2729
  %3586 = vmatprep.subr.bf16.mxu0 %v2732
  %3587 = vmatpush1.bf16.msra.mxu0 %v2731
  %3588 = vmatprep.subr.bf16.mxu0 %v2734
  %3589 = vmatpush1.bf16.msra.mxu0 %v2733
  %3590 = vmatprep.subr.bf16.mxu0 %v2736
  %3591 = vmatpush1.bf16.msra.mxu0 %v2735
  %3592 = vmatprep.subr.bf16.mxu0 %v2738
  %3593 = vmatpush1.bf16.msra.mxu0 %v2737
  %3594 = vmatprep.mubr.bf16.mxu0 %v918
  %3595 = vmatmul.mubr.bf16.gmra.mrb[0].mxu0 %v917
  %v3596 = vpop.f32.mrb[0].mxu0
  %v3597 = vadd.f32 %v3556, %v3596
  %v3598 = vpop.f32.mrb[0].mxu0
  %v3599 = vadd.f32 %v3558, %v3598
  %v3600 = vpop.f32.mrb[0].mxu0
  %v3601 = vpop.f32.mrb[0].mxu0
  %3602 = vdwg.mxu0
  %3603 = vmatprep.subr.bf16.mxu0 %v2740
  %3604 = vmatpush1.bf16.msra.mxu0 %v2739
  %3605 = vmatprep.subr.bf16.mxu0 %v2742
  %3606 = vmatpush1.bf16.msra.mxu0 %v2741
  %3607 = vmatprep.subr.bf16.mxu0 %v2744
  %3608 = vmatpush1.bf16.msra.mxu0 %v2743
  %3609 = vmatprep.subr.bf16.mxu0 %v2746
  %3610 = vmatpush1.bf16.msra.mxu0 %v2745
  %3611 = vmatprep.subr.bf16.mxu0 %v2748
  %3612 = vmatpush1.bf16.msra.mxu0 %v2747
  %3613 = vmatprep.subr.bf16.mxu0 %v2750
  %3614 = vmatpush1.bf16.msra.mxu0 %v2749
  %3615 = vmatprep.subr.bf16.mxu0 %v2752
  %3616 = vmatpush1.bf16.msra.mxu0 %v2751
  %3617 = vmatprep.subr.bf16.mxu0 %v2754
  %3618 = vmatpush1.bf16.msra.mxu0 %v2753
  %3619 = vmatprep.subr.bf16.mxu0 %v2756
  %3620 = vmatpush1.bf16.msra.mxu0 %v2755
  %3621 = vmatprep.subr.bf16.mxu0 %v2758
  %3622 = vmatpush1.bf16.msra.mxu0 %v2757
  %3623 = vmatprep.subr.bf16.mxu0 %v2760
  %3624 = vmatpush1.bf16.msra.mxu0 %v2759
  %3625 = vmatprep.subr.bf16.mxu0 %v2762
  %3626 = vmatpush1.bf16.msra.mxu0 %v2761
  %3627 = vmatprep.subr.bf16.mxu0 %v2764
  %3628 = vmatpush1.bf16.msra.mxu0 %v2763
  %3629 = vmatprep.subr.bf16.mxu0 %v2766
  %3630 = vmatpush1.bf16.msra.mxu0 %v2765
  %3631 = vmatprep.subr.bf16.mxu0 %v2768
  %3632 = vmatpush1.bf16.msra.mxu0 %v2767
  %3633 = vmatprep.subr.bf16.mxu0 %v2770
  %3634 = vmatpush1.bf16.msra.mxu0 %v2769
  %3635 = vmatprep.mubr.bf16.mxu0 %v920
  %3636 = vmatmul.mubr.bf16.gmra.mrb[0].mxu0 %v919
  %v3637 = vpop.f32.mrb[0].mxu0
  %v3638 = vadd.f32 %v3597, %v3637
  %v3639 = vpop.f32.mrb[0].mxu0
  %v3640 = vadd.f32 %v3599, %v3639
  %v3641 = vpop.f32.mrb[0].mxu0
  %v3642 = vpop.f32.mrb[0].mxu0
  %3643 = vdwg.mxu0
  %3644 = vmatprep.subr.bf16.mxu0 %v2772
  %3645 = vmatpush1.bf16.msra.mxu0 %v2771
  %3646 = vmatprep.subr.bf16.mxu0 %v2774
  %3647 = vmatpush1.bf16.msra.mxu0 %v2773
  %3648 = vmatprep.subr.bf16.mxu0 %v2776
  %3649 = vmatpush1.bf16.msra.mxu0 %v2775
  %3650 = vmatprep.subr.bf16.mxu0 %v2778
  %3651 = vmatpush1.bf16.msra.mxu0 %v2777
  %3652 = vmatprep.subr.bf16.mxu0 %v2780
  %3653 = vmatpush1.bf16.msra.mxu0 %v2779
  %3654 = vmatprep.subr.bf16.mxu0 %v2782
  %3655 = vmatpush1.bf16.msra.mxu0 %v2781
  %3656 = vmatprep.subr.bf16.mxu0 %v2784
  %3657 = vmatpush1.bf16.msra.mxu0 %v2783
  %3658 = vmatprep.subr.bf16.mxu0 %v2786
  %3659 = vmatpush1.bf16.msra.mxu0 %v2785
  %3660 = vmatprep.subr.bf16.mxu0 %v2788
  %3661 = vmatpush1.bf16.msra.mxu0 %v2787
  %3662 = vmatprep.subr.bf16.mxu0 %v2790
  %3663 = vmatpush1.bf16.msra.mxu0 %v2789
  %3664 = vmatprep.subr.bf16.mxu0 %v2792
  %3665 = vmatpush1.bf16.msra.mxu0 %v2791
  %3666 = vmatprep.subr.bf16.mxu0 %v2794
  %3667 = vmatpush1.bf16.msra.mxu0 %v2793
  %3668 = vmatprep.subr.bf16.mxu0 %v2796
  %3669 = vmatpush1.bf16.msra.mxu0 %v2795
  %3670 = vmatprep.subr.bf16.mxu0 %v2798
  %3671 = vmatpush1.bf16.msra.mxu0 %v2797
  %3672 = vmatprep.subr.bf16.mxu0 %v2800
  %3673 = vmatpush1.bf16.msra.mxu0 %v2799
  %3674 = vmatprep.subr.bf16.mxu0 %v2802
  %3675 = vmatpush1.bf16.msra.mxu0 %v2801
  %3676 = vmatprep.mubr.bf16.mxu0 %v922
  %3677 = vmatmul.mubr.bf16.gmra.mrb[0].mxu0 %v921
  %v3678 = vpop.f32.mrb[0].mxu0
  %v3679 = vadd.f32 %v3638, %v3678
  %v3680 = vpop.f32.mrb[0].mxu0
  %v3681 = vadd.f32 %v3640, %v3680
  %v3682 = vpop.f32.mrb[0].mxu0
  %v3683 = vpop.f32.mrb[0].mxu0
  %3684 = vdwg.mxu0
  %3685 = vmatprep.subr.bf16.mxu0 %v2804
  %3686 = vmatpush1.bf16.msra.mxu0 %v2803
  %3687 = vmatprep.subr.bf16.mxu0 %v2806
  %3688 = vmatpush1.bf16.msra.mxu0 %v2805
  %3689 = vmatprep.subr.bf16.mxu0 %v2808
  %3690 = vmatpush1.bf16.msra.mxu0 %v2807
  %3691 = vmatprep.subr.bf16.mxu0 %v2810
  %3692 = vmatpush1.bf16.msra.mxu0 %v2809
  %3693 = vmatprep.subr.bf16.mxu0 %v2812
  %3694 = vmatpush1.bf16.msra.mxu0 %v2811
  %3695 = vmatprep.subr.bf16.mxu0 %v2814
  %3696 = vmatpush1.bf16.msra.mxu0 %v2813
  %3697 = vmatprep.subr.bf16.mxu0 %v2816
  %3698 = vmatpush1.bf16.msra.mxu0 %v2815
  %3699 = vmatprep.subr.bf16.mxu0 %v2818
  %3700 = vmatpush1.bf16.msra.mxu0 %v2817
  %3701 = vmatprep.subr.bf16.mxu0 %v2820
  %3702 = vmatpush1.bf16.msra.mxu0 %v2819
  %3703 = vmatprep.subr.bf16.mxu0 %v2822
  %3704 = vmatpush1.bf16.msra.mxu0 %v2821
  %3705 = vmatprep.subr.bf16.mxu0 %v2824
  %3706 = vmatpush1.bf16.msra.mxu0 %v2823
  %3707 = vmatprep.subr.bf16.mxu0 %v2826
  %3708 = vmatpush1.bf16.msra.mxu0 %v2825
  %3709 = vmatprep.subr.bf16.mxu0 %v2828
  %3710 = vmatpush1.bf16.msra.mxu0 %v2827
  %3711 = vmatprep.subr.bf16.mxu0 %v2830
  %3712 = vmatpush1.bf16.msra.mxu0 %v2829
  %3713 = vmatprep.subr.bf16.mxu0 %v2832
  %3714 = vmatpush1.bf16.msra.mxu0 %v2831
  %3715 = vmatprep.subr.bf16.mxu0 %v2834
  %3716 = vmatpush1.bf16.msra.mxu0 %v2833
  %3717 = vmatprep.mubr.bf16.mxu0 %v924
  %3718 = vmatmul.mubr.bf16.gmra.mrb[0].mxu0 %v923
  %v3719 = vpop.f32.mrb[0].mxu0
  %v3720 = vadd.f32 %v3679, %v3719
  %v3721 = vpop.f32.mrb[0].mxu0
  %v3722 = vadd.f32 %v3681, %v3721
  %v3723 = vpop.f32.mrb[0].mxu0
  %v3724 = vpop.f32.mrb[0].mxu0
  %3725 = vdwg.mxu0
  %3726 = vmatprep.subr.bf16.mxu0 %v2836
  %3727 = vmatpush1.bf16.msra.mxu0 %v2835
  %3728 = vmatprep.subr.bf16.mxu0 %v2838
  %3729 = vmatpush1.bf16.msra.mxu0 %v2837
  %3730 = vmatprep.subr.bf16.mxu0 %v2840
  %3731 = vmatpush1.bf16.msra.mxu0 %v2839
  %3732 = vmatprep.subr.bf16.mxu0 %v2842
  %3733 = vmatpush1.bf16.msra.mxu0 %v2841
  %3734 = vmatprep.subr.bf16.mxu0 %v2844
  %3735 = vmatpush1.bf16.msra.mxu0 %v2843
  %3736 = vmatprep.subr.bf16.mxu0 %v2846
  %3737 = vmatpush1.bf16.msra.mxu0 %v2845
  %3738 = vmatprep.subr.bf16.mxu0 %v2848
  %3739 = vmatpush1.bf16.msra.mxu0 %v2847
  %3740 = vmatprep.subr.bf16.mxu0 %v2850
  %3741 = vmatpush1.bf16.msra.mxu0 %v2849
  %3742 = vmatprep.subr.bf16.mxu0 %v2852
  %3743 = vmatpush1.bf16.msra.mxu0 %v2851
  %3744 = vmatprep.subr.bf16.mxu0 %v2854
  %3745 = vmatpush1.bf16.msra.mxu0 %v2853
  %3746 = vmatprep.subr.bf16.mxu0 %v2856
  %3747 = vmatpush1.bf16.msra.mxu0 %v2855
  %3748 = vmatprep.subr.bf16.mxu0 %v2858
  %3749 = vmatpush1.bf16.msra.mxu0 %v2857
  %3750 = vmatprep.subr.bf16.mxu0 %v2860
  %3751 = vmatpush1.bf16.msra.mxu0 %v2859
  %3752 = vmatprep.subr.bf16.mxu0 %v2862
  %3753 = vmatpush1.bf16.msra.mxu0 %v2861
  %3754 = vmatprep.subr.bf16.mxu0 %v2864
  %3755 = vmatpush1.bf16.msra.mxu0 %v2863
  %3756 = vmatprep.subr.bf16.mxu0 %v2866
  %3757 = vmatpush1.bf16.msra.mxu0 %v2865
  %3758 = vmatprep.mubr.bf16.mxu0 %v926
  %3759 = vmatmul.mubr.bf16.gmra.mrb[0].mxu0 %v925
  %v3760 = vpop.f32.mrb[0].mxu0
  %v3761 = vadd.f32 %v3720, %v3760
  %v3762 = vpop.f32.mrb[0].mxu0
  %v3763 = vadd.f32 %v3722, %v3762
  %v3764 = vpop.f32.mrb[0].mxu0
  %v3765 = vpop.f32.mrb[0].mxu0
  %3766 = vdwg.mxu0
  %3767 = vmatprep.subr.bf16.mxu0 %v2868
  %3768 = vmatpush1.bf16.msra.mxu0 %v2867
  %3769 = vmatprep.subr.bf16.mxu0 %v2870
  %3770 = vmatpush1.bf16.msra.mxu0 %v2869
  %3771 = vmatprep.subr.bf16.mxu0 %v2872
  %3772 = vmatpush1.bf16.msra.mxu0 %v2871
  %3773 = vmatprep.subr.bf16.mxu0 %v2874
  %3774 = vmatpush1.bf16.msra.mxu0 %v2873
  %3775 = vmatprep.subr.bf16.mxu0 %v2876
  %3776 = vmatpush1.bf16.msra.mxu0 %v2875
  %3777 = vmatprep.subr.bf16.mxu0 %v2878
  %3778 = vmatpush1.bf16.msra.mxu0 %v2877
  %3779 = vmatprep.subr.bf16.mxu0 %v2880
  %3780 = vmatpush1.bf16.msra.mxu0 %v2879
  %3781 = vmatprep.subr.bf16.mxu0 %v2882
  %3782 = vmatpush1.bf16.msra.mxu0 %v2881
  %3783 = vmatprep.subr.bf16.mxu0 %v2884
  %3784 = vmatpush1.bf16.msra.mxu0 %v2883
  %3785 = vmatprep.subr.bf16.mxu0 %v2886
  %3786 = vmatpush1.bf16.msra.mxu0 %v2885
  %3787 = vmatprep.subr.bf16.mxu0 %v2888
  %3788 = vmatpush1.bf16.msra.mxu0 %v2887
  %3789 = vmatprep.subr.bf16.mxu0 %v2890
  %3790 = vmatpush1.bf16.msra.mxu0 %v2889
  %3791 = vmatprep.subr.bf16.mxu0 %v2892
  %3792 = vmatpush1.bf16.msra.mxu0 %v2891
  %3793 = vmatprep.subr.bf16.mxu0 %v2894
  %3794 = vmatpush1.bf16.msra.mxu0 %v2893
  %3795 = vmatprep.subr.bf16.mxu0 %v2896
  %3796 = vmatpush1.bf16.msra.mxu0 %v2895
  %3797 = vmatprep.subr.bf16.mxu0 %v2898
  %3798 = vmatpush1.bf16.msra.mxu0 %v2897
  %3799 = vmatprep.mubr.bf16.mxu0 %v928
  %3800 = vmatmul.mubr.bf16.gmra.mrb[0].mxu0 %v927
  %v3801 = vpop.f32.mrb[0].mxu0
  %v3802 = vadd.f32 %v3761, %v3801
  %v3803 = vpop.f32.mrb[0].mxu0
  %v3804 = vadd.f32 %v3763, %v3803
  %v3805 = vpop.f32.mrb[0].mxu0
  %v3806 = vpop.f32.mrb[0].mxu0
  %3807 = vdwg.mxu0
  %3808 = vmatprep.subr.bf16.mxu0 %v2900
  %3809 = vmatpush1.bf16.msra.mxu0 %v2899
  %3810 = vmatprep.subr.bf16.mxu0 %v2902
  %3811 = vmatpush1.bf16.msra.mxu0 %v2901
  %3812 = vmatprep.subr.bf16.mxu0 %v2904
  %3813 = vmatpush1.bf16.msra.mxu0 %v2903
  %3814 = vmatprep.subr.bf16.mxu0 %v2906
  %3815 = vmatpush1.bf16.msra.mxu0 %v2905
  %3816 = vmatprep.subr.bf16.mxu0 %v2908
  %3817 = vmatpush1.bf16.msra.mxu0 %v2907
  %3818 = vmatprep.subr.bf16.mxu0 %v2910
  %3819 = vmatpush1.bf16.msra.mxu0 %v2909
  %3820 = vmatprep.subr.bf16.mxu0 %v2912
  %3821 = vmatpush1.bf16.msra.mxu0 %v2911
  %3822 = vmatprep.subr.bf16.mxu0 %v2914
  %3823 = vmatpush1.bf16.msra.mxu0 %v2913
  %3824 = vmatprep.subr.bf16.mxu0 %v2916
  %3825 = vmatpush1.bf16.msra.mxu0 %v2915
  %3826 = vmatprep.subr.bf16.mxu0 %v2918
  %3827 = vmatpush1.bf16.msra.mxu0 %v2917
  %3828 = vmatprep.subr.bf16.mxu0 %v2920
  %3829 = vmatpush1.bf16.msra.mxu0 %v2919
  %3830 = vmatprep.subr.bf16.mxu0 %v2922
  %3831 = vmatpush1.bf16.msra.mxu0 %v2921
  %3832 = vmatprep.subr.bf16.mxu0 %v2924
  %3833 = vmatpush1.bf16.msra.mxu0 %v2923
  %3834 = vmatprep.subr.bf16.mxu0 %v2926
  %3835 = vmatpush1.bf16.msra.mxu0 %v2925
  %3836 = vmatprep.subr.bf16.mxu0 %v2928
  %3837 = vmatpush1.bf16.msra.mxu0 %v2927
  %3838 = vmatprep.subr.bf16.mxu0 %v2930
  %3839 = vmatpush1.bf16.msra.mxu0 %v2929
  %3840 = vmatprep.mubr.bf16.mxu0 %v930
  %3841 = vmatmul.mubr.bf16.gmra.mrb[0].mxu0 %v929
  %v3842 = vpop.f32.mrb[0].mxu0
  %v3843 = vadd.f32 %v3802, %v3842
  %v3844 = vpop.f32.mrb[0].mxu0
  %v3845 = vadd.f32 %v3804, %v3844
  %v3846 = vpop.f32.mrb[0].mxu0
  %v3847 = vpop.f32.mrb[0].mxu0
  %3848 = vdwg.mxu0
  %3849 = vmatprep.subr.bf16.mxu0 %v2932
  %3850 = vmatpush1.bf16.msra.mxu0 %v2931
  %3851 = vmatprep.subr.bf16.mxu0 %v2934
  %3852 = vmatpush1.bf16.msra.mxu0 %v2933
  %3853 = vmatprep.subr.bf16.mxu0 %v2936
  %3854 = vmatpush1.bf16.msra.mxu0 %v2935
  %3855 = vmatprep.subr.bf16.mxu0 %v2938
  %3856 = vmatpush1.bf16.msra.mxu0 %v2937
  %3857 = vmatprep.subr.bf16.mxu0 %v2940
  %3858 = vmatpush1.bf16.msra.mxu0 %v2939
  %3859 = vmatprep.subr.bf16.mxu0 %v2942
  %3860 = vmatpush1.bf16.msra.mxu0 %v2941
  %3861 = vmatprep.subr.bf16.mxu0 %v2944
  %3862 = vmatpush1.bf16.msra.mxu0 %v2943
  %3863 = vmatprep.subr.bf16.mxu0 %v2946
  %3864 = vmatpush1.bf16.msra.mxu0 %v2945
  %3865 = vmatprep.subr.bf16.mxu0 %v2948
  %3866 = vmatpush1.bf16.msra.mxu0 %v2947
  %3867 = vmatprep.subr.bf16.mxu0 %v2950
  %3868 = vmatpush1.bf16.msra.mxu0 %v2949
  %3869 = vmatprep.subr.bf16.mxu0 %v2952
  %3870 = vmatpush1.bf16.msra.mxu0 %v2951
  %3871 = vmatprep.subr.bf16.mxu0 %v2954
  %3872 = vmatpush1.bf16.msra.mxu0 %v2953
  %3873 = vmatprep.subr.bf16.mxu0 %v2956
  %3874 = vmatpush1.bf16.msra.mxu0 %v2955
  %3875 = vmatprep.subr.bf16.mxu0 %v2958
  %3876 = vmatpush1.bf16.msra.mxu0 %v2957
  %3877 = vmatprep.subr.bf16.mxu0 %v2960
  %3878 = vmatpush1.bf16.msra.mxu0 %v2959
  %3879 = vmatprep.subr.bf16.mxu0 %v2962
  %3880 = vmatpush1.bf16.msra.mxu0 %v2961
  %3881 = vmatprep.mubr.bf16.mxu0 %v932
  %3882 = vmatmul.mubr.bf16.gmra.mrb[0].mxu0 %v931
  %v3883 = vpop.f32.mrb[0].mxu0
  %v3884 = vadd.f32 %v3843, %v3883
  %v3885 = vpop.f32.mrb[0].mxu0
  %v3886 = vadd.f32 %v3845, %v3885
  %v3887 = vpop.f32.mrb[0].mxu0
  %v3888 = vpop.f32.mrb[0].mxu0
  %3889 = vdwg.mxu0
  %3890 = vmatprep.subr.bf16.mxu0 %v2964
  %3891 = vmatpush1.bf16.msra.mxu0 %v2963
  %3892 = vmatprep.subr.bf16.mxu0 %v2966
  %3893 = vmatpush1.bf16.msra.mxu0 %v2965
  %3894 = vmatprep.subr.bf16.mxu0 %v2968
  %3895 = vmatpush1.bf16.msra.mxu0 %v2967
  %3896 = vmatprep.subr.bf16.mxu0 %v2970
  %3897 = vmatpush1.bf16.msra.mxu0 %v2969
  %3898 = vmatprep.subr.bf16.mxu0 %v2972
  %3899 = vmatpush1.bf16.msra.mxu0 %v2971
  %3900 = vmatprep.subr.bf16.mxu0 %v2974
  %3901 = vmatpush1.bf16.msra.mxu0 %v2973
  %3902 = vmatprep.subr.bf16.mxu0 %v2976
  %3903 = vmatpush1.bf16.msra.mxu0 %v2975
  %3904 = vmatprep.subr.bf16.mxu0 %v2978
  %3905 = vmatpush1.bf16.msra.mxu0 %v2977
  %3906 = vmatprep.subr.bf16.mxu0 %v2980
  %3907 = vmatpush1.bf16.msra.mxu0 %v2979
  %3908 = vmatprep.subr.bf16.mxu0 %v2982
  %3909 = vmatpush1.bf16.msra.mxu0 %v2981
  %3910 = vmatprep.subr.bf16.mxu0 %v2984
  %3911 = vmatpush1.bf16.msra.mxu0 %v2983
  %3912 = vmatprep.subr.bf16.mxu0 %v2986
  %3913 = vmatpush1.bf16.msra.mxu0 %v2985
  %3914 = vmatprep.subr.bf16.mxu0 0
  %3915 = vmatpush1.bf16.msra.mxu0 0
  %3916 = vmatprep.subr.bf16.mxu0 0
  %3917 = vmatpush1.bf16.msra.mxu0 0
  %3918 = vmatprep.subr.bf16.mxu0 0
  %3919 = vmatpush1.bf16.msra.mxu0 0
  %3920 = vmatprep.subr.bf16.mxu0 0
  %3921 = vmatpush1.bf16.msra.mxu0 0
  %3922 = vmatprep.mubr.bf16.mxu0 %v3396
  %3923 = vmatmul.mubr.bf16.gmra.mrb[0].mxu0 %v933
  %v3924 = vpop.f32.mrb[0].mxu0
  %v3925 = vadd.f32 %v3884, %v3924
  %v3926 = vpop.f32.mrb[0].mxu0
  %v3927 = vadd.f32 %v3886, %v3926
  %v3928 = vpop.f32.mrb[0].mxu0
  %v3929 = vpop.f32.mrb[0].mxu0
  %3930 = vdwg.mxu0
  %v3931 = vmax.f32 %v3925, 0.0
  %v3932 = vmax.f32 %v3927, 0.0
  %v3933 = vpack.c.bf16 %v3931, %v3931
  %v3934 = vpack.c.bf16 %v3932, %v3932
  %v3935 = vld [vmem:[%s5] sm:$0xf]
  %v3936 = vld [vmem:[%s5 + $0x4] sm:$0xf]
  %v3937 = vld [vmem:[%s5 + $0x8] sm:$0xf]
  %v3938 = vld [vmem:[%s5 + $0xc] sm:$0xf]
  %v3939 = vld [vmem:[%s5 + $0x10] sm:$0xf]
  %v3940 = vld [vmem:[%s5 + $0x14] sm:$0xf]
  %v3941 = vld [vmem:[%s5 + $0x18] sm:$0xf]
  %v3942 = vld [vmem:[%s5 + $0x1c] sm:$0xf]
  %v3943 = vld [vmem:[%s5 + $0x20] sm:$0xf]
  %v3944 = vld [vmem:[%s5 + $0x24] sm:$0xf]
  %v3945 = vld [vmem:[%s5 + $0x28] sm:$0xf]
  %v3946 = vld [vmem:[%s5 + $0x2c] sm:$0xf]
  %v3947 = vld [vmem:[%s5 + $0x30] sm:$0xf]
  %v3948 = vld [vmem:[%s5 + $0x34] sm:$0xf]
  %v3949 = vld [vmem:[%s5 + $0x38] sm:$0xf]
  %v3950 = vld [vmem:[%s5 + $0x3c] sm:$0xf]
  %v3951 = vld [vmem:[%s5 + $0x40] sm:$0xf]
  %v3952 = vld [vmem:[%s5 + $0x44] sm:$0xf]
  %v3953 = vld [vmem:[%s5 + $0x48] sm:$0xf]
  %v3954 = vld [vmem:[%s5 + $0x4c] sm:$0xf]
  %v3955 = vld [vmem:[%s5 + $0x50] sm:$0xf]
  %v3956 = vld [vmem:[%s5 + $0x54] sm:$0xf]
  %v3957 = vld [vmem:[%s5 + $0x58] sm:$0xf]
  %v3958 = vld [vmem:[%s5 + $0x5c] sm:$0xf]
  %v3959 = vld [vmem:[%s5 + $0x60] sm:$0xf]
  %v3960 = vld [vmem:[%s5 + $0x64] sm:$0xf]
  %v3961 = vld [vmem:[%s5 + $0x68] sm:$0xf]
  %v3962 = vld [vmem:[%s5 + $0x6c] sm:$0xf]
  %v3963 = vld [vmem:[%s5 + $0x70] sm:$0xf]
  %v3964 = vld [vmem:[%s5 + $0x74] sm:$0xf]
  %v3965 = vld [vmem:[%s5 + $0x78] sm:$0xf]
  %v3966 = vld [vmem:[%s5 + $0x7c] sm:$0xf]
  %v3967 = vld [vmem:[%s6] sm:$0x1]
  %v3969 = vlaneseq
  %v3970 = vshrl.u32 %v3969, 7
  %v3971 = vsub.s32 0, %v3970
  %v3972 = vrot.slane %v3967, %v3971
  %v4006 = vunpack.c.l.b16 %v3935
  %v4007 = vunpack.c.l.b16 %v3936
  %v4008 = vunpack.c.l.b16 %v3937
  %v4009 = vunpack.c.l.b16 %v3938
  %v4010 = vunpack.c.l.b16 %v3939
  %v4011 = vunpack.c.l.b16 %v3940
  %v4012 = vunpack.c.l.b16 %v3941
  %v4013 = vunpack.c.l.b16 %v3942
  %v4014 = vunpack.c.l.b16 %v3943
  %v4015 = vunpack.c.l.b16 %v3944
  %v4016 = vunpack.c.l.b16 %v3945
  %v4017 = vunpack.c.l.b16 %v3946
  %v4018 = vunpack.c.l.b16 %v3947
  %v4019 = vunpack.c.l.b16 %v3948
  %v4020 = vunpack.c.l.b16 %v3949
  %v4021 = vunpack.c.l.b16 %v3950
  %v4022 = vunpack.c.l.b16 %v3951
  %v4023 = vunpack.c.l.b16 %v3952
  %v4024 = vunpack.c.l.b16 %v3953
  %v4025 = vunpack.c.l.b16 %v3954
  %v4026 = vunpack.c.l.b16 %v3955
  %v4027 = vunpack.c.l.b16 %v3956
  %v4028 = vunpack.c.l.b16 %v3957
  %v4029 = vunpack.c.l.b16 %v3958
  %v4030 = vunpack.c.l.b16 %v3959
  %v4031 = vunpack.c.l.b16 %v3960
  %v4032 = vunpack.c.l.b16 %v3961
  %v4033 = vunpack.c.l.b16 %v3962
  %v4034 = vunpack.c.l.b16 %v3963
  %v4035 = vunpack.c.l.b16 %v3964
  %v4036 = vunpack.c.l.b16 %v3965
  %v4037 = vunpack.c.l.b16 %v3966
  %v4038 = vpack.c.b16 %v4007, %v4006
  %v4039 = vpack.c.b16 %v4009, %v4008
  %v4040 = vpack.c.b16 %v4011, %v4010
  %v4041 = vpack.c.b16 %v4013, %v4012
  %v4042 = vpack.c.b16 %v4015, %v4014
  %v4043 = vpack.c.b16 %v4017, %v4016
  %v4044 = vpack.c.b16 %v4019, %v4018
  %v4045 = vpack.c.b16 %v4021, %v4020
  %v4046 = vpack.c.b16 %v4023, %v4022
  %v4047 = vpack.c.b16 %v4025, %v4024
  %v4048 = vpack.c.b16 %v4027, %v4026
  %v4049 = vpack.c.b16 %v4029, %v4028
  %v4050 = vpack.c.b16 %v4031, %v4030
  %v4051 = vpack.c.b16 %v4033, %v4032
  %v4052 = vpack.c.b16 %v4035, %v4034
  %v4053 = vpack.c.b16 %v4037, %v4036
  %4070 = vmatprep.subr.bf16.mxu0 0
  %4071 = vmatpush1.bf16.msra.mxu0 %v4038
  %4072 = vmatprep.subr.bf16.mxu0 0
  %4073 = vmatpush1.bf16.msra.mxu0 %v4039
  %4074 = vmatprep.subr.bf16.mxu0 0
  %4075 = vmatpush1.bf16.msra.mxu0 %v4040
  %4076 = vmatprep.subr.bf16.mxu0 0
  %4077 = vmatpush1.bf16.msra.mxu0 %v4041
  %4078 = vmatprep.subr.bf16.mxu0 0
  %4079 = vmatpush1.bf16.msra.mxu0 %v4042
  %4080 = vmatprep.subr.bf16.mxu0 0
  %4081 = vmatpush1.bf16.msra.mxu0 %v4043
  %4082 = vmatprep.subr.bf16.mxu0 0
  %4083 = vmatpush1.bf16.msra.mxu0 %v4044
  %4084 = vmatprep.subr.bf16.mxu0 0
  %4085 = vmatpush1.bf16.msra.mxu0 %v4045
  %4086 = vmatprep.subr.bf16.mxu0 0
  %4087 = vmatpush1.bf16.msra.mxu0 %v4046
  %4088 = vmatprep.subr.bf16.mxu0 0
  %4089 = vmatpush1.bf16.msra.mxu0 %v4047
  %4090 = vmatprep.subr.bf16.mxu0 0
  %4091 = vmatpush1.bf16.msra.mxu0 %v4048
  %4092 = vmatprep.subr.bf16.mxu0 0
  %4093 = vmatpush1.bf16.msra.mxu0 %v4049
  %4094 = vmatprep.subr.bf16.mxu0 0
  %4095 = vmatpush1.bf16.msra.mxu0 %v4050
  %4096 = vmatprep.subr.bf16.mxu0 0
  %4097 = vmatpush1.bf16.msra.mxu0 %v4051
  %4098 = vmatprep.subr.bf16.mxu0 0
  %4099 = vmatpush1.bf16.msra.mxu0 %v4052
  %4100 = vmatprep.subr.bf16.mxu0 0
  %4101 = vmatpush1.bf16.msra.mxu0 %v4053
  %4102 = vmatprep.mubr.bf16.mxu0 %v3934
  %4103 = vmatmul.mubr.bf16.gmra.mrb[0].mxu0 %v3933
  %v4104 = vpop.f32.mrb[0].mxu0
  %v4105 = vadd.f32 %v3972, %v4104
  %v4106 = vpop.f32.mrb[0].mxu0
  %v4107 = vpop.f32.mrb[0].mxu0
  %v4108 = vpop.f32.mrb[0].mxu0
  %4109 = vdwg.mxu0
  %v4110 = vmax.f32 %v4105, 0.0
  %v4111 = vld [vmem:[%s7] sm:$0xff]
  %v4112 = vld [vmem:[%s7 + $0x8] sm:$0xff]
  %v4113 = vld [vmem:[%s7 + $0x10] sm:$0xff]
  %v4114 = vld [vmem:[%s7 + $0x18] sm:$0xff]
  %v4115 = vld [vmem:[%s7 + $0x20] sm:$0xff]
  %v4116 = vld [vmem:[%s7 + $0x28] sm:$0xff]
  %v4117 = vld [vmem:[%s7 + $0x30] sm:$0xff]
  %v4118 = vld [vmem:[%s7 + $0x38] sm:$0xff]
  %v4119 = vld [vmem:[%s7 + $0x40] sm:$0xff]
  %v4120 = vld [vmem:[%s7 + $0x48] sm:$0xff]
  %v4121 = vld [vmem:[%s7 + $0x50] sm:$0xff]
  %v4122 = vld [vmem:[%s7 + $0x58] sm:$0xff]
  %v4123 = vld [vmem:[%s7 + $0x60] sm:$0xff]
  %v4124 = vld [vmem:[%s7 + $0x68] sm:$0xff]
  %v4125 = vld [vmem:[%s7 + $0x70] sm:$0xff]
  %v4126 = vld [vmem:[%s7 + $0x78] sm:$0xff]
  %v4127 = vld [vmem:[%s8] sm:$0x1]
  %v4129 = vlaneseq
  %v4130 = vshrl.u32 %v4129, 7
  %v4131 = vsub.s32 0, %v4130
  %v4132 = vrot.slane %v4127, %v4131
  %4134 = vmatprep.subr.mxu0 0.0
  %4135 = vmatpush1.msra.mxu0 %v4111
  %4136 = vmatprep.subr.mxu0 0.0
  %4137 = vmatpush1.msra.mxu0 %v4112
  %4138 = vmatprep.subr.mxu0 0.0
  %4139 = vmatpush1.msra.mxu0 %v4113
  %4140 = vmatprep.subr.mxu0 0.0
  %4141 = vmatpush1.msra.mxu0 %v4114
  %4142 = vmatprep.subr.mxu0 0.0
  %4143 = vmatpush1.msra.mxu0 %v4115
  %4144 = vmatprep.subr.mxu0 0.0
  %4145 = vmatpush1.msra.mxu0 %v4116
  %4146 = vmatprep.subr.mxu0 0.0
  %4147 = vmatpush1.msra.mxu0 %v4117
  %4148 = vmatprep.subr.mxu0 0.0
  %4149 = vmatpush1.msra.mxu0 %v4118
  %4150 = vmatprep.subr.mxu0 0.0
  %4151 = vmatpush1.msra.mxu0 %v4119
  %4152 = vmatprep.subr.mxu0 0.0
  %4153 = vmatpush1.msra.mxu0 %v4120
  %4154 = vmatprep.subr.mxu0 0.0
  %4155 = vmatpush1.msra.mxu0 %v4121
  %4156 = vmatprep.subr.mxu0 0.0
  %4157 = vmatpush1.msra.mxu0 %v4122
  %4158 = vmatprep.subr.mxu0 0.0
  %4159 = vmatpush1.msra.mxu0 %v4123
  %4160 = vmatprep.subr.mxu0 0.0
  %4161 = vmatpush1.msra.mxu0 %v4124
  %4162 = vmatprep.subr.mxu0 0.0
  %4163 = vmatpush1.msra.mxu0 %v4125
  %4164 = vmatprep.subr.mxu0 0.0
  %4165 = vmatpush1.msra.mxu0 %v4126
  %4166 = vmatprep.subr.mxu0 0.0
  %4167 = vmatpush1.msra.mxu0 0.0
  %4168 = vmatprep.subr.mxu0 0.0
  %4169 = vmatpush1.msra.mxu0 0.0
  %4170 = vmatprep.subr.mxu0 0.0
  %4171 = vmatpush1.msra.mxu0 0.0
  %4172 = vmatprep.subr.mxu0 0.0
  %4173 = vmatpush1.msra.mxu0 0.0
  %4174 = vmatprep.subr.mxu0 0.0
  %4175 = vmatpush1.msra.mxu0 0.0
  %4176 = vmatprep.subr.mxu0 0.0
  %4177 = vmatpush1.msra.mxu0 0.0
  %4178 = vmatprep.subr.mxu0 0.0
  %4179 = vmatpush1.msra.mxu0 0.0
  %4180 = vmatprep.subr.mxu0 0.0
  %4181 = vmatpush1.msra.mxu0 0.0
  %4182 = vmatprep.subr.mxu0 0.0
  %4183 = vmatpush1.msra.mxu0 0.0
  %4184 = vmatprep.subr.mxu0 0.0
  %4185 = vmatpush1.msra.mxu0 0.0
  %4186 = vmatprep.subr.mxu0 0.0
  %4187 = vmatpush1.msra.mxu0 0.0
  %4188 = vmatprep.subr.mxu0 0.0
  %4189 = vmatpush1.msra.mxu0 0.0
  %4190 = vmatprep.subr.mxu0 0.0
  %4191 = vmatpush1.msra.mxu0 0.0
  %4192 = vmatprep.subr.mxu0 0.0
  %4193 = vmatpush1.msra.mxu0 0.0
  %4194 = vmatprep.subr.mxu0 0.0
  %4195 = vmatpush1.msra.mxu0 0.0
  %4196 = vmatprep.subr.mxu0 0.0
  %4197 = vmatpush1.msra.mxu0 0.0
  %4198 = vmatprep.mubr.f32.mxu0 0.0
  %4199 = vmatmul.mubr.f32.gmra.mrb[0].mxu0 %v4110
  %v4200 = vpop.f32.mrb[0].mxu0
  %v4201 = vadd.f32 %v4132, %v4200
  %v4202 = vpop.f32.mrb[0].mxu0
  %4203 = vdwg.mxu0
  %vm4204 = vcmask 23552
  %4205 = vst.msk [vmem:[%s9] sm:$0xff] %vm4204, %v4201
  // Predicated region
  $region38: #{model_forward.1} parent=0 // pred_check
    _
  $region39: #{model_forward.1} parent=0 // pred_check_branch
    %4207 = sbr.rel (0) target = $region41
  $region40: #{model_forward.1} parent=0 // pred_region
    _
  $region41: #{model_forward.1} parent=0 // pred_fallthru
    _
  // Predicated region
  $region42: #{model_forward.1} parent=0 // pred_check
    _
  $region43: #{model_forward.1} parent=0 // pred_check_branch
    %4209 = sbr.rel (0) target = $region45
  $region44: #{model_forward.1} parent=0 // pred_region
    _
  $region45: #{model_forward.1} parent=0 // pred_fallthru
    _

</llo_original>
